<compile_context>
chip_gen: v7x
topology: tpu7x:2x2x1
jax: 0.10.0
libtpu: 0.0.40
codegen_flags: <defaults>
</compile_context>

<pallas_src>
import functools

import jax
import jax.numpy as jnp
from jax.experimental import pallas as pl
from jax.experimental.pallas import tpu as pltpu

# ---- model config (ConvSelfAttn(16, 16, embed_dim=32, num_heads=4, layers=2)) ----
CH_H, CH_W = 16, 16
HW = CH_H * CH_W          # 256
EMBED = 32
NUM_HEADS = 4
HEAD_DIM = EMBED // NUM_HEADS
NUM_LAYERS = 2
SCALE = 1.0 / (HEAD_DIM ** 0.5)
LN_EPS = 1e-5


# ---------- in-kernel math helpers (elementwise; guaranteed Mosaic lowering) ----------
def _erf_approx(x):
    # Abramowitz & Stegun 7.1.26, max abs error ~1.5e-7 (~= f32 eps).
    a1, a2, a3, a4, a5 = 0.254829592, -0.284496736, 1.421413741, -1.453152027, 1.061405429
    p = 0.3275911
    sgn = jnp.where(x >= 0.0, 1.0, -1.0)
    ax = jnp.abs(x)
    t = 1.0 / (1.0 + p * ax)          # exact divide (approx reciprocal was too lossy)
    poly = ((((a5 * t + a4) * t + a3) * t + a2) * t + a1) * t
    return sgn * (1.0 - poly * jnp.exp(-ax * ax))


def _gelu_exact(x):
    # erf-based GELU, matching torch.nn.GELU() default
    return 0.5 * x * (1.0 + _erf_approx(x * 0.7071067811865476))


# --------------------------------- the kernel ---------------------------------
def conv_self_attn_kernel(x_ref, w_enc_ref, b_enc_ref, w_qkv_ref, b_qkv_ref,
                          w_o_ref, b_o_ref, ln_g_ref, ln_b_ref,
                          w_dec_ref, b_dec_ref, out_ref, ctx_ref,
                          *, batch, chans):
    x2d = x_ref[...]                                                    # (b*c, HW)

    # encode: batch folded into rows -> (b*c, E)
    h = jnp.dot(x2d, w_enc_ref[...], preferred_element_type=jnp.float32) + b_enc_ref[...]

    for l in range(NUM_LAYERS):                                         # static unroll
        # fused QKV projection: (b*c, E) @ (E, 3E)
        qkv = jnp.dot(h, w_qkv_ref[l], preferred_element_type=jnp.float32) + b_qkv_ref[l]

        # attention core per (batch, head); results land in the concat-heads
        # scratch so the output projection is a single fused matmul.
        for bi in range(batch):                                         # static unroll
            r0 = bi * chans
            for hh in range(NUM_HEADS):                                 # static unroll
                c0 = hh * HEAD_DIM
                q = qkv[r0:r0 + chans, c0:c0 + HEAD_DIM]                # (c, HD)
                k = qkv[r0:r0 + chans, EMBED + c0:EMBED + c0 + HEAD_DIM]
                v = qkv[r0:r0 + chans, 2 * EMBED + c0:2 * EMBED + c0 + HEAD_DIM]
                s = jax.lax.dot_general(q, k, (((1,), (1,)), ((), ())),
                                        preferred_element_type=jnp.float32) * SCALE
                s = s - jnp.max(s, axis=-1, keepdims=True)
                p = jnp.exp(s)
                p = p / jnp.sum(p, axis=-1, keepdims=True)              # exact softmax
                ctx = jnp.dot(p, v, preferred_element_type=jnp.float32)  # (c, HD)
                ctx_ref[r0:r0 + chans, c0:c0 + HEAD_DIM] = ctx

        # fused output projection on concatenated heads: (b*c, E) @ (E, E)
        attn = jnp.dot(ctx_ref[...], w_o_ref[l],
                       preferred_element_type=jnp.float32) + b_o_ref[l]

        # residual + post-LayerNorm
        y = h + attn
        mu = jnp.mean(y, axis=-1, keepdims=True)
        var = jnp.mean((y - mu) * (y - mu), axis=-1, keepdims=True)
        h = (y - mu) * jax.lax.rsqrt(var + LN_EPS) * ln_g_ref[l] + ln_b_ref[l]

    # decode + GELU + outer residual: (b*c, E) @ (E, HW)
    dec = jnp.dot(h, w_dec_ref[...], preferred_element_type=jnp.float32) + b_dec_ref[...]
    out_ref[...] = _gelu_exact(dec) + x2d


# --------------------------------- wrapper ---------------------------------
def conv_self_attn_forward(x, params):
    b, c, h, w = x.shape
    hw = h * w
    assert hw == HW
    x2d = x.reshape(b * c, hw).astype(jnp.float32)   # batch folded into M rows

    L, E = NUM_LAYERS, EMBED
    # Fuse per-head weights into lane-dense layouts (built once, host side).
    w_q = params["w_q"].transpose(0, 2, 1, 3).reshape(L, E, E)   # cols head-major
    w_k = params["w_k"].transpose(0, 2, 1, 3).reshape(L, E, E)
    w_v = params["w_v"].transpose(0, 2, 1, 3).reshape(L, E, E)
    w_qkv = jnp.concatenate([w_q, w_k, w_v], axis=-1)            # (L, E, 3E)
    b_qkv = jnp.concatenate([params["b_q"].reshape(L, 1, E),
                             params["b_k"].reshape(L, 1, E),
                             params["b_v"].reshape(L, 1, E)], axis=-1)   # (L, 1, 3E)
    w_o = params["w_o"].reshape(L, E, E)                         # rows head-major

    kernel = functools.partial(conv_self_attn_kernel, batch=b, chans=c)
    out = pl.pallas_call(
        kernel,
        out_shape=jax.ShapeDtypeStruct((b * c, hw), jnp.float32),
        scratch_shapes=[pltpu.VMEM((b * c, EMBED), jnp.float32)],   # concat-heads buffer
    )(x2d, params["w_enc"], params["b_enc"], w_qkv, b_qkv,
      w_o, params["b_o"], params["ln_g"], params["ln_b"],
      params["w_dec"], params["b_dec"])

    return out.reshape(b, c, h, w)


# --------------------------------- params ---------------------------------
def init_params(key):
    ks = jax.random.split(key, 12)

    def xavier(k, shape, fan_in, fan_out):
        bound = (6.0 / (fan_in + fan_out)) ** 0.5
        return jax.random.uniform(k, shape, jnp.float32, -bound, bound)

    def small(k, shape):
        return jax.random.uniform(k, shape, jnp.float32, -0.05, 0.05)

    p = {}
    p["w_enc"] = xavier(ks[0], (HW, EMBED), HW, EMBED)
    p["b_enc"] = small(ks[1], (1, EMBED))
    # per-layer, per-head projection weights (equivalent split of QKV matrices)
    p["w_q"] = xavier(ks[2], (NUM_LAYERS, NUM_HEADS, EMBED, HEAD_DIM), EMBED, EMBED)
    p["w_k"] = xavier(ks[3], (NUM_LAYERS, NUM_HEADS, EMBED, HEAD_DIM), EMBED, EMBED)
    p["w_v"] = xavier(ks[4], (NUM_LAYERS, NUM_HEADS, EMBED, HEAD_DIM), EMBED, EMBED)
    p["b_q"] = small(ks[5], (NUM_LAYERS, NUM_HEADS, 1, HEAD_DIM))
    p["b_k"] = small(ks[6], (NUM_LAYERS, NUM_HEADS, 1, HEAD_DIM))
    p["b_v"] = small(ks[7], (NUM_LAYERS, NUM_HEADS, 1, HEAD_DIM))
    p["w_o"] = xavier(ks[8], (NUM_LAYERS, NUM_HEADS, HEAD_DIM, EMBED), EMBED, EMBED)
    p["b_o"] = small(ks[9], (NUM_LAYERS, 1, EMBED))
    p["ln_g"] = jnp.ones((NUM_LAYERS, 1, EMBED), jnp.float32)
    p["ln_b"] = jnp.zeros((NUM_LAYERS, 1, EMBED), jnp.float32)
    p["w_dec"] = xavier(ks[10], (EMBED, HW), EMBED, HW)
    p["b_dec"] = small(ks[11], (1, HW))
    return p


# ------------------------- pure-JAX reference (for checking) -------------------------
def reference_forward(x, params):
    b, c, h, w = x.shape
    hw = h * w
    xf = x.reshape(b, c, hw).astype(jnp.float32)
    hs = xf @ params["w_enc"] + params["b_enc"]
    for l in range(NUM_LAYERS):
        q = jnp.einsum("bce,ned->bncd", hs, params["w_q"][l]) + params["b_q"][l][None]
        k = jnp.einsum("bce,ned->bncd", hs, params["w_k"][l]) + params["b_k"][l][None]
        v = jnp.einsum("bce,ned->bncd", hs, params["w_v"][l]) + params["b_v"][l][None]
        s = jnp.einsum("bncd,bnkd->bnck", q, k) * SCALE
        p = jax.nn.softmax(s, axis=-1)
        o = jnp.einsum("bnck,bnkd->bncd", p, v)
        attn = jnp.einsum("bncd,nde->bce", o, params["w_o"][l]) + params["b_o"][l]
        y = hs + attn
        mu = y.mean(-1, keepdims=True)
        var = ((y - mu) ** 2).mean(-1, keepdims=True)
        hs = (y - mu) / jnp.sqrt(var + LN_EPS) * params["ln_g"][l] + params["ln_b"][l]
    dec = hs @ params["w_dec"] + params["b_dec"]
    out = jax.nn.gelu(dec, approximate=False) + xf
    return out.reshape(b, c, h, w)


if __name__ == "__main__":
    key = jax.random.PRNGKey(0)
    kp, kx = jax.random.split(key)
    params = init_params(kp)
    x = jax.random.normal(kx, (2, 4, CH_H, CH_W), jnp.float32)   # (b, c, h, w) NCHW

    out = conv_self_attn_forward(x, params)
    out = jax.block_until_ready(out)

    ref = reference_forward(x, params)
    err = float(jnp.max(jnp.abs(out - ref)))
    assert out.shape == x.shape, (out.shape, x.shape)
    # only remaining approximation is the ~1.5e-7 erf polynomial inside GELU
    assert err < 1e-3, f"max abs err {err}"
    print("KERNEL_OK")
</pallas_src>

<mosaic_0001>
module attributes {stable_mosaic.version = 11 : i64} {
  func.func @conv_self_attn_kernel(%arg0: memref<8x256xf32, #tpu.memory_space<vmem>>, %arg1: memref<256x32xf32, #tpu.memory_space<vmem>>, %arg2: memref<1x32xf32, #tpu.memory_space<vmem>>, %arg3: memref<2x32x96xf32, #tpu.memory_space<vmem>>, %arg4: memref<2x1x96xf32, #tpu.memory_space<vmem>>, %arg5: memref<2x32x32xf32, #tpu.memory_space<vmem>>, %arg6: memref<2x1x32xf32, #tpu.memory_space<vmem>>, %arg7: memref<2x1x32xf32, #tpu.memory_space<vmem>>, %arg8: memref<2x1x32xf32, #tpu.memory_space<vmem>>, %arg9: memref<32x256xf32, #tpu.memory_space<vmem>>, %arg10: memref<1x256xf32, #tpu.memory_space<vmem>>, %arg11: memref<8x256xf32, #tpu.memory_space<vmem>>, %arg12: memref<8x32xf32, #tpu.memory_space<vmem>>) attributes {dimension_semantics = [], scalar_prefetch = 0 : i64, scratch_operands = 1 : i64, tpu.core_type = #tpu.core_type<tc>} {
    %c0 = arith.constant 0 : index
    %c0_0 = arith.constant 0 : index
    %0 = vector.load %arg0[%c0, %c0_0] : memref<8x256xf32, #tpu.memory_space<vmem>>, vector<8x256xf32>
    %c0_1 = arith.constant 0 : index
    %c0_2 = arith.constant 0 : index
    %1 = vector.load %arg1[%c0_1, %c0_2] : memref<256x32xf32, #tpu.memory_space<vmem>>, vector<256x32xf32>
    %cst = arith.constant dense<0.000000e+00> : vector<8x32xf32>
    %2 = tpu.matmul %0, %1, %cst {dimension_numbers = #tpu.dot_dimension_numbers<[1], [0], [0], [1], [0, 0, 1, 1], [], []>} : vector<8x256xf32>, vector<256x32xf32>, vector<8x32xf32> -> vector<8x32xf32>
    %c0_3 = arith.constant 0 : index
    %c0_4 = arith.constant 0 : index
    %3 = vector.load %arg2[%c0_3, %c0_4] : memref<1x32xf32, #tpu.memory_space<vmem>>, vector<1x32xf32>
    %4 = vector.broadcast %3 : vector<1x32xf32> to vector<8x32xf32>
    %5 = arith.addf %2, %4 : vector<8x32xf32>
    %c0_5 = arith.constant 0 : index
    %c0_6 = arith.constant 0 : index
    %c0_7 = arith.constant 0 : index
    %6 = vector.load %arg3[%c0_5, %c0_6, %c0_7] : memref<2x32x96xf32, #tpu.memory_space<vmem>>, vector<1x32x96xf32>
    %7 = vector.shape_cast %6 : vector<1x32x96xf32> to vector<32x96xf32>
    %cst_8 = arith.constant dense<0.000000e+00> : vector<8x96xf32>
    %8 = tpu.matmul %5, %7, %cst_8 {dimension_numbers = #tpu.dot_dimension_numbers<[1], [0], [0], [1], [0, 0, 1, 1], [], []>} : vector<8x32xf32>, vector<32x96xf32>, vector<8x96xf32> -> vector<8x96xf32>
    %c0_9 = arith.constant 0 : index
    %c0_10 = arith.constant 0 : index
    %c0_11 = arith.constant 0 : index
    %9 = vector.load %arg4[%c0_9, %c0_10, %c0_11] : memref<2x1x96xf32, #tpu.memory_space<vmem>>, vector<1x1x96xf32>
    %10 = vector.shape_cast %9 : vector<1x1x96xf32> to vector<1x96xf32>
    %11 = vector.broadcast %10 : vector<1x96xf32> to vector<8x96xf32>
    %12 = arith.addf %8, %11 : vector<8x96xf32>
    %13 = vector.extract_strided_slice %12 {offsets = [0, 0], sizes = [4, 8], strides = [1, 1]} : vector<8x96xf32> to vector<4x8xf32>
    %14 = vector.extract_strided_slice %12 {offsets = [0, 32], sizes = [4, 8], strides = [1, 1]} : vector<8x96xf32> to vector<4x8xf32>
    %15 = vector.extract_strided_slice %12 {offsets = [0, 64], sizes = [4, 8], strides = [1, 1]} : vector<8x96xf32> to vector<4x8xf32>
    %cst_12 = arith.constant dense<0.000000e+00> : vector<4x4xf32>
    %16 = tpu.matmul %13, %14, %cst_12 {dimension_numbers = #tpu.dot_dimension_numbers<[1], [1], [0], [0], [0, 0, 1, 0], [], []>} : vector<4x8xf32>, vector<4x8xf32>, vector<4x4xf32> -> vector<4x4xf32>
    %cst_13 = arith.constant 0.353553385 : f32
    %17 = vector.broadcast %cst_13 : f32 to vector<4x4xf32>
    %18 = arith.mulf %16, %17 : vector<4x4xf32>
    %cst_14 = arith.constant dense<0xFF800000> : vector<4xf32>
    %19 = vector.multi_reduction <maximumf>, %18, %cst_14 [1] : vector<4x4xf32> to vector<4xf32>
    %20 = vector.shape_cast %19 : vector<4xf32> to vector<4x1xf32>
    %21 = vector.broadcast %20 : vector<4x1xf32> to vector<4x4xf32>
    %22 = arith.subf %18, %21 : vector<4x4xf32>
    %23 = math.exp %22 : vector<4x4xf32>
    %cst_15 = arith.constant dense<0.000000e+00> : vector<4xf32>
    %24 = vector.multi_reduction <add>, %23, %cst_15 [1] : vector<4x4xf32> to vector<4xf32>
    %25 = vector.shape_cast %24 : vector<4xf32> to vector<4x1xf32>
    %26 = vector.broadcast %25 : vector<4x1xf32> to vector<4x4xf32>
    %27 = arith.divf %23, %26 : vector<4x4xf32>
    %cst_16 = arith.constant dense<0.000000e+00> : vector<4x8xf32>
    %28 = tpu.matmul %27, %15, %cst_16 {dimension_numbers = #tpu.dot_dimension_numbers<[1], [0], [0], [1], [0, 0, 1, 1], [], []>} : vector<4x4xf32>, vector<4x8xf32>, vector<4x8xf32> -> vector<4x8xf32>
    %c0_17 = arith.constant 0 : index
    %c0_18 = arith.constant 0 : index
    %29 = vector.load %arg12[%c0_17, %c0_18] : memref<8x32xf32, #tpu.memory_space<vmem>>, vector<4x8xf32>
    tpu.vector_store %arg12[%c0_17, %c0_18], %28 {strides = array<i32>} : memref<8x32xf32, #tpu.memory_space<vmem>>, vector<4x8xf32>,
    %30 = vector.extract_strided_slice %12 {offsets = [0, 8], sizes = [4, 8], strides = [1, 1]} : vector<8x96xf32> to vector<4x8xf32>
    %31 = vector.extract_strided_slice %12 {offsets = [0, 40], sizes = [4, 8], strides = [1, 1]} : vector<8x96xf32> to vector<4x8xf32>
    %32 = vector.extract_strided_slice %12 {offsets = [0, 72], sizes = [4, 8], strides = [1, 1]} : vector<8x96xf32> to vector<4x8xf32>
    %cst_19 = arith.constant dense<0.000000e+00> : vector<4x4xf32>
    %33 = tpu.matmul %30, %31, %cst_19 {dimension_numbers = #tpu.dot_dimension_numbers<[1], [1], [0], [0], [0, 0, 1, 0], [], []>} : vector<4x8xf32>, vector<4x8xf32>, vector<4x4xf32> -> vector<4x4xf32>
    %cst_20 = arith.constant 0.353553385 : f32
    %34 = vector.broadcast %cst_20 : f32 to vector<4x4xf32>
    %35 = arith.mulf %33, %34 : vector<4x4xf32>
    %cst_21 = arith.constant dense<0xFF800000> : vector<4xf32>
    %36 = vector.multi_reduction <maximumf>, %35, %cst_21 [1] : vector<4x4xf32> to vector<4xf32>
    %37 = vector.shape_cast %36 : vector<4xf32> to vector<4x1xf32>
    %38 = vector.broadcast %37 : vector<4x1xf32> to vector<4x4xf32>
    %39 = arith.subf %35, %38 : vector<4x4xf32>
    %40 = math.exp %39 : vector<4x4xf32>
    %cst_22 = arith.constant dense<0.000000e+00> : vector<4xf32>
    %41 = vector.multi_reduction <add>, %40, %cst_22 [1] : vector<4x4xf32> to vector<4xf32>
    %42 = vector.shape_cast %41 : vector<4xf32> to vector<4x1xf32>
    %43 = vector.broadcast %42 : vector<4x1xf32> to vector<4x4xf32>
    %44 = arith.divf %40, %43 : vector<4x4xf32>
    %cst_23 = arith.constant dense<0.000000e+00> : vector<4x8xf32>
    %45 = tpu.matmul %44, %32, %cst_23 {dimension_numbers = #tpu.dot_dimension_numbers<[1], [0], [0], [1], [0, 0, 1, 1], [], []>} : vector<4x4xf32>, vector<4x8xf32>, vector<4x8xf32> -> vector<4x8xf32>
    %c0_24 = arith.constant 0 : index
    %c8 = arith.constant 8 : index
    %46 = vector.load %arg12[%c0_24, %c8] : memref<8x32xf32, #tpu.memory_space<vmem>>, vector<4x8xf32>
    tpu.vector_store %arg12[%c0_24, %c8], %45 {strides = array<i32>} : memref<8x32xf32, #tpu.memory_space<vmem>>, vector<4x8xf32>,
    %47 = vector.extract_strided_slice %12 {offsets = [0, 16], sizes = [4, 8], strides = [1, 1]} : vector<8x96xf32> to vector<4x8xf32>
    %48 = vector.extract_strided_slice %12 {offsets = [0, 48], sizes = [4, 8], strides = [1, 1]} : vector<8x96xf32> to vector<4x8xf32>
    %49 = vector.extract_strided_slice %12 {offsets = [0, 80], sizes = [4, 8], strides = [1, 1]} : vector<8x96xf32> to vector<4x8xf32>
    %cst_25 = arith.constant dense<0.000000e+00> : vector<4x4xf32>
    %50 = tpu.matmul %47, %48, %cst_25 {dimension_numbers = #tpu.dot_dimension_numbers<[1], [1], [0], [0], [0, 0, 1, 0], [], []>} : vector<4x8xf32>, vector<4x8xf32>, vector<4x4xf32> -> vector<4x4xf32>
    %cst_26 = arith.constant 0.353553385 : f32
    %51 = vector.broadcast %cst_26 : f32 to vector<4x4xf32>
    %52 = arith.mulf %50, %51 : vector<4x4xf32>
    %cst_27 = arith.constant dense<0xFF800000> : vector<4xf32>
    %53 = vector.multi_reduction <maximumf>, %52, %cst_27 [1] : vector<4x4xf32> to vector<4xf32>
    %54 = vector.shape_cast %53 : vector<4xf32> to vector<4x1xf32>
    %55 = vector.broadcast %54 : vector<4x1xf32> to vector<4x4xf32>
    %56 = arith.subf %52, %55 : vector<4x4xf32>
    %57 = math.exp %56 : vector<4x4xf32>
    %cst_28 = arith.constant dense<0.000000e+00> : vector<4xf32>
    %58 = vector.multi_reduction <add>, %57, %cst_28 [1] : vector<4x4xf32> to vector<4xf32>
    %59 = vector.shape_cast %58 : vector<4xf32> to vector<4x1xf32>
    %60 = vector.broadcast %59 : vector<4x1xf32> to vector<4x4xf32>
    %61 = arith.divf %57, %60 : vector<4x4xf32>
    %cst_29 = arith.constant dense<0.000000e+00> : vector<4x8xf32>
    %62 = tpu.matmul %61, %49, %cst_29 {dimension_numbers = #tpu.dot_dimension_numbers<[1], [0], [0], [1], [0, 0, 1, 1], [], []>} : vector<4x4xf32>, vector<4x8xf32>, vector<4x8xf32> -> vector<4x8xf32>
    %c0_30 = arith.constant 0 : index
    %c16 = arith.constant 16 : index
    %63 = vector.load %arg12[%c0_30, %c16] : memref<8x32xf32, #tpu.memory_space<vmem>>, vector<4x8xf32>
    tpu.vector_store %arg12[%c0_30, %c16], %62 {strides = array<i32>} : memref<8x32xf32, #tpu.memory_space<vmem>>, vector<4x8xf32>,
    %64 = vector.extract_strided_slice %12 {offsets = [0, 24], sizes = [4, 8], strides = [1, 1]} : vector<8x96xf32> to vector<4x8xf32>
    %65 = vector.extract_strided_slice %12 {offsets = [0, 56], sizes = [4, 8], strides = [1, 1]} : vector<8x96xf32> to vector<4x8xf32>
    %66 = vector.extract_strided_slice %12 {offsets = [0, 88], sizes = [4, 8], strides = [1, 1]} : vector<8x96xf32> to vector<4x8xf32>
    %cst_31 = arith.constant dense<0.000000e+00> : vector<4x4xf32>
    %67 = tpu.matmul %64, %65, %cst_31 {dimension_numbers = #tpu.dot_dimension_numbers<[1], [1], [0], [0], [0, 0, 1, 0], [], []>} : vector<4x8xf32>, vector<4x8xf32>, vector<4x4xf32> -> vector<4x4xf32>
    %cst_32 = arith.constant 0.353553385 : f32
    %68 = vector.broadcast %cst_32 : f32 to vector<4x4xf32>
    %69 = arith.mulf %67, %68 : vector<4x4xf32>
    %cst_33 = arith.constant dense<0xFF800000> : vector<4xf32>
    %70 = vector.multi_reduction <maximumf>, %69, %cst_33 [1] : vector<4x4xf32> to vector<4xf32>
    %71 = vector.shape_cast %70 : vector<4xf32> to vector<4x1xf32>
    %72 = vector.broadcast %71 : vector<4x1xf32> to vector<4x4xf32>
    %73 = arith.subf %69, %72 : vector<4x4xf32>
    %74 = math.exp %73 : vector<4x4xf32>
    %cst_34 = arith.constant dense<0.000000e+00> : vector<4xf32>
    %75 = vector.multi_reduction <add>, %74, %cst_34 [1] : vector<4x4xf32> to vector<4xf32>
    %76 = vector.shape_cast %75 : vector<4xf32> to vector<4x1xf32>
    %77 = vector.broadcast %76 : vector<4x1xf32> to vector<4x4xf32>
    %78 = arith.divf %74, %77 : vector<4x4xf32>
    %cst_35 = arith.constant dense<0.000000e+00> : vector<4x8xf32>
    %79 = tpu.matmul %78, %66, %cst_35 {dimension_numbers = #tpu.dot_dimension_numbers<[1], [0], [0], [1], [0, 0, 1, 1], [], []>} : vector<4x4xf32>, vector<4x8xf32>, vector<4x8xf32> -> vector<4x8xf32>
    %c0_36 = arith.constant 0 : index
    %c24 = arith.constant 24 : index
    %80 = vector.load %arg12[%c0_36, %c24] : memref<8x32xf32, #tpu.memory_space<vmem>>, vector<4x8xf32>
    tpu.vector_store %arg12[%c0_36, %c24], %79 {strides = array<i32>} : memref<8x32xf32, #tpu.memory_space<vmem>>, vector<4x8xf32>,
    %81 = vector.extract_strided_slice %12 {offsets = [4, 0], sizes = [4, 8], strides = [1, 1]} : vector<8x96xf32> to vector<4x8xf32>
    %82 = vector.extract_strided_slice %12 {offsets = [4, 32], sizes = [4, 8], strides = [1, 1]} : vector<8x96xf32> to vector<4x8xf32>
    %83 = vector.extract_strided_slice %12 {offsets = [4, 64], sizes = [4, 8], strides = [1, 1]} : vector<8x96xf32> to vector<4x8xf32>
    %cst_37 = arith.constant dense<0.000000e+00> : vector<4x4xf32>
    %84 = tpu.matmul %81, %82, %cst_37 {dimension_numbers = #tpu.dot_dimension_numbers<[1], [1], [0], [0], [0, 0, 1, 0], [], []>} : vector<4x8xf32>, vector<4x8xf32>, vector<4x4xf32> -> vector<4x4xf32>
    %cst_38 = arith.constant 0.353553385 : f32
    %85 = vector.broadcast %cst_38 : f32 to vector<4x4xf32>
    %86 = arith.mulf %84, %85 : vector<4x4xf32>
    %cst_39 = arith.constant dense<0xFF800000> : vector<4xf32>
    %87 = vector.multi_reduction <maximumf>, %86, %cst_39 [1] : vector<4x4xf32> to vector<4xf32>
    %88 = vector.shape_cast %87 : vector<4xf32> to vector<4x1xf32>
    %89 = vector.broadcast %88 : vector<4x1xf32> to vector<4x4xf32>
    %90 = arith.subf %86, %89 : vector<4x4xf32>
    %91 = math.exp %90 : vector<4x4xf32>
    %cst_40 = arith.constant dense<0.000000e+00> : vector<4xf32>
    %92 = vector.multi_reduction <add>, %91, %cst_40 [1] : vector<4x4xf32> to vector<4xf32>
    %93 = vector.shape_cast %92 : vector<4xf32> to vector<4x1xf32>
    %94 = vector.broadcast %93 : vector<4x1xf32> to vector<4x4xf32>
    %95 = arith.divf %91, %94 : vector<4x4xf32>
    %cst_41 = arith.constant dense<0.000000e+00> : vector<4x8xf32>
    %96 = tpu.matmul %95, %83, %cst_41 {dimension_numbers = #tpu.dot_dimension_numbers<[1], [0], [0], [1], [0, 0, 1, 1], [], []>} : vector<4x4xf32>, vector<4x8xf32>, vector<4x8xf32> -> vector<4x8xf32>
    %c4 = arith.constant 4 : index
    %c0_42 = arith.constant 0 : index
    %97 = vector.load %arg12[%c4, %c0_42] : memref<8x32xf32, #tpu.memory_space<vmem>>, vector<4x8xf32>
    tpu.vector_store %arg12[%c4, %c0_42], %96 {strides = array<i32>} : memref<8x32xf32, #tpu.memory_space<vmem>>, vector<4x8xf32>,
    %98 = vector.extract_strided_slice %12 {offsets = [4, 8], sizes = [4, 8], strides = [1, 1]} : vector<8x96xf32> to vector<4x8xf32>
    %99 = vector.extract_strided_slice %12 {offsets = [4, 40], sizes = [4, 8], strides = [1, 1]} : vector<8x96xf32> to vector<4x8xf32>
    %100 = vector.extract_strided_slice %12 {offsets = [4, 72], sizes = [4, 8], strides = [1, 1]} : vector<8x96xf32> to vector<4x8xf32>
    %cst_43 = arith.constant dense<0.000000e+00> : vector<4x4xf32>
    %101 = tpu.matmul %98, %99, %cst_43 {dimension_numbers = #tpu.dot_dimension_numbers<[1], [1], [0], [0], [0, 0, 1, 0], [], []>} : vector<4x8xf32>, vector<4x8xf32>, vector<4x4xf32> -> vector<4x4xf32>
    %cst_44 = arith.constant 0.353553385 : f32
    %102 = vector.broadcast %cst_44 : f32 to vector<4x4xf32>
    %103 = arith.mulf %101, %102 : vector<4x4xf32>
    %cst_45 = arith.constant dense<0xFF800000> : vector<4xf32>
    %104 = vector.multi_reduction <maximumf>, %103, %cst_45 [1] : vector<4x4xf32> to vector<4xf32>
    %105 = vector.shape_cast %104 : vector<4xf32> to vector<4x1xf32>
    %106 = vector.broadcast %105 : vector<4x1xf32> to vector<4x4xf32>
    %107 = arith.subf %103, %106 : vector<4x4xf32>
    %108 = math.exp %107 : vector<4x4xf32>
    %cst_46 = arith.constant dense<0.000000e+00> : vector<4xf32>
    %109 = vector.multi_reduction <add>, %108, %cst_46 [1] : vector<4x4xf32> to vector<4xf32>
    %110 = vector.shape_cast %109 : vector<4xf32> to vector<4x1xf32>
    %111 = vector.broadcast %110 : vector<4x1xf32> to vector<4x4xf32>
    %112 = arith.divf %108, %111 : vector<4x4xf32>
    %cst_47 = arith.constant dense<0.000000e+00> : vector<4x8xf32>
    %113 = tpu.matmul %112, %100, %cst_47 {dimension_numbers = #tpu.dot_dimension_numbers<[1], [0], [0], [1], [0, 0, 1, 1], [], []>} : vector<4x4xf32>, vector<4x8xf32>, vector<4x8xf32> -> vector<4x8xf32>
    %c4_48 = arith.constant 4 : index
    %c8_49 = arith.constant 8 : index
    %114 = vector.load %arg12[%c4_48, %c8_49] : memref<8x32xf32, #tpu.memory_space<vmem>>, vector<4x8xf32>
    tpu.vector_store %arg12[%c4_48, %c8_49], %113 {strides = array<i32>} : memref<8x32xf32, #tpu.memory_space<vmem>>, vector<4x8xf32>,
    %115 = vector.extract_strided_slice %12 {offsets = [4, 16], sizes = [4, 8], strides = [1, 1]} : vector<8x96xf32> to vector<4x8xf32>
    %116 = vector.extract_strided_slice %12 {offsets = [4, 48], sizes = [4, 8], strides = [1, 1]} : vector<8x96xf32> to vector<4x8xf32>
    %117 = vector.extract_strided_slice %12 {offsets = [4, 80], sizes = [4, 8], strides = [1, 1]} : vector<8x96xf32> to vector<4x8xf32>
    %cst_50 = arith.constant dense<0.000000e+00> : vector<4x4xf32>
    %118 = tpu.matmul %115, %116, %cst_50 {dimension_numbers = #tpu.dot_dimension_numbers<[1], [1], [0], [0], [0, 0, 1, 0], [], []>} : vector<4x8xf32>, vector<4x8xf32>, vector<4x4xf32> -> vector<4x4xf32>
    %cst_51 = arith.constant 0.353553385 : f32
    %119 = vector.broadcast %cst_51 : f32 to vector<4x4xf32>
    %120 = arith.mulf %118, %119 : vector<4x4xf32>
    %cst_52 = arith.constant dense<0xFF800000> : vector<4xf32>
    %121 = vector.multi_reduction <maximumf>, %120, %cst_52 [1] : vector<4x4xf32> to vector<4xf32>
    %122 = vector.shape_cast %121 : vector<4xf32> to vector<4x1xf32>
    %123 = vector.broadcast %122 : vector<4x1xf32> to vector<4x4xf32>
    %124 = arith.subf %120, %123 : vector<4x4xf32>
    %125 = math.exp %124 : vector<4x4xf32>
    %cst_53 = arith.constant dense<0.000000e+00> : vector<4xf32>
    %126 = vector.multi_reduction <add>, %125, %cst_53 [1] : vector<4x4xf32> to vector<4xf32>
    %127 = vector.shape_cast %126 : vector<4xf32> to vector<4x1xf32>
    %128 = vector.broadcast %127 : vector<4x1xf32> to vector<4x4xf32>
    %129 = arith.divf %125, %128 : vector<4x4xf32>
    %cst_54 = arith.constant dense<0.000000e+00> : vector<4x8xf32>
    %130 = tpu.matmul %129, %117, %cst_54 {dimension_numbers = #tpu.dot_dimension_numbers<[1], [0], [0], [1], [0, 0, 1, 1], [], []>} : vector<4x4xf32>, vector<4x8xf32>, vector<4x8xf32> -> vector<4x8xf32>
    %c4_55 = arith.constant 4 : index
    %c16_56 = arith.constant 16 : index
    %131 = vector.load %arg12[%c4_55, %c16_56] : memref<8x32xf32, #tpu.memory_space<vmem>>, vector<4x8xf32>
    tpu.vector_store %arg12[%c4_55, %c16_56], %130 {strides = array<i32>} : memref<8x32xf32, #tpu.memory_space<vmem>>, vector<4x8xf32>,
    %132 = vector.extract_strided_slice %12 {offsets = [4, 24], sizes = [4, 8], strides = [1, 1]} : vector<8x96xf32> to vector<4x8xf32>
    %133 = vector.extract_strided_slice %12 {offsets = [4, 56], sizes = [4, 8], strides = [1, 1]} : vector<8x96xf32> to vector<4x8xf32>
    %134 = vector.extract_strided_slice %12 {offsets = [4, 88], sizes = [4, 8], strides = [1, 1]} : vector<8x96xf32> to vector<4x8xf32>
    %cst_57 = arith.constant dense<0.000000e+00> : vector<4x4xf32>
    %135 = tpu.matmul %132, %133, %cst_57 {dimension_numbers = #tpu.dot_dimension_numbers<[1], [1], [0], [0], [0, 0, 1, 0], [], []>} : vector<4x8xf32>, vector<4x8xf32>, vector<4x4xf32> -> vector<4x4xf32>
    %cst_58 = arith.constant 0.353553385 : f32
    %136 = vector.broadcast %cst_58 : f32 to vector<4x4xf32>
    %137 = arith.mulf %135, %136 : vector<4x4xf32>
    %cst_59 = arith.constant dense<0xFF800000> : vector<4xf32>
    %138 = vector.multi_reduction <maximumf>, %137, %cst_59 [1] : vector<4x4xf32> to vector<4xf32>
    %139 = vector.shape_cast %138 : vector<4xf32> to vector<4x1xf32>
    %140 = vector.broadcast %139 : vector<4x1xf32> to vector<4x4xf32>
    %141 = arith.subf %137, %140 : vector<4x4xf32>
    %142 = math.exp %141 : vector<4x4xf32>
    %cst_60 = arith.constant dense<0.000000e+00> : vector<4xf32>
    %143 = vector.multi_reduction <add>, %142, %cst_60 [1] : vector<4x4xf32> to vector<4xf32>
    %144 = vector.shape_cast %143 : vector<4xf32> to vector<4x1xf32>
    %145 = vector.broadcast %144 : vector<4x1xf32> to vector<4x4xf32>
    %146 = arith.divf %142, %145 : vector<4x4xf32>
    %cst_61 = arith.constant dense<0.000000e+00> : vector<4x8xf32>
    %147 = tpu.matmul %146, %134, %cst_61 {dimension_numbers = #tpu.dot_dimension_numbers<[1], [0], [0], [1], [0, 0, 1, 1], [], []>} : vector<4x4xf32>, vector<4x8xf32>, vector<4x8xf32> -> vector<4x8xf32>
    %c4_62 = arith.constant 4 : index
    %c24_63 = arith.constant 24 : index
    %148 = vector.load %arg12[%c4_62, %c24_63] : memref<8x32xf32, #tpu.memory_space<vmem>>, vector<4x8xf32>
    tpu.vector_store %arg12[%c4_62, %c24_63], %147 {strides = array<i32>} : memref<8x32xf32, #tpu.memory_space<vmem>>, vector<4x8xf32>,
    %c0_64 = arith.constant 0 : index
    %c0_65 = arith.constant 0 : index
    %149 = vector.load %arg12[%c0_64, %c0_65] : memref<8x32xf32, #tpu.memory_space<vmem>>, vector<8x32xf32>
    %c0_66 = arith.constant 0 : index
    %c0_67 = arith.constant 0 : index
    %c0_68 = arith.constant 0 : index
    %150 = vector.load %arg5[%c0_66, %c0_67, %c0_68] : memref<2x32x32xf32, #tpu.memory_space<vmem>>, vector<1x32x32xf32>
    %151 = vector.shape_cast %150 : vector<1x32x32xf32> to vector<32x32xf32>
    %cst_69 = arith.constant dense<0.000000e+00> : vector<8x32xf32>
    %152 = tpu.matmul %149, %151, %cst_69 {dimension_numbers = #tpu.dot_dimension_numbers<[1], [0], [0], [1], [0, 0, 1, 1], [], []>} : vector<8x32xf32>, vector<32x32xf32>, vector<8x32xf32> -> vector<8x32xf32>
    %c0_70 = arith.constant 0 : index
    %c0_71 = arith.constant 0 : index
    %c0_72 = arith.constant 0 : index
    %153 = vector.load %arg6[%c0_70, %c0_71, %c0_72] : memref<2x1x32xf32, #tpu.memory_space<vmem>>, vector<1x1x32xf32>
    %154 = vector.shape_cast %153 : vector<1x1x32xf32> to vector<1x32xf32>
    %155 = vector.broadcast %154 : vector<1x32xf32> to vector<8x32xf32>
    %156 = arith.addf %152, %155 : vector<8x32xf32>
    %157 = arith.addf %5, %156 : vector<8x32xf32>
    %cst_73 = arith.constant dense<0.000000e+00> : vector<8xf32>
    %158 = vector.multi_reduction <add>, %157, %cst_73 [1] : vector<8x32xf32> to vector<8xf32>
    %159 = vector.shape_cast %158 : vector<8xf32> to vector<8x1xf32>
    %cst_74 = arith.constant 3.200000e+01 : f32
    %160 = vector.broadcast %cst_74 : f32 to vector<8x1xf32>
    %161 = arith.divf %159, %160 : vector<8x1xf32>
    %162 = vector.broadcast %161 : vector<8x1xf32> to vector<8x32xf32>
    %163 = arith.subf %157, %162 : vector<8x32xf32>
    %164 = vector.broadcast %161 : vector<8x1xf32> to vector<8x32xf32>
    %165 = arith.subf %157, %164 : vector<8x32xf32>
    %166 = arith.mulf %163, %165 : vector<8x32xf32>
    %cst_75 = arith.constant dense<0.000000e+00> : vector<8xf32>
    %167 = vector.multi_reduction <add>, %166, %cst_75 [1] : vector<8x32xf32> to vector<8xf32>
    %168 = vector.shape_cast %167 : vector<8xf32> to vector<8x1xf32>
    %cst_76 = arith.constant 3.200000e+01 : f32
    %169 = vector.broadcast %cst_76 : f32 to vector<8x1xf32>
    %170 = arith.divf %168, %169 : vector<8x1xf32>
    %171 = vector.broadcast %161 : vector<8x1xf32> to vector<8x32xf32>
    %172 = arith.subf %157, %171 : vector<8x32xf32>
    %cst_77 = arith.constant 9.99999974E-6 : f32
    %173 = vector.broadcast %cst_77 : f32 to vector<8x1xf32>
    %174 = arith.addf %170, %173 : vector<8x1xf32>
    %175 = math.rsqrt %174 : vector<8x1xf32>
    %176 = vector.broadcast %175 : vector<8x1xf32> to vector<8x32xf32>
    %177 = arith.mulf %172, %176 : vector<8x32xf32>
    %c0_78 = arith.constant 0 : index
    %c0_79 = arith.constant 0 : index
    %c0_80 = arith.constant 0 : index
    %178 = vector.load %arg7[%c0_78, %c0_79, %c0_80] : memref<2x1x32xf32, #tpu.memory_space<vmem>>, vector<1x1x32xf32>
    %179 = vector.shape_cast %178 : vector<1x1x32xf32> to vector<1x32xf32>
    %180 = vector.broadcast %179 : vector<1x32xf32> to vector<8x32xf32>
    %181 = arith.mulf %177, %180 : vector<8x32xf32>
    %c0_81 = arith.constant 0 : index
    %c0_82 = arith.constant 0 : index
    %c0_83 = arith.constant 0 : index
    %182 = vector.load %arg8[%c0_81, %c0_82, %c0_83] : memref<2x1x32xf32, #tpu.memory_space<vmem>>, vector<1x1x32xf32>
    %183 = vector.shape_cast %182 : vector<1x1x32xf32> to vector<1x32xf32>
    %184 = vector.broadcast %183 : vector<1x32xf32> to vector<8x32xf32>
    %185 = arith.addf %181, %184 : vector<8x32xf32>
    %c1 = arith.constant 1 : index
    %c0_84 = arith.constant 0 : index
    %c0_85 = arith.constant 0 : index
    %186 = vector.load %arg3[%c1, %c0_84, %c0_85] : memref<2x32x96xf32, #tpu.memory_space<vmem>>, vector<1x32x96xf32>
    %187 = vector.shape_cast %186 : vector<1x32x96xf32> to vector<32x96xf32>
    %cst_86 = arith.constant dense<0.000000e+00> : vector<8x96xf32>
    %188 = tpu.matmul %185, %187, %cst_86 {dimension_numbers = #tpu.dot_dimension_numbers<[1], [0], [0], [1], [0, 0, 1, 1], [], []>} : vector<8x32xf32>, vector<32x96xf32>, vector<8x96xf32> -> vector<8x96xf32>
    %c1_87 = arith.constant 1 : index
    %c0_88 = arith.constant 0 : index
    %c0_89 = arith.constant 0 : index
    %189 = vector.load %arg4[%c1_87, %c0_88, %c0_89] : memref<2x1x96xf32, #tpu.memory_space<vmem>>, vector<1x1x96xf32>
    %190 = vector.shape_cast %189 : vector<1x1x96xf32> to vector<1x96xf32>
    %191 = vector.broadcast %190 : vector<1x96xf32> to vector<8x96xf32>
    %192 = arith.addf %188, %191 : vector<8x96xf32>
    %193 = vector.extract_strided_slice %192 {offsets = [0, 0], sizes = [4, 8], strides = [1, 1]} : vector<8x96xf32> to vector<4x8xf32>
    %194 = vector.extract_strided_slice %192 {offsets = [0, 32], sizes = [4, 8], strides = [1, 1]} : vector<8x96xf32> to vector<4x8xf32>
    %195 = vector.extract_strided_slice %192 {offsets = [0, 64], sizes = [4, 8], strides = [1, 1]} : vector<8x96xf32> to vector<4x8xf32>
    %cst_90 = arith.constant dense<0.000000e+00> : vector<4x4xf32>
    %196 = tpu.matmul %193, %194, %cst_90 {dimension_numbers = #tpu.dot_dimension_numbers<[1], [1], [0], [0], [0, 0, 1, 0], [], []>} : vector<4x8xf32>, vector<4x8xf32>, vector<4x4xf32> -> vector<4x4xf32>
    %cst_91 = arith.constant 0.353553385 : f32
    %197 = vector.broadcast %cst_91 : f32 to vector<4x4xf32>
    %198 = arith.mulf %196, %197 : vector<4x4xf32>
    %cst_92 = arith.constant dense<0xFF800000> : vector<4xf32>
    %199 = vector.multi_reduction <maximumf>, %198, %cst_92 [1] : vector<4x4xf32> to vector<4xf32>
    %200 = vector.shape_cast %199 : vector<4xf32> to vector<4x1xf32>
    %201 = vector.broadcast %200 : vector<4x1xf32> to vector<4x4xf32>
    %202 = arith.subf %198, %201 : vector<4x4xf32>
    %203 = math.exp %202 : vector<4x4xf32>
    %cst_93 = arith.constant dense<0.000000e+00> : vector<4xf32>
    %204 = vector.multi_reduction <add>, %203, %cst_93 [1] : vector<4x4xf32> to vector<4xf32>
    %205 = vector.shape_cast %204 : vector<4xf32> to vector<4x1xf32>
    %206 = vector.broadcast %205 : vector<4x1xf32> to vector<4x4xf32>
    %207 = arith.divf %203, %206 : vector<4x4xf32>
    %cst_94 = arith.constant dense<0.000000e+00> : vector<4x8xf32>
    %208 = tpu.matmul %207, %195, %cst_94 {dimension_numbers = #tpu.dot_dimension_numbers<[1], [0], [0], [1], [0, 0, 1, 1], [], []>} : vector<4x4xf32>, vector<4x8xf32>, vector<4x8xf32> -> vector<4x8xf32>
    %c0_95 = arith.constant 0 : index
    %c0_96 = arith.constant 0 : index
    %209 = vector.load %arg12[%c0_95, %c0_96] : memref<8x32xf32, #tpu.memory_space<vmem>>, vector<4x8xf32>
    tpu.vector_store %arg12[%c0_95, %c0_96], %208 {strides = array<i32>} : memref<8x32xf32, #tpu.memory_space<vmem>>, vector<4x8xf32>,
    %210 = vector.extract_strided_slice %192 {offsets = [0, 8], sizes = [4, 8], strides = [1, 1]} : vector<8x96xf32> to vector<4x8xf32>
    %211 = vector.extract_strided_slice %192 {offsets = [0, 40], sizes = [4, 8], strides = [1, 1]} : vector<8x96xf32> to vector<4x8xf32>
    %212 = vector.extract_strided_slice %192 {offsets = [0, 72], sizes = [4, 8], strides = [1, 1]} : vector<8x96xf32> to vector<4x8xf32>
    %cst_97 = arith.constant dense<0.000000e+00> : vector<4x4xf32>
    %213 = tpu.matmul %210, %211, %cst_97 {dimension_numbers = #tpu.dot_dimension_numbers<[1], [1], [0], [0], [0, 0, 1, 0], [], []>} : vector<4x8xf32>, vector<4x8xf32>, vector<4x4xf32> -> vector<4x4xf32>
    %cst_98 = arith.constant 0.353553385 : f32
    %214 = vector.broadcast %cst_98 : f32 to vector<4x4xf32>
    %215 = arith.mulf %213, %214 : vector<4x4xf32>
    %cst_99 = arith.constant dense<0xFF800000> : vector<4xf32>
    %216 = vector.multi_reduction <maximumf>, %215, %cst_99 [1] : vector<4x4xf32> to vector<4xf32>
    %217 = vector.shape_cast %216 : vector<4xf32> to vector<4x1xf32>
    %218 = vector.broadcast %217 : vector<4x1xf32> to vector<4x4xf32>
    %219 = arith.subf %215, %218 : vector<4x4xf32>
    %220 = math.exp %219 : vector<4x4xf32>
    %cst_100 = arith.constant dense<0.000000e+00> : vector<4xf32>
    %221 = vector.multi_reduction <add>, %220, %cst_100 [1] : vector<4x4xf32> to vector<4xf32>
    %222 = vector.shape_cast %221 : vector<4xf32> to vector<4x1xf32>
    %223 = vector.broadcast %222 : vector<4x1xf32> to vector<4x4xf32>
    %224 = arith.divf %220, %223 : vector<4x4xf32>
    %cst_101 = arith.constant dense<0.000000e+00> : vector<4x8xf32>
    %225 = tpu.matmul %224, %212, %cst_101 {dimension_numbers = #tpu.dot_dimension_numbers<[1], [0], [0], [1], [0, 0, 1, 1], [], []>} : vector<4x4xf32>, vector<4x8xf32>, vector<4x8xf32> -> vector<4x8xf32>
    %c0_102 = arith.constant 0 : index
    %c8_103 = arith.constant 8 : index
    %226 = vector.load %arg12[%c0_102, %c8_103] : memref<8x32xf32, #tpu.memory_space<vmem>>, vector<4x8xf32>
    tpu.vector_store %arg12[%c0_102, %c8_103], %225 {strides = array<i32>} : memref<8x32xf32, #tpu.memory_space<vmem>>, vector<4x8xf32>,
    %227 = vector.extract_strided_slice %192 {offsets = [0, 16], sizes = [4, 8], strides = [1, 1]} : vector<8x96xf32> to vector<4x8xf32>
    %228 = vector.extract_strided_slice %192 {offsets = [0, 48], sizes = [4, 8], strides = [1, 1]} : vector<8x96xf32> to vector<4x8xf32>
    %229 = vector.extract_strided_slice %192 {offsets = [0, 80], sizes = [4, 8], strides = [1, 1]} : vector<8x96xf32> to vector<4x8xf32>
    %cst_104 = arith.constant dense<0.000000e+00> : vector<4x4xf32>
    %230 = tpu.matmul %227, %228, %cst_104 {dimension_numbers = #tpu.dot_dimension_numbers<[1], [1], [0], [0], [0, 0, 1, 0], [], []>} : vector<4x8xf32>, vector<4x8xf32>, vector<4x4xf32> -> vector<4x4xf32>
    %cst_105 = arith.constant 0.353553385 : f32
    %231 = vector.broadcast %cst_105 : f32 to vector<4x4xf32>
    %232 = arith.mulf %230, %231 : vector<4x4xf32>
    %cst_106 = arith.constant dense<0xFF800000> : vector<4xf32>
    %233 = vector.multi_reduction <maximumf>, %232, %cst_106 [1] : vector<4x4xf32> to vector<4xf32>
    %234 = vector.shape_cast %233 : vector<4xf32> to vector<4x1xf32>
    %235 = vector.broadcast %234 : vector<4x1xf32> to vector<4x4xf32>
    %236 = arith.subf %232, %235 : vector<4x4xf32>
    %237 = math.exp %236 : vector<4x4xf32>
    %cst_107 = arith.constant dense<0.000000e+00> : vector<4xf32>
    %238 = vector.multi_reduction <add>, %237, %cst_107 [1] : vector<4x4xf32> to vector<4xf32>
    %239 = vector.shape_cast %238 : vector<4xf32> to vector<4x1xf32>
    %240 = vector.broadcast %239 : vector<4x1xf32> to vector<4x4xf32>
    %241 = arith.divf %237, %240 : vector<4x4xf32>
    %cst_108 = arith.constant dense<0.000000e+00> : vector<4x8xf32>
    %242 = tpu.matmul %241, %229, %cst_108 {dimension_numbers = #tpu.dot_dimension_numbers<[1], [0], [0], [1], [0, 0, 1, 1], [], []>} : vector<4x4xf32>, vector<4x8xf32>, vector<4x8xf32> -> vector<4x8xf32>
    %c0_109 = arith.constant 0 : index
    %c16_110 = arith.constant 16 : index
    %243 = vector.load %arg12[%c0_109, %c16_110] : memref<8x32xf32, #tpu.memory_space<vmem>>, vector<4x8xf32>
    tpu.vector_store %arg12[%c0_109, %c16_110], %242 {strides = array<i32>} : memref<8x32xf32, #tpu.memory_space<vmem>>, vector<4x8xf32>,
    %244 = vector.extract_strided_slice %192 {offsets = [0, 24], sizes = [4, 8], strides = [1, 1]} : vector<8x96xf32> to vector<4x8xf32>
    %245 = vector.extract_strided_slice %192 {offsets = [0, 56], sizes = [4, 8], strides = [1, 1]} : vector<8x96xf32> to vector<4x8xf32>
    %246 = vector.extract_strided_slice %192 {offsets = [0, 88], sizes = [4, 8], strides = [1, 1]} : vector<8x96xf32> to vector<4x8xf32>
    %cst_111 = arith.constant dense<0.000000e+00> : vector<4x4xf32>
    %247 = tpu.matmul %244, %245, %cst_111 {dimension_numbers = #tpu.dot_dimension_numbers<[1], [1], [0], [0], [0, 0, 1, 0], [], []>} : vector<4x8xf32>, vector<4x8xf32>, vector<4x4xf32> -> vector<4x4xf32>
    %cst_112 = arith.constant 0.353553385 : f32
    %248 = vector.broadcast %cst_112 : f32 to vector<4x4xf32>
    %249 = arith.mulf %247, %248 : vector<4x4xf32>
    %cst_113 = arith.constant dense<0xFF800000> : vector<4xf32>
    %250 = vector.multi_reduction <maximumf>, %249, %cst_113 [1] : vector<4x4xf32> to vector<4xf32>
    %251 = vector.shape_cast %250 : vector<4xf32> to vector<4x1xf32>
    %252 = vector.broadcast %251 : vector<4x1xf32> to vector<4x4xf32>
    %253 = arith.subf %249, %252 : vector<4x4xf32>
    %254 = math.exp %253 : vector<4x4xf32>
    %cst_114 = arith.constant dense<0.000000e+00> : vector<4xf32>
    %255 = vector.multi_reduction <add>, %254, %cst_114 [1] : vector<4x4xf32> to vector<4xf32>
    %256 = vector.shape_cast %255 : vector<4xf32> to vector<4x1xf32>
    %257 = vector.broadcast %256 : vector<4x1xf32> to vector<4x4xf32>
    %258 = arith.divf %254, %257 : vector<4x4xf32>
    %cst_115 = arith.constant dense<0.000000e+00> : vector<4x8xf32>
    %259 = tpu.matmul %258, %246, %cst_115 {dimension_numbers = #tpu.dot_dimension_numbers<[1], [0], [0], [1], [0, 0, 1, 1], [], []>} : vector<4x4xf32>, vector<4x8xf32>, vector<4x8xf32> -> vector<4x8xf32>
    %c0_116 = arith.constant 0 : index
    %c24_117 = arith.constant 24 : index
    %260 = vector.load %arg12[%c0_116, %c24_117] : memref<8x32xf32, #tpu.memory_space<vmem>>, vector<4x8xf32>
    tpu.vector_store %arg12[%c0_116, %c24_117], %259 {strides = array<i32>} : memref<8x32xf32, #tpu.memory_space<vmem>>, vector<4x8xf32>,
    %261 = vector.extract_strided_slice %192 {offsets = [4, 0], sizes = [4, 8], strides = [1, 1]} : vector<8x96xf32> to vector<4x8xf32>
    %262 = vector.extract_strided_slice %192 {offsets = [4, 32], sizes = [4, 8], strides = [1, 1]} : vector<8x96xf32> to vector<4x8xf32>
    %263 = vector.extract_strided_slice %192 {offsets = [4, 64], sizes = [4, 8], strides = [1, 1]} : vector<8x96xf32> to vector<4x8xf32>
    %cst_118 = arith.constant dense<0.000000e+00> : vector<4x4xf32>
    %264 = tpu.matmul %261, %262, %cst_118 {dimension_numbers = #tpu.dot_dimension_numbers<[1], [1], [0], [0], [0, 0, 1, 0], [], []>} : vector<4x8xf32>, vector<4x8xf32>, vector<4x4xf32> -> vector<4x4xf32>
    %cst_119 = arith.constant 0.353553385 : f32
    %265 = vector.broadcast %cst_119 : f32 to vector<4x4xf32>
    %266 = arith.mulf %264, %265 : vector<4x4xf32>
    %cst_120 = arith.constant dense<0xFF800000> : vector<4xf32>
    %267 = vector.multi_reduction <maximumf>, %266, %cst_120 [1] : vector<4x4xf32> to vector<4xf32>
    %268 = vector.shape_cast %267 : vector<4xf32> to vector<4x1xf32>
    %269 = vector.broadcast %268 : vector<4x1xf32> to vector<4x4xf32>
    %270 = arith.subf %266, %269 : vector<4x4xf32>
    %271 = math.exp %270 : vector<4x4xf32>
    %cst_121 = arith.constant dense<0.000000e+00> : vector<4xf32>
    %272 = vector.multi_reduction <add>, %271, %cst_121 [1] : vector<4x4xf32> to vector<4xf32>
    %273 = vector.shape_cast %272 : vector<4xf32> to vector<4x1xf32>
    %274 = vector.broadcast %273 : vector<4x1xf32> to vector<4x4xf32>
    %275 = arith.divf %271, %274 : vector<4x4xf32>
    %cst_122 = arith.constant dense<0.000000e+00> : vector<4x8xf32>
    %276 = tpu.matmul %275, %263, %cst_122 {dimension_numbers = #tpu.dot_dimension_numbers<[1], [0], [0], [1], [0, 0, 1, 1], [], []>} : vector<4x4xf32>, vector<4x8xf32>, vector<4x8xf32> -> vector<4x8xf32>
    %c4_123 = arith.constant 4 : index
    %c0_124 = arith.constant 0 : index
    %277 = vector.load %arg12[%c4_123, %c0_124] : memref<8x32xf32, #tpu.memory_space<vmem>>, vector<4x8xf32>
    tpu.vector_store %arg12[%c4_123, %c0_124], %276 {strides = array<i32>} : memref<8x32xf32, #tpu.memory_space<vmem>>, vector<4x8xf32>,
    %278 = vector.extract_strided_slice %192 {offsets = [4, 8], sizes = [4, 8], strides = [1, 1]} : vector<8x96xf32> to vector<4x8xf32>
    %279 = vector.extract_strided_slice %192 {offsets = [4, 40], sizes = [4, 8], strides = [1, 1]} : vector<8x96xf32> to vector<4x8xf32>
    %280 = vector.extract_strided_slice %192 {offsets = [4, 72], sizes = [4, 8], strides = [1, 1]} : vector<8x96xf32> to vector<4x8xf32>
    %cst_125 = arith.constant dense<0.000000e+00> : vector<4x4xf32>
    %281 = tpu.matmul %278, %279, %cst_125 {dimension_numbers = #tpu.dot_dimension_numbers<[1], [1], [0], [0], [0, 0, 1, 0], [], []>} : vector<4x8xf32>, vector<4x8xf32>, vector<4x4xf32> -> vector<4x4xf32>
    %cst_126 = arith.constant 0.353553385 : f32
    %282 = vector.broadcast %cst_126 : f32 to vector<4x4xf32>
    %283 = arith.mulf %281, %282 : vector<4x4xf32>
    %cst_127 = arith.constant dense<0xFF800000> : vector<4xf32>
    %284 = vector.multi_reduction <maximumf>, %283, %cst_127 [1] : vector<4x4xf32> to vector<4xf32>
    %285 = vector.shape_cast %284 : vector<4xf32> to vector<4x1xf32>
    %286 = vector.broadcast %285 : vector<4x1xf32> to vector<4x4xf32>
    %287 = arith.subf %283, %286 : vector<4x4xf32>
    %288 = math.exp %287 : vector<4x4xf32>
    %cst_128 = arith.constant dense<0.000000e+00> : vector<4xf32>
    %289 = vector.multi_reduction <add>, %288, %cst_128 [1] : vector<4x4xf32> to vector<4xf32>
    %290 = vector.shape_cast %289 : vector<4xf32> to vector<4x1xf32>
    %291 = vector.broadcast %290 : vector<4x1xf32> to vector<4x4xf32>
    %292 = arith.divf %288, %291 : vector<4x4xf32>
    %cst_129 = arith.constant dense<0.000000e+00> : vector<4x8xf32>
    %293 = tpu.matmul %292, %280, %cst_129 {dimension_numbers = #tpu.dot_dimension_numbers<[1], [0], [0], [1], [0, 0, 1, 1], [], []>} : vector<4x4xf32>, vector<4x8xf32>, vector<4x8xf32> -> vector<4x8xf32>
    %c4_130 = arith.constant 4 : index
    %c8_131 = arith.constant 8 : index
    %294 = vector.load %arg12[%c4_130, %c8_131] : memref<8x32xf32, #tpu.memory_space<vmem>>, vector<4x8xf32>
    tpu.vector_store %arg12[%c4_130, %c8_131], %293 {strides = array<i32>} : memref<8x32xf32, #tpu.memory_space<vmem>>, vector<4x8xf32>,
    %295 = vector.extract_strided_slice %192 {offsets = [4, 16], sizes = [4, 8], strides = [1, 1]} : vector<8x96xf32> to vector<4x8xf32>
    %296 = vector.extract_strided_slice %192 {offsets = [4, 48], sizes = [4, 8], strides = [1, 1]} : vector<8x96xf32> to vector<4x8xf32>
    %297 = vector.extract_strided_slice %192 {offsets = [4, 80], sizes = [4, 8], strides = [1, 1]} : vector<8x96xf32> to vector<4x8xf32>
    %cst_132 = arith.constant dense<0.000000e+00> : vector<4x4xf32>
    %298 = tpu.matmul %295, %296, %cst_132 {dimension_numbers = #tpu.dot_dimension_numbers<[1], [1], [0], [0], [0, 0, 1, 0], [], []>} : vector<4x8xf32>, vector<4x8xf32>, vector<4x4xf32> -> vector<4x4xf32>
    %cst_133 = arith.constant 0.353553385 : f32
    %299 = vector.broadcast %cst_133 : f32 to vector<4x4xf32>
    %300 = arith.mulf %298, %299 : vector<4x4xf32>
    %cst_134 = arith.constant dense<0xFF800000> : vector<4xf32>
    %301 = vector.multi_reduction <maximumf>, %300, %cst_134 [1] : vector<4x4xf32> to vector<4xf32>
    %302 = vector.shape_cast %301 : vector<4xf32> to vector<4x1xf32>
    %303 = vector.broadcast %302 : vector<4x1xf32> to vector<4x4xf32>
    %304 = arith.subf %300, %303 : vector<4x4xf32>
    %305 = math.exp %304 : vector<4x4xf32>
    %cst_135 = arith.constant dense<0.000000e+00> : vector<4xf32>
    %306 = vector.multi_reduction <add>, %305, %cst_135 [1] : vector<4x4xf32> to vector<4xf32>
    %307 = vector.shape_cast %306 : vector<4xf32> to vector<4x1xf32>
    %308 = vector.broadcast %307 : vector<4x1xf32> to vector<4x4xf32>
    %309 = arith.divf %305, %308 : vector<4x4xf32>
    %cst_136 = arith.constant dense<0.000000e+00> : vector<4x8xf32>
    %310 = tpu.matmul %309, %297, %cst_136 {dimension_numbers = #tpu.dot_dimension_numbers<[1], [0], [0], [1], [0, 0, 1, 1], [], []>} : vector<4x4xf32>, vector<4x8xf32>, vector<4x8xf32> -> vector<4x8xf32>
    %c4_137 = arith.constant 4 : index
    %c16_138 = arith.constant 16 : index
    %311 = vector.load %arg12[%c4_137, %c16_138] : memref<8x32xf32, #tpu.memory_space<vmem>>, vector<4x8xf32>
    tpu.vector_store %arg12[%c4_137, %c16_138], %310 {strides = array<i32>} : memref<8x32xf32, #tpu.memory_space<vmem>>, vector<4x8xf32>,
    %312 = vector.extract_strided_slice %192 {offsets = [4, 24], sizes = [4, 8], strides = [1, 1]} : vector<8x96xf32> to vector<4x8xf32>
    %313 = vector.extract_strided_slice %192 {offsets = [4, 56], sizes = [4, 8], strides = [1, 1]} : vector<8x96xf32> to vector<4x8xf32>
    %314 = vector.extract_strided_slice %192 {offsets = [4, 88], sizes = [4, 8], strides = [1, 1]} : vector<8x96xf32> to vector<4x8xf32>
    %cst_139 = arith.constant dense<0.000000e+00> : vector<4x4xf32>
    %315 = tpu.matmul %312, %313, %cst_139 {dimension_numbers = #tpu.dot_dimension_numbers<[1], [1], [0], [0], [0, 0, 1, 0], [], []>} : vector<4x8xf32>, vector<4x8xf32>, vector<4x4xf32> -> vector<4x4xf32>
    %cst_140 = arith.constant 0.353553385 : f32
    %316 = vector.broadcast %cst_140 : f32 to vector<4x4xf32>
    %317 = arith.mulf %315, %316 : vector<4x4xf32>
    %cst_141 = arith.constant dense<0xFF800000> : vector<4xf32>
    %318 = vector.multi_reduction <maximumf>, %317, %cst_141 [1] : vector<4x4xf32> to vector<4xf32>
    %319 = vector.shape_cast %318 : vector<4xf32> to vector<4x1xf32>
    %320 = vector.broadcast %319 : vector<4x1xf32> to vector<4x4xf32>
    %321 = arith.subf %317, %320 : vector<4x4xf32>
    %322 = math.exp %321 : vector<4x4xf32>
    %cst_142 = arith.constant dense<0.000000e+00> : vector<4xf32>
    %323 = vector.multi_reduction <add>, %322, %cst_142 [1] : vector<4x4xf32> to vector<4xf32>
    %324 = vector.shape_cast %323 : vector<4xf32> to vector<4x1xf32>
    %325 = vector.broadcast %324 : vector<4x1xf32> to vector<4x4xf32>
    %326 = arith.divf %322, %325 : vector<4x4xf32>
    %cst_143 = arith.constant dense<0.000000e+00> : vector<4x8xf32>
    %327 = tpu.matmul %326, %314, %cst_143 {dimension_numbers = #tpu.dot_dimension_numbers<[1], [0], [0], [1], [0, 0, 1, 1], [], []>} : vector<4x4xf32>, vector<4x8xf32>, vector<4x8xf32> -> vector<4x8xf32>
    %c4_144 = arith.constant 4 : index
    %c24_145 = arith.constant 24 : index
    %328 = vector.load %arg12[%c4_144, %c24_145] : memref<8x32xf32, #tpu.memory_space<vmem>>, vector<4x8xf32>
    tpu.vector_store %arg12[%c4_144, %c24_145], %327 {strides = array<i32>} : memref<8x32xf32, #tpu.memory_space<vmem>>, vector<4x8xf32>,
    %c0_146 = arith.constant 0 : index
    %c0_147 = arith.constant 0 : index
    %329 = vector.load %arg12[%c0_146, %c0_147] : memref<8x32xf32, #tpu.memory_space<vmem>>, vector<8x32xf32>
    %c1_148 = arith.constant 1 : index
    %c0_149 = arith.constant 0 : index
    %c0_150 = arith.constant 0 : index
    %330 = vector.load %arg5[%c1_148, %c0_149, %c0_150] : memref<2x32x32xf32, #tpu.memory_space<vmem>>, vector<1x32x32xf32>
    %331 = vector.shape_cast %330 : vector<1x32x32xf32> to vector<32x32xf32>
    %cst_151 = arith.constant dense<0.000000e+00> : vector<8x32xf32>
    %332 = tpu.matmul %329, %331, %cst_151 {dimension_numbers = #tpu.dot_dimension_numbers<[1], [0], [0], [1], [0, 0, 1, 1], [], []>} : vector<8x32xf32>, vector<32x32xf32>, vector<8x32xf32> -> vector<8x32xf32>
    %c1_152 = arith.constant 1 : index
    %c0_153 = arith.constant 0 : index
    %c0_154 = arith.constant 0 : index
    %333 = vector.load %arg6[%c1_152, %c0_153, %c0_154] : memref<2x1x32xf32, #tpu.memory_space<vmem>>, vector<1x1x32xf32>
    %334 = vector.shape_cast %333 : vector<1x1x32xf32> to vector<1x32xf32>
    %335 = vector.broadcast %334 : vector<1x32xf32> to vector<8x32xf32>
    %336 = arith.addf %332, %335 : vector<8x32xf32>
    %337 = arith.addf %185, %336 : vector<8x32xf32>
    %cst_155 = arith.constant dense<0.000000e+00> : vector<8xf32>
    %338 = vector.multi_reduction <add>, %337, %cst_155 [1] : vector<8x32xf32> to vector<8xf32>
    %339 = vector.shape_cast %338 : vector<8xf32> to vector<8x1xf32>
    %cst_156 = arith.constant 3.200000e+01 : f32
    %340 = vector.broadcast %cst_156 : f32 to vector<8x1xf32>
    %341 = arith.divf %339, %340 : vector<8x1xf32>
    %342 = vector.broadcast %341 : vector<8x1xf32> to vector<8x32xf32>
    %343 = arith.subf %337, %342 : vector<8x32xf32>
    %344 = vector.broadcast %341 : vector<8x1xf32> to vector<8x32xf32>
    %345 = arith.subf %337, %344 : vector<8x32xf32>
    %346 = arith.mulf %343, %345 : vector<8x32xf32>
    %cst_157 = arith.constant dense<0.000000e+00> : vector<8xf32>
    %347 = vector.multi_reduction <add>, %346, %cst_157 [1] : vector<8x32xf32> to vector<8xf32>
    %348 = vector.shape_cast %347 : vector<8xf32> to vector<8x1xf32>
    %cst_158 = arith.constant 3.200000e+01 : f32
    %349 = vector.broadcast %cst_158 : f32 to vector<8x1xf32>
    %350 = arith.divf %348, %349 : vector<8x1xf32>
    %351 = vector.broadcast %341 : vector<8x1xf32> to vector<8x32xf32>
    %352 = arith.subf %337, %351 : vector<8x32xf32>
    %cst_159 = arith.constant 9.99999974E-6 : f32
    %353 = vector.broadcast %cst_159 : f32 to vector<8x1xf32>
    %354 = arith.addf %350, %353 : vector<8x1xf32>
    %355 = math.rsqrt %354 : vector<8x1xf32>
    %356 = vector.broadcast %355 : vector<8x1xf32> to vector<8x32xf32>
    %357 = arith.mulf %352, %356 : vector<8x32xf32>
    %c1_160 = arith.constant 1 : index
    %c0_161 = arith.constant 0 : index
    %c0_162 = arith.constant 0 : index
    %358 = vector.load %arg7[%c1_160, %c0_161, %c0_162] : memref<2x1x32xf32, #tpu.memory_space<vmem>>, vector<1x1x32xf32>
    %359 = vector.shape_cast %358 : vector<1x1x32xf32> to vector<1x32xf32>
    %360 = vector.broadcast %359 : vector<1x32xf32> to vector<8x32xf32>
    %361 = arith.mulf %357, %360 : vector<8x32xf32>
    %c1_163 = arith.constant 1 : index
    %c0_164 = arith.constant 0 : index
    %c0_165 = arith.constant 0 : index
    %362 = vector.load %arg8[%c1_163, %c0_164, %c0_165] : memref<2x1x32xf32, #tpu.memory_space<vmem>>, vector<1x1x32xf32>
    %363 = vector.shape_cast %362 : vector<1x1x32xf32> to vector<1x32xf32>
    %364 = vector.broadcast %363 : vector<1x32xf32> to vector<8x32xf32>
    %365 = arith.addf %361, %364 : vector<8x32xf32>
    %c0_166 = arith.constant 0 : index
    %c0_167 = arith.constant 0 : index
    %366 = vector.load %arg9[%c0_166, %c0_167] : memref<32x256xf32, #tpu.memory_space<vmem>>, vector<32x256xf32>
    %cst_168 = arith.constant dense<0.000000e+00> : vector<8x256xf32>
    %367 = tpu.matmul %365, %366, %cst_168 {dimension_numbers = #tpu.dot_dimension_numbers<[1], [0], [0], [1], [0, 0, 1, 1], [], []>} : vector<8x32xf32>, vector<32x256xf32>, vector<8x256xf32> -> vector<8x256xf32>
    %c0_169 = arith.constant 0 : index
    %c0_170 = arith.constant 0 : index
    %368 = vector.load %arg10[%c0_169, %c0_170] : memref<1x256xf32, #tpu.memory_space<vmem>>, vector<1x256xf32>
    %369 = vector.broadcast %368 : vector<1x256xf32> to vector<8x256xf32>
    %370 = arith.addf %367, %369 : vector<8x256xf32>
    %cst_171 = arith.constant 5.000000e-01 : f32
    %371 = vector.broadcast %cst_171 : f32 to vector<8x256xf32>
    %372 = arith.mulf %371, %370 : vector<8x256xf32>
    %cst_172 = arith.constant 0.707106769 : f32
    %373 = vector.broadcast %cst_172 : f32 to vector<8x256xf32>
    %374 = arith.mulf %370, %373 : vector<8x256xf32>
    %cst_173 = arith.constant 0.000000e+00 : f32
    %375 = vector.broadcast %cst_173 : f32 to vector<8x256xf32>
    %376 = arith.cmpf oge, %374, %375 : vector<8x256xf32>
    %cst_174 = arith.constant 1.000000e+00 : f32
    %cst_175 = arith.constant -1.000000e+00 : f32
    %377 = vector.broadcast %cst_174 : f32 to vector<8x256xf32>
    %378 = vector.broadcast %cst_175 : f32 to vector<8x256xf32>
    %379 = arith.select %376, %377, %378 : vector<8x256xi1>, vector<8x256xf32>
    %380 = math.absf %374 : vector<8x256xf32>
    %cst_176 = arith.constant 0.327591091 : f32
    %381 = vector.broadcast %cst_176 : f32 to vector<8x256xf32>
    %382 = arith.mulf %381, %380 : vector<8x256xf32>
    %cst_177 = arith.constant 1.000000e+00 : f32
    %383 = vector.broadcast %cst_177 : f32 to vector<8x256xf32>
    %384 = arith.addf %383, %382 : vector<8x256xf32>
    %cst_178 = arith.constant 1.000000e+00 : f32
    %385 = vector.broadcast %cst_178 : f32 to vector<8x256xf32>
    %386 = arith.divf %385, %384 : vector<8x256xf32>
    %cst_179 = arith.constant 1.06140542 : f32
    %387 = vector.broadcast %cst_179 : f32 to vector<8x256xf32>
    %388 = arith.mulf %387, %386 : vector<8x256xf32>
    %cst_180 = arith.constant -1.45315206 : f32
    %389 = vector.broadcast %cst_180 : f32 to vector<8x256xf32>
    %390 = arith.addf %388, %389 : vector<8x256xf32>
    %391 = arith.mulf %390, %386 : vector<8x256xf32>
    %cst_181 = arith.constant 1.42141378 : f32
    %392 = vector.broadcast %cst_181 : f32 to vector<8x256xf32>
    %393 = arith.addf %391, %392 : vector<8x256xf32>
    %394 = arith.mulf %393, %386 : vector<8x256xf32>
    %cst_182 = arith.constant -0.284496725 : f32
    %395 = vector.broadcast %cst_182 : f32 to vector<8x256xf32>
    %396 = arith.addf %394, %395 : vector<8x256xf32>
    %397 = arith.mulf %396, %386 : vector<8x256xf32>
    %cst_183 = arith.constant 0.254829586 : f32
    %398 = vector.broadcast %cst_183 : f32 to vector<8x256xf32>
    %399 = arith.addf %397, %398 : vector<8x256xf32>
    %400 = arith.mulf %399, %386 : vector<8x256xf32>
    %cst_184 = arith.constant 0.000000e+00 : f32
    %401 = vector.broadcast %cst_184 : f32 to vector<8x256xf32>
    %402 = arith.subf %401, %380 : vector<8x256xf32>
    %403 = arith.mulf %402, %380 : vector<8x256xf32>
    %404 = math.exp %403 : vector<8x256xf32>
    %405 = arith.mulf %400, %404 : vector<8x256xf32>
    %cst_185 = arith.constant 1.000000e+00 : f32
    %406 = vector.broadcast %cst_185 : f32 to vector<8x256xf32>
    %407 = arith.subf %406, %405 : vector<8x256xf32>
    %408 = arith.mulf %379, %407 : vector<8x256xf32>
    %cst_186 = arith.constant 1.000000e+00 : f32
    %409 = vector.broadcast %cst_186 : f32 to vector<8x256xf32>
    %410 = arith.addf %409, %408 : vector<8x256xf32>
    %411 = arith.mulf %372, %410 : vector<8x256xf32>
    %412 = arith.addf %411, %0 : vector<8x256xf32>
    %c0_187 = arith.constant 0 : index
    %c0_188 = arith.constant 0 : index
    %413 = vector.load %arg11[%c0_187, %c0_188] : memref<8x256xf32, #tpu.memory_space<vmem>>, vector<8x256xf32>
    tpu.vector_store %arg11[%c0_187, %c0_188], %412 {strides = array<i32>} : memref<8x256xf32, #tpu.memory_space<vmem>>, vector<8x256xf32>,
    return
  }
}

</mosaic_0001>

<llo_original>
// kernel: tpu_custom_call.1
$region0: #{tpu_custom_call.1}
  #allocation0 [shape = 'u32[]', space=smem, size = 0x4, offset = 0x4, fixed_abs, tag = 'smem constant byte address 0x4 - core index']
  #allocation1 [shape = 'u32[144,128]{1,0:T(1,128)}', space=vmem, size = 0x12000, scoped, tag = 'internal scratch']
  #allocation2 [shape = 'f32[8,32]{1,0:T(8,128)}', space=vmem, size = 0x1000, scoped, tag = 'scratch operand']
  %s0 = inlined_call_operand.vmem [shape: f32[8,256], index: 0, kind: input, shape index: {}]
  %s1 = inlined_call_operand.vmem [shape: f32[256,32], index: 1, kind: input, shape index: {}]
  %s2 = inlined_call_operand.vmem [shape: f32[1,32], index: 2, kind: input, shape index: {}]
  %s3 = inlined_call_operand.vmem [shape: f32[2,32,96], index: 3, kind: input, shape index: {}]
  %s4 = inlined_call_operand.vmem [shape: f32[2,1,96], index: 4, kind: input, shape index: {}]
  %s5 = inlined_call_operand.vmem [shape: f32[2,32,32], index: 5, kind: input, shape index: {}]
  %s6 = inlined_call_operand.vmem [shape: f32[2,1,32], index: 6, kind: input, shape index: {}]
  %s7 = inlined_call_operand.vmem [shape: f32[2,1,32], index: 7, kind: input, shape index: {}]
  %s8 = inlined_call_operand.vmem [shape: f32[2,1,32], index: 8, kind: input, shape index: {}]
  %s9 = inlined_call_operand.vmem [shape: f32[32,256], index: 9, kind: input, shape index: {}]
  %s10 = inlined_call_operand.vmem [shape: f32[1,256], index: 10, kind: input, shape index: {}]
  %s11 = inlined_call_operand.hbm [shape: f32[8,256], index: 11, kind: output, shape index: {}]
  %s12 = sld [smem:[#allocation0]]
  $region54: #{tpu_custom_call.1} parent=0
    _
  %s14 = ssub.s32 1, %s12
  %s15 = scalar_select 0, %s14, %s12
  $region1: #{tpu_custom_call.1} parent=0
    #allocation3 [shape = 'u8[8192]{0}', space=vmem, size = 0x2000, scoped, tag = 'output window, operand 0, single buffered']
    #allocation4 [shape = 's32[1]{0}', space=sflag, size = 0x4, scoped, tag = 'scoped memory for tpu_custom_call.1']
    %16 = vsyncpa [#allocation4], 0
    // Predicated region
    $region2: #{tpu_custom_call.1} parent=1 // pred_check
      _
    $region3: #{tpu_custom_call.1} parent=1 // pred_check_branch
      %18 = sbr.rel (0) target = $region5
    $region4: #{tpu_custom_call.1} parent=1 // pred_region
      _
    $region5: #{tpu_custom_call.1} parent=1 // pred_fallthru
      _
    // Predicated region
    $region6: #{tpu_custom_call.1} parent=1 // pred_check
      _
    $region7: #{tpu_custom_call.1} parent=1 // pred_check_branch
      %20 = sbr.rel (0) target = $region9
    $region8: #{tpu_custom_call.1} parent=1 // pred_region
      _
    $region9: #{tpu_custom_call.1} parent=1 // pred_fallthru
      _
    // Predicated region
    $region10: #{tpu_custom_call.1} parent=1 // pred_check
      _
    $region11: #{tpu_custom_call.1} parent=1 // pred_check_branch
      %22 = sbr.rel (0) target = $region13
    $region12: #{tpu_custom_call.1} parent=1 // pred_region
      _
    $region13: #{tpu_custom_call.1} parent=1 // pred_fallthru
      _
    // Predicated region
    $region14: #{tpu_custom_call.1} parent=1 // pred_check
      _
    $region15: #{tpu_custom_call.1} parent=1 // pred_check_branch
      %24 = sbr.rel (0) target = $region17
    $region16: #{tpu_custom_call.1} parent=1 // pred_region
      _
    $region17: #{tpu_custom_call.1} parent=1 // pred_fallthru
      _
    // Predicated region
    $region18: #{tpu_custom_call.1} parent=1 // pred_check
      _
    $region19: #{tpu_custom_call.1} parent=1 // pred_check_branch
      %26 = sbr.rel (0) target = $region21
    $region20: #{tpu_custom_call.1} parent=1 // pred_region
      _
    $region21: #{tpu_custom_call.1} parent=1 // pred_fallthru
      _
    // Predicated region
    $region22: #{tpu_custom_call.1} parent=1 // pred_check
      _
    $region23: #{tpu_custom_call.1} parent=1 // pred_check_branch
      %28 = sbr.rel (0) target = $region25
    $region24: #{tpu_custom_call.1} parent=1 // pred_region
      _
    $region25: #{tpu_custom_call.1} parent=1 // pred_fallthru
      _
    // Predicated region
    $region26: #{tpu_custom_call.1} parent=1 // pred_check
      _
    $region27: #{tpu_custom_call.1} parent=1 // pred_check_branch
      %30 = sbr.rel (0) target = $region29
    $region28: #{tpu_custom_call.1} parent=1 // pred_region
      _
    $region29: #{tpu_custom_call.1} parent=1 // pred_fallthru
      _
    // Predicated region
    $region30: #{tpu_custom_call.1} parent=1 // pred_check
      _
    $region31: #{tpu_custom_call.1} parent=1 // pred_check_branch
      %32 = sbr.rel (0) target = $region33
    $region32: #{tpu_custom_call.1} parent=1 // pred_region
      _
    $region33: #{tpu_custom_call.1} parent=1 // pred_fallthru
      _
    // Predicated region
    $region34: #{tpu_custom_call.1} parent=1 // pred_check
      _
    $region35: #{tpu_custom_call.1} parent=1 // pred_check_branch
      %34 = sbr.rel (0) target = $region37
    $region36: #{tpu_custom_call.1} parent=1 // pred_region
      _
    $region37: #{tpu_custom_call.1} parent=1 // pred_fallthru
      _
    // Predicated region
    $region38: #{tpu_custom_call.1} parent=1 // pred_check
      _
    $region39: #{tpu_custom_call.1} parent=1 // pred_check_branch
      %36 = sbr.rel (0) target = $region41
    $region40: #{tpu_custom_call.1} parent=1 // pred_region
      _
    $region41: #{tpu_custom_call.1} parent=1 // pred_fallthru
      _
    // Predicated region
    $region42: #{tpu_custom_call.1} parent=1 // pred_check
      _
    $region43: #{tpu_custom_call.1} parent=1 // pred_check_branch
      %38 = sbr.rel (0) target = $region45
    $region44: #{tpu_custom_call.1} parent=1 // pred_region
      _
    $region45: #{tpu_custom_call.1} parent=1 // pred_fallthru
      _
    %v39 = vld [vmem:[%s0] sm:$0xff]
    %v40 = vld [vmem:[%s0 + $0x8] sm:$0xff]
    %v41 = vld [vmem:[%s1] sm:$0xff]
    %v42 = vld [vmem:[%s1 + $0x8] sm:$0xff]
    %v43 = vld [vmem:[%s1 + $0x10] sm:$0xff]
    %v44 = vld [vmem:[%s1 + $0x18] sm:$0xff]
    %v45 = vld [vmem:[%s1 + $0x20] sm:$0xff]
    %v46 = vld [vmem:[%s1 + $0x28] sm:$0xff]
    %v47 = vld [vmem:[%s1 + $0x30] sm:$0xff]
    %v48 = vld [vmem:[%s1 + $0x38] sm:$0xff]
    %v49 = vld [vmem:[%s1 + $0x40] sm:$0xff]
    %v50 = vld [vmem:[%s1 + $0x48] sm:$0xff]
    %v51 = vld [vmem:[%s1 + $0x50] sm:$0xff]
    %v52 = vld [vmem:[%s1 + $0x58] sm:$0xff]
    %v53 = vld [vmem:[%s1 + $0x60] sm:$0xff]
    %v54 = vld [vmem:[%s1 + $0x68] sm:$0xff]
    %v55 = vld [vmem:[%s1 + $0x70] sm:$0xff]
    %v56 = vld [vmem:[%s1 + $0x78] sm:$0xff]
    %v57 = vld [vmem:[%s1 + $0x80] sm:$0xff]
    %v58 = vld [vmem:[%s1 + $0x88] sm:$0xff]
    %v59 = vld [vmem:[%s1 + $0x90] sm:$0xff]
    %v60 = vld [vmem:[%s1 + $0x98] sm:$0xff]
    %v61 = vld [vmem:[%s1 + $0xa0] sm:$0xff]
    %v62 = vld [vmem:[%s1 + $0xa8] sm:$0xff]
    %v63 = vld [vmem:[%s1 + $0xb0] sm:$0xff]
    %v64 = vld [vmem:[%s1 + $0xb8] sm:$0xff]
    %v65 = vld [vmem:[%s1 + $0xc0] sm:$0xff]
    %v66 = vld [vmem:[%s1 + $0xc8] sm:$0xff]
    %v67 = vld [vmem:[%s1 + $0xd0] sm:$0xff]
    %v68 = vld [vmem:[%s1 + $0xd8] sm:$0xff]
    %v69 = vld [vmem:[%s1 + $0xe0] sm:$0xff]
    %v70 = vld [vmem:[%s1 + $0xe8] sm:$0xff]
    %v71 = vld [vmem:[%s1 + $0xf0] sm:$0xff]
    %v72 = vld [vmem:[%s1 + $0xf8] sm:$0xff]
    %v73 = vld [vmem:[%s2] sm:$0x1]
    %v75 = vlaneseq
    %v76 = vshrl.u32 %v75, 7
    %v77 = vsub.s32 0, %v76
    %v78 = vrot.slane %v73, %v77
    %80 = vmatprep.subr.mxu0 0.0
    %81 = vmatpush1.msra.mxu0 %v41
    %82 = vmatprep.subr.mxu0 0.0
    %83 = vmatpush1.msra.mxu0 %v42
    %84 = vmatprep.subr.mxu0 0.0
    %85 = vmatpush1.msra.mxu0 %v43
    %86 = vmatprep.subr.mxu0 0.0
    %87 = vmatpush1.msra.mxu0 %v44
    %88 = vmatprep.subr.mxu0 0.0
    %89 = vmatpush1.msra.mxu0 %v45
    %90 = vmatprep.subr.mxu0 0.0
    %91 = vmatpush1.msra.mxu0 %v46
    %92 = vmatprep.subr.mxu0 0.0
    %93 = vmatpush1.msra.mxu0 %v47
    %94 = vmatprep.subr.mxu0 0.0
    %95 = vmatpush1.msra.mxu0 %v48
    %96 = vmatprep.subr.mxu0 0.0
    %97 = vmatpush1.msra.mxu0 %v49
    %98 = vmatprep.subr.mxu0 0.0
    %99 = vmatpush1.msra.mxu0 %v50
    %100 = vmatprep.subr.mxu0 0.0
    %101 = vmatpush1.msra.mxu0 %v51
    %102 = vmatprep.subr.mxu0 0.0
    %103 = vmatpush1.msra.mxu0 %v52
    %104 = vmatprep.subr.mxu0 0.0
    %105 = vmatpush1.msra.mxu0 %v53
    %106 = vmatprep.subr.mxu0 0.0
    %107 = vmatpush1.msra.mxu0 %v54
    %108 = vmatprep.subr.mxu0 0.0
    %109 = vmatpush1.msra.mxu0 %v55
    %110 = vmatprep.subr.mxu0 0.0
    %111 = vmatpush1.msra.mxu0 %v56
    %112 = vmatprep.subr.mxu0 0.0
    %113 = vmatpush1.msra.mxu0 %v57
    %114 = vmatprep.subr.mxu0 0.0
    %115 = vmatpush1.msra.mxu0 %v58
    %116 = vmatprep.subr.mxu0 0.0
    %117 = vmatpush1.msra.mxu0 %v59
    %118 = vmatprep.subr.mxu0 0.0
    %119 = vmatpush1.msra.mxu0 %v60
    %120 = vmatprep.subr.mxu0 0.0
    %121 = vmatpush1.msra.mxu0 %v61
    %122 = vmatprep.subr.mxu0 0.0
    %123 = vmatpush1.msra.mxu0 %v62
    %124 = vmatprep.subr.mxu0 0.0
    %125 = vmatpush1.msra.mxu0 %v63
    %126 = vmatprep.subr.mxu0 0.0
    %127 = vmatpush1.msra.mxu0 %v64
    %128 = vmatprep.subr.mxu0 0.0
    %129 = vmatpush1.msra.mxu0 %v65
    %130 = vmatprep.subr.mxu0 0.0
    %131 = vmatpush1.msra.mxu0 %v66
    %132 = vmatprep.subr.mxu0 0.0
    %133 = vmatpush1.msra.mxu0 %v67
    %134 = vmatprep.subr.mxu0 0.0
    %135 = vmatpush1.msra.mxu0 %v68
    %136 = vmatprep.subr.mxu0 0.0
    %137 = vmatpush1.msra.mxu0 %v69
    %138 = vmatprep.subr.mxu0 0.0
    %139 = vmatpush1.msra.mxu0 %v70
    %140 = vmatprep.subr.mxu0 0.0
    %141 = vmatpush1.msra.mxu0 %v71
    %142 = vmatprep.subr.mxu0 0.0
    %143 = vmatpush1.msra.mxu0 %v72
    %144 = vmatprep.mubr.f32.mxu0 %v40
    %145 = vmatmul.mubr.f32.gmra.mrb[0].mxu0 %v39
    %v146 = vpop.f32.mrb[0].mxu0
    %v147 = vadd.f32 %v78, %v146
    %v148 = vpop.f32.mrb[0].mxu0
    %149 = vdwg.mxu0
    %v150 = vld [vmem:[%s3] sm:$0xff]
    %v151 = vld [vmem:[%s3 + $0x8] sm:$0xff]
    %v152 = vld [vmem:[%s3 + $0x10] sm:$0xff]
    %v153 = vld [vmem:[%s3 + $0x18] sm:$0xff]
    %v154 = vld [vmem:[%s4] sm:$0x1]
    %v156 = vlaneseq
    %v157 = vshrl.u32 %v156, 7
    %v158 = vsub.s32 0, %v157
    %v159 = vrot.slane %v154, %v158
    %vm161 = vcmask 261120
    %v163 = vsel %vm161, %v147, 0
    %165 = vmatprep.subr.mxu0 0.0
    %166 = vmatpush1.msra.mxu0 %v150
    %167 = vmatprep.subr.mxu0 0.0
    %168 = vmatpush1.msra.mxu0 %v151
    %169 = vmatprep.subr.mxu0 0.0
    %170 = vmatpush1.msra.mxu0 %v152
    %171 = vmatprep.subr.mxu0 0.0
    %172 = vmatpush1.msra.mxu0 %v153
    %173 = vmatprep.subr.mxu0 0.0
    %174 = vmatpush1.msra.mxu0 0.0
    %175 = vmatprep.subr.mxu0 0.0
    %176 = vmatpush1.msra.mxu0 0.0
    %177 = vmatprep.subr.mxu0 0.0
    %178 = vmatpush1.msra.mxu0 0.0
    %179 = vmatprep.subr.mxu0 0.0
    %180 = vmatpush1.msra.mxu0 0.0
    %181 = vmatprep.subr.mxu0 0.0
    %182 = vmatpush1.msra.mxu0 0.0
    %183 = vmatprep.subr.mxu0 0.0
    %184 = vmatpush1.msra.mxu0 0.0
    %185 = vmatprep.subr.mxu0 0.0
    %186 = vmatpush1.msra.mxu0 0.0
    %187 = vmatprep.subr.mxu0 0.0
    %188 = vmatpush1.msra.mxu0 0.0
    %189 = vmatprep.subr.mxu0 0.0
    %190 = vmatpush1.msra.mxu0 0.0
    %191 = vmatprep.subr.mxu0 0.0
    %192 = vmatpush1.msra.mxu0 0.0
    %193 = vmatprep.subr.mxu0 0.0
    %194 = vmatpush1.msra.mxu0 0.0
    %195 = vmatprep.subr.mxu0 0.0
    %196 = vmatpush1.msra.mxu0 0.0
    %197 = vmatprep.subr.mxu0 0.0
    %198 = vmatpush1.msra.mxu0 0.0
    %199 = vmatprep.subr.mxu0 0.0
    %200 = vmatpush1.msra.mxu0 0.0
    %201 = vmatprep.subr.mxu0 0.0
    %202 = vmatpush1.msra.mxu0 0.0
    %203 = vmatprep.subr.mxu0 0.0
    %204 = vmatpush1.msra.mxu0 0.0
    %205 = vmatprep.subr.mxu0 0.0
    %206 = vmatpush1.msra.mxu0 0.0
    %207 = vmatprep.subr.mxu0 0.0
    %208 = vmatpush1.msra.mxu0 0.0
    %209 = vmatprep.subr.mxu0 0.0
    %210 = vmatpush1.msra.mxu0 0.0
    %211 = vmatprep.subr.mxu0 0.0
    %212 = vmatpush1.msra.mxu0 0.0
    %213 = vmatprep.subr.mxu0 0.0
    %214 = vmatpush1.msra.mxu0 0.0
    %215 = vmatprep.subr.mxu0 0.0
    %216 = vmatpush1.msra.mxu0 0.0
    %217 = vmatprep.subr.mxu0 0.0
    %218 = vmatpush1.msra.mxu0 0.0
    %219 = vmatprep.subr.mxu0 0.0
    %220 = vmatpush1.msra.mxu0 0.0
    %221 = vmatprep.subr.mxu0 0.0
    %222 = vmatpush1.msra.mxu0 0.0
    %223 = vmatprep.subr.mxu0 0.0
    %224 = vmatpush1.msra.mxu0 0.0
    %225 = vmatprep.subr.mxu0 0.0
    %226 = vmatpush1.msra.mxu0 0.0
    %227 = vmatprep.subr.mxu0 0.0
    %228 = vmatpush1.msra.mxu0 0.0
    %229 = vmatprep.mubr.f32.mxu0 0.0
    %230 = vmatmul.mubr.f32.gmra.mrb[0].mxu0 %v163
    %v231 = vpop.f32.mrb[0].mxu0
    %v232 = vadd.f32 %v159, %v231
    %v233 = vpop.f32.mrb[0].mxu0
    %234 = vdwg.mxu0
    %236 = vrot.lane.b32.xlu0 %v232, 96
    %v237 = vpop.permute.xlu0 %236
    %vm238 = vcmask 64512
    %v239 = vsel %vm238, %v232, 0
    %v241 = vsel %vm238, %v237, 0
    %243 = vmatprep.subr.mxu0 0.0
    %244 = vmatpush1.xpose.msra.mxu0 %v241
    %245 = vmatprep.subr.mxu0 0.0
    %246 = vmatpush1.xpose.msra.mxu0 0.0
    %247 = vmatprep.subr.mxu0 0.0
    %248 = vmatpush1.xpose.msra.mxu0 0.0
    %249 = vmatprep.subr.mxu0 0.0
    %250 = vmatpush1.xpose.msra.mxu0 0.0
    %251 = vmatprep.subr.mxu0 0.0
    %252 = vmatpush1.xpose.msra.mxu0 0.0
    %253 = vmatprep.subr.mxu0 0.0
    %254 = vmatpush1.xpose.msra.mxu0 0.0
    %255 = vmatprep.subr.mxu0 0.0
    %256 = vmatpush1.xpose.msra.mxu0 0.0
    %257 = vmatprep.subr.mxu0 0.0
    %258 = vmatpush1.xpose.msra.mxu0 0.0
    %259 = vmatprep.subr.mxu0 0.0
    %260 = vmatpush1.xpose.msra.mxu0 0.0
    %261 = vmatprep.subr.mxu0 0.0
    %262 = vmatpush1.xpose.msra.mxu0 0.0
    %263 = vmatprep.subr.mxu0 0.0
    %264 = vmatpush1.xpose.msra.mxu0 0.0
    %265 = vmatprep.subr.mxu0 0.0
    %266 = vmatpush1.xpose.msra.mxu0 0.0
    %267 = vmatprep.subr.mxu0 0.0
    %268 = vmatpush1.xpose.msra.mxu0 0.0
    %269 = vmatprep.subr.mxu0 0.0
    %270 = vmatpush1.xpose.msra.mxu0 0.0
    %271 = vmatprep.subr.mxu0 0.0
    %272 = vmatpush1.xpose.msra.mxu0 0.0
    %273 = vmatprep.subr.mxu0 0.0
    %274 = vmatpush1.xpose.msra.mxu0 0.0
    %275 = vmatprep.subr.mxu0 0.0
    %276 = vmatpush1.xpose.msra.mxu0 0.0
    %277 = vmatprep.subr.mxu0 0.0
    %278 = vmatpush1.xpose.msra.mxu0 0.0
    %279 = vmatprep.subr.mxu0 0.0
    %280 = vmatpush1.xpose.msra.mxu0 0.0
    %281 = vmatprep.subr.mxu0 0.0
    %282 = vmatpush1.xpose.msra.mxu0 0.0
    %283 = vmatprep.subr.mxu0 0.0
    %284 = vmatpush1.xpose.msra.mxu0 0.0
    %285 = vmatprep.subr.mxu0 0.0
    %286 = vmatpush1.xpose.msra.mxu0 0.0
    %287 = vmatprep.subr.mxu0 0.0
    %288 = vmatpush1.xpose.msra.mxu0 0.0
    %289 = vmatprep.subr.mxu0 0.0
    %290 = vmatpush1.xpose.msra.mxu0 0.0
    %291 = vmatprep.subr.mxu0 0.0
    %292 = vmatpush1.xpose.msra.mxu0 0.0
    %293 = vmatprep.subr.mxu0 0.0
    %294 = vmatpush1.xpose.msra.mxu0 0.0
    %295 = vmatprep.subr.mxu0 0.0
    %296 = vmatpush1.xpose.msra.mxu0 0.0
    %297 = vmatprep.subr.mxu0 0.0
    %298 = vmatpush1.xpose.msra.mxu0 0.0
    %299 = vmatprep.subr.mxu0 0.0
    %300 = vmatpush1.xpose.msra.mxu0 0.0
    %301 = vmatprep.subr.mxu0 0.0
    %302 = vmatpush1.xpose.msra.mxu0 0.0
    %303 = vmatprep.subr.mxu0 0.0
    %304 = vmatpush1.xpose.msra.mxu0 0.0
    %305 = vmatprep.subr.mxu0 0.0
    %306 = vmatpush1.xpose.msra.mxu0 0.0
    %307 = vmatprep.mubr.f32.mxu0 0.0
    %308 = vmatmul.mubr.f32.gmra.mrb[0].mxu0 %v239
    %v309 = vpop.f32.mrb[0].mxu0
    %v310 = vadd.f32 0.0, %v309
    %v311 = vpop.f32.mrb[0].mxu0
    %312 = vdwg.mxu0
    %v313 = vmul.f32 %v310, 0.35355338
    %vm314 = vcmask 27648
    %v315 = vsel %vm314, %v313, -inf
    %316 = vmax.xlane.f32.xlu0 %v315
    %v317 = vpop.xlane.xlu0 %316
    %v318 = vsub.f32 %v313, %v317
    %v319 = vmul.f32 %v318, 1.442695
    %v320 = vpow.pop %v319
    %v321 = vsel %vm314, %v320, 0.0
    %322 = vadd.xlane.f32.xlu0 %v321
    %v323 = vpop.xlane.xlu0 %322
    %v324 = vrcp.pop %v323
    %v325 = vmul.f32 %v320, %v324
    %326 = vrot.lane.b32.xlu0 %v232, 64
    %v327 = vpop.permute.xlu0 %326
    %vm328 = vcmask 31744
    %v330 = vsel %vm328, %v325, 0
    %vm332 = vcmask 1043456
    %v333 = vsel %vm332, %v327, 0
    %335 = vmatprep.subr.mxu0 0.0
    %336 = vmatpush1.msra.mxu0 %v333
    %337 = vmatprep.subr.mxu0 0.0
    %338 = vmatpush1.msra.mxu0 0.0
    %339 = vmatprep.subr.mxu0 0.0
    %340 = vmatpush1.msra.mxu0 0.0
    %341 = vmatprep.subr.mxu0 0.0
    %342 = vmatpush1.msra.mxu0 0.0
    %343 = vmatprep.subr.mxu0 0.0
    %344 = vmatpush1.msra.mxu0 0.0
    %345 = vmatprep.subr.mxu0 0.0
    %346 = vmatpush1.msra.mxu0 0.0
    %347 = vmatprep.subr.mxu0 0.0
    %348 = vmatpush1.msra.mxu0 0.0
    %349 = vmatprep.subr.mxu0 0.0
    %350 = vmatpush1.msra.mxu0 0.0
    %351 = vmatprep.subr.mxu0 0.0
    %352 = vmatpush1.msra.mxu0 0.0
    %353 = vmatprep.subr.mxu0 0.0
    %354 = vmatpush1.msra.mxu0 0.0
    %355 = vmatprep.subr.mxu0 0.0
    %356 = vmatpush1.msra.mxu0 0.0
    %357 = vmatprep.subr.mxu0 0.0
    %358 = vmatpush1.msra.mxu0 0.0
    %359 = vmatprep.subr.mxu0 0.0
    %360 = vmatpush1.msra.mxu0 0.0
    %361 = vmatprep.subr.mxu0 0.0
    %362 = vmatpush1.msra.mxu0 0.0
    %363 = vmatprep.subr.mxu0 0.0
    %364 = vmatpush1.msra.mxu0 0.0
    %365 = vmatprep.subr.mxu0 0.0
    %366 = vmatpush1.msra.mxu0 0.0
    %367 = vmatprep.subr.mxu0 0.0
    %368 = vmatpush1.msra.mxu0 0.0
    %369 = vmatprep.subr.mxu0 0.0
    %370 = vmatpush1.msra.mxu0 0.0
    %371 = vmatprep.subr.mxu0 0.0
    %372 = vmatpush1.msra.mxu0 0.0
    %373 = vmatprep.subr.mxu0 0.0
    %374 = vmatpush1.msra.mxu0 0.0
    %375 = vmatprep.subr.mxu0 0.0
    %376 = vmatpush1.msra.mxu0 0.0
    %377 = vmatprep.subr.mxu0 0.0
    %378 = vmatpush1.msra.mxu0 0.0
    %379 = vmatprep.subr.mxu0 0.0
    %380 = vmatpush1.msra.mxu0 0.0
    %381 = vmatprep.subr.mxu0 0.0
    %382 = vmatpush1.msra.mxu0 0.0
    %383 = vmatprep.subr.mxu0 0.0
    %384 = vmatpush1.msra.mxu0 0.0
    %385 = vmatprep.subr.mxu0 0.0
    %386 = vmatpush1.msra.mxu0 0.0
    %387 = vmatprep.subr.mxu0 0.0
    %388 = vmatpush1.msra.mxu0 0.0
    %389 = vmatprep.subr.mxu0 0.0
    %390 = vmatpush1.msra.mxu0 0.0
    %391 = vmatprep.subr.mxu0 0.0
    %392 = vmatpush1.msra.mxu0 0.0
    %393 = vmatprep.subr.mxu0 0.0
    %394 = vmatpush1.msra.mxu0 0.0
    %395 = vmatprep.subr.mxu0 0.0
    %396 = vmatpush1.msra.mxu0 0.0
    %397 = vmatprep.subr.mxu0 0.0
    %398 = vmatpush1.msra.mxu0 0.0
    %399 = vmatprep.mubr.f32.mxu0 0.0
    %400 = vmatmul.mubr.f32.gmra.mrb[0].mxu0 %v330
    %v401 = vpop.f32.mrb[0].mxu0
    %v402 = vadd.f32 0.0, %v401
    %v403 = vpop.f32.mrb[0].mxu0
    %404 = vdwg.mxu0
    %vm405 = vcmask 60416
    %406 = vst.msk [vmem:[#allocation2] sm:$0xf] %vm405, %v402
    %407 = vrot.lane.b32.xlu0 %v232, 120
    %v408 = vpop.permute.xlu0 %407
    %409 = vrot.lane.b32.xlu0 %v232, 88
    %v410 = vpop.permute.xlu0 %409
    %v411 = vsel %vm238, %v408, 0
    %v413 = vsel %vm238, %v410, 0
    %415 = vmatprep.subr.mxu0 0.0
    %416 = vmatpush1.xpose.msra.mxu0 %v413
    %417 = vmatprep.subr.mxu0 0.0
    %418 = vmatpush1.xpose.msra.mxu0 0.0
    %419 = vmatprep.subr.mxu0 0.0
    %420 = vmatpush1.xpose.msra.mxu0 0.0
    %421 = vmatprep.subr.mxu0 0.0
    %422 = vmatpush1.xpose.msra.mxu0 0.0
    %423 = vmatprep.subr.mxu0 0.0
    %424 = vmatpush1.xpose.msra.mxu0 0.0
    %425 = vmatprep.subr.mxu0 0.0
    %426 = vmatpush1.xpose.msra.mxu0 0.0
    %427 = vmatprep.subr.mxu0 0.0
    %428 = vmatpush1.xpose.msra.mxu0 0.0
    %429 = vmatprep.subr.mxu0 0.0
    %430 = vmatpush1.xpose.msra.mxu0 0.0
    %431 = vmatprep.subr.mxu0 0.0
    %432 = vmatpush1.xpose.msra.mxu0 0.0
    %433 = vmatprep.subr.mxu0 0.0
    %434 = vmatpush1.xpose.msra.mxu0 0.0
    %435 = vmatprep.subr.mxu0 0.0
    %436 = vmatpush1.xpose.msra.mxu0 0.0
    %437 = vmatprep.subr.mxu0 0.0
    %438 = vmatpush1.xpose.msra.mxu0 0.0
    %439 = vmatprep.subr.mxu0 0.0
    %440 = vmatpush1.xpose.msra.mxu0 0.0
    %441 = vmatprep.subr.mxu0 0.0
    %442 = vmatpush1.xpose.msra.mxu0 0.0
    %443 = vmatprep.subr.mxu0 0.0
    %444 = vmatpush1.xpose.msra.mxu0 0.0
    %445 = vmatprep.subr.mxu0 0.0
    %446 = vmatpush1.xpose.msra.mxu0 0.0
    %447 = vmatprep.subr.mxu0 0.0
    %448 = vmatpush1.xpose.msra.mxu0 0.0
    %449 = vmatprep.subr.mxu0 0.0
    %450 = vmatpush1.xpose.msra.mxu0 0.0
    %451 = vmatprep.subr.mxu0 0.0
    %452 = vmatpush1.xpose.msra.mxu0 0.0
    %453 = vmatprep.subr.mxu0 0.0
    %454 = vmatpush1.xpose.msra.mxu0 0.0
    %455 = vmatprep.subr.mxu0 0.0
    %456 = vmatpush1.xpose.msra.mxu0 0.0
    %457 = vmatprep.subr.mxu0 0.0
    %458 = vmatpush1.xpose.msra.mxu0 0.0
    %459 = vmatprep.subr.mxu0 0.0
    %460 = vmatpush1.xpose.msra.mxu0 0.0
    %461 = vmatprep.subr.mxu0 0.0
    %462 = vmatpush1.xpose.msra.mxu0 0.0
    %463 = vmatprep.subr.mxu0 0.0
    %464 = vmatpush1.xpose.msra.mxu0 0.0
    %465 = vmatprep.subr.mxu0 0.0
    %466 = vmatpush1.xpose.msra.mxu0 0.0
    %467 = vmatprep.subr.mxu0 0.0
    %468 = vmatpush1.xpose.msra.mxu0 0.0
    %469 = vmatprep.subr.mxu0 0.0
    %470 = vmatpush1.xpose.msra.mxu0 0.0
    %471 = vmatprep.subr.mxu0 0.0
    %472 = vmatpush1.xpose.msra.mxu0 0.0
    %473 = vmatprep.subr.mxu0 0.0
    %474 = vmatpush1.xpose.msra.mxu0 0.0
    %475 = vmatprep.subr.mxu0 0.0
    %476 = vmatpush1.xpose.msra.mxu0 0.0
    %477 = vmatprep.subr.mxu0 0.0
    %478 = vmatpush1.xpose.msra.mxu0 0.0
    %479 = vmatprep.mubr.f32.mxu0 0.0
    %480 = vmatmul.mubr.f32.gmra.mrb[0].mxu0 %v411
    %v481 = vpop.f32.mrb[0].mxu0
    %v482 = vadd.f32 0.0, %v481
    %v483 = vpop.f32.mrb[0].mxu0
    %484 = vdwg.mxu0
    %v485 = vmul.f32 %v482, 0.35355338
    %v486 = vsel %vm314, %v485, -inf
    %487 = vmax.xlane.f32.xlu0 %v486
    %v488 = vpop.xlane.xlu0 %487
    %v489 = vsub.f32 %v485, %v488
    %v490 = vmul.f32 %v489, 1.442695
    %v491 = vpow.pop %v490
    %v492 = vsel %vm314, %v491, 0.0
    %493 = vadd.xlane.f32.xlu0 %v492
    %v494 = vpop.xlane.xlu0 %493
    %v495 = vrcp.pop %v494
    %v496 = vmul.f32 %v491, %v495
    %497 = vrot.lane.b32.xlu0 %v232, 56
    %v498 = vpop.permute.xlu0 %497
    %v500 = vsel %vm328, %v496, 0
    %v502 = vsel %vm332, %v498, 0
    %504 = vmatprep.subr.mxu0 0.0
    %505 = vmatpush1.msra.mxu0 %v502
    %506 = vmatprep.subr.mxu0 0.0
    %507 = vmatpush1.msra.mxu0 0.0
    %508 = vmatprep.subr.mxu0 0.0
    %509 = vmatpush1.msra.mxu0 0.0
    %510 = vmatprep.subr.mxu0 0.0
    %511 = vmatpush1.msra.mxu0 0.0
    %512 = vmatprep.subr.mxu0 0.0
    %513 = vmatpush1.msra.mxu0 0.0
    %514 = vmatprep.subr.mxu0 0.0
    %515 = vmatpush1.msra.mxu0 0.0
    %516 = vmatprep.subr.mxu0 0.0
    %517 = vmatpush1.msra.mxu0 0.0
    %518 = vmatprep.subr.mxu0 0.0
    %519 = vmatpush1.msra.mxu0 0.0
    %520 = vmatprep.subr.mxu0 0.0
    %521 = vmatpush1.msra.mxu0 0.0
    %522 = vmatprep.subr.mxu0 0.0
    %523 = vmatpush1.msra.mxu0 0.0
    %524 = vmatprep.subr.mxu0 0.0
    %525 = vmatpush1.msra.mxu0 0.0
    %526 = vmatprep.subr.mxu0 0.0
    %527 = vmatpush1.msra.mxu0 0.0
    %528 = vmatprep.subr.mxu0 0.0
    %529 = vmatpush1.msra.mxu0 0.0
    %530 = vmatprep.subr.mxu0 0.0
    %531 = vmatpush1.msra.mxu0 0.0
    %532 = vmatprep.subr.mxu0 0.0
    %533 = vmatpush1.msra.mxu0 0.0
    %534 = vmatprep.subr.mxu0 0.0
    %535 = vmatpush1.msra.mxu0 0.0
    %536 = vmatprep.subr.mxu0 0.0
    %537 = vmatpush1.msra.mxu0 0.0
    %538 = vmatprep.subr.mxu0 0.0
    %539 = vmatpush1.msra.mxu0 0.0
    %540 = vmatprep.subr.mxu0 0.0
    %541 = vmatpush1.msra.mxu0 0.0
    %542 = vmatprep.subr.mxu0 0.0
    %543 = vmatpush1.msra.mxu0 0.0
    %544 = vmatprep.subr.mxu0 0.0
    %545 = vmatpush1.msra.mxu0 0.0
    %546 = vmatprep.subr.mxu0 0.0
    %547 = vmatpush1.msra.mxu0 0.0
    %548 = vmatprep.subr.mxu0 0.0
    %549 = vmatpush1.msra.mxu0 0.0
    %550 = vmatprep.subr.mxu0 0.0
    %551 = vmatpush1.msra.mxu0 0.0
    %552 = vmatprep.subr.mxu0 0.0
    %553 = vmatpush1.msra.mxu0 0.0
    %554 = vmatprep.subr.mxu0 0.0
    %555 = vmatpush1.msra.mxu0 0.0
    %556 = vmatprep.subr.mxu0 0.0
    %557 = vmatpush1.msra.mxu0 0.0
    %558 = vmatprep.subr.mxu0 0.0
    %559 = vmatpush1.msra.mxu0 0.0
    %560 = vmatprep.subr.mxu0 0.0
    %561 = vmatpush1.msra.mxu0 0.0
    %562 = vmatprep.subr.mxu0 0.0
    %563 = vmatpush1.msra.mxu0 0.0
    %564 = vmatprep.subr.mxu0 0.0
    %565 = vmatpush1.msra.mxu0 0.0
    %566 = vmatprep.subr.mxu0 0.0
    %567 = vmatpush1.msra.mxu0 0.0
    %568 = vmatprep.mubr.f32.mxu0 0.0
    %569 = vmatmul.mubr.f32.gmra.mrb[0].mxu0 %v500
    %v570 = vpop.f32.mrb[0].mxu0
    %v571 = vadd.f32 0.0, %v570
    %v572 = vpop.f32.mrb[0].mxu0
    %573 = vdwg.mxu0
    %575 = vrot.lane.b32.xlu0 %v571, 8
    %v576 = vpop.permute.xlu0 %575
    %vm578 = vcmask 126016
    %579 = vst.msk [vmem:[#allocation2] sm:$0xf] %vm578, %v576
    %580 = vrot.lane.b32.xlu0 %v232, 112
    %v581 = vpop.permute.xlu0 %580
    %582 = vrot.lane.b32.xlu0 %v232, 80
    %v583 = vpop.permute.xlu0 %582
    %v584 = vsel %vm238, %v581, 0
    %v586 = vsel %vm238, %v583, 0
    %588 = vmatprep.subr.mxu0 0.0
    %589 = vmatpush1.xpose.msra.mxu0 %v586
    %590 = vmatprep.subr.mxu0 0.0
    %591 = vmatpush1.xpose.msra.mxu0 0.0
    %592 = vmatprep.subr.mxu0 0.0
    %593 = vmatpush1.xpose.msra.mxu0 0.0
    %594 = vmatprep.subr.mxu0 0.0
    %595 = vmatpush1.xpose.msra.mxu0 0.0
    %596 = vmatprep.subr.mxu0 0.0
    %597 = vmatpush1.xpose.msra.mxu0 0.0
    %598 = vmatprep.subr.mxu0 0.0
    %599 = vmatpush1.xpose.msra.mxu0 0.0
    %600 = vmatprep.subr.mxu0 0.0
    %601 = vmatpush1.xpose.msra.mxu0 0.0
    %602 = vmatprep.subr.mxu0 0.0
    %603 = vmatpush1.xpose.msra.mxu0 0.0
    %604 = vmatprep.subr.mxu0 0.0
    %605 = vmatpush1.xpose.msra.mxu0 0.0
    %606 = vmatprep.subr.mxu0 0.0
    %607 = vmatpush1.xpose.msra.mxu0 0.0
    %608 = vmatprep.subr.mxu0 0.0
    %609 = vmatpush1.xpose.msra.mxu0 0.0
    %610 = vmatprep.subr.mxu0 0.0
    %611 = vmatpush1.xpose.msra.mxu0 0.0
    %612 = vmatprep.subr.mxu0 0.0
    %613 = vmatpush1.xpose.msra.mxu0 0.0
    %614 = vmatprep.subr.mxu0 0.0
    %615 = vmatpush1.xpose.msra.mxu0 0.0
    %616 = vmatprep.subr.mxu0 0.0
    %617 = vmatpush1.xpose.msra.mxu0 0.0
    %618 = vmatprep.subr.mxu0 0.0
    %619 = vmatpush1.xpose.msra.mxu0 0.0
    %620 = vmatprep.subr.mxu0 0.0
    %621 = vmatpush1.xpose.msra.mxu0 0.0
    %622 = vmatprep.subr.mxu0 0.0
    %623 = vmatpush1.xpose.msra.mxu0 0.0
    %624 = vmatprep.subr.mxu0 0.0
    %625 = vmatpush1.xpose.msra.mxu0 0.0
    %626 = vmatprep.subr.mxu0 0.0
    %627 = vmatpush1.xpose.msra.mxu0 0.0
    %628 = vmatprep.subr.mxu0 0.0
    %629 = vmatpush1.xpose.msra.mxu0 0.0
    %630 = vmatprep.subr.mxu0 0.0
    %631 = vmatpush1.xpose.msra.mxu0 0.0
    %632 = vmatprep.subr.mxu0 0.0
    %633 = vmatpush1.xpose.msra.mxu0 0.0
    %634 = vmatprep.subr.mxu0 0.0
    %635 = vmatpush1.xpose.msra.mxu0 0.0
    %636 = vmatprep.subr.mxu0 0.0
    %637 = vmatpush1.xpose.msra.mxu0 0.0
    %638 = vmatprep.subr.mxu0 0.0
    %639 = vmatpush1.xpose.msra.mxu0 0.0
    %640 = vmatprep.subr.mxu0 0.0
    %641 = vmatpush1.xpose.msra.mxu0 0.0
    %642 = vmatprep.subr.mxu0 0.0
    %643 = vmatpush1.xpose.msra.mxu0 0.0
    %644 = vmatprep.subr.mxu0 0.0
    %645 = vmatpush1.xpose.msra.mxu0 0.0
    %646 = vmatprep.subr.mxu0 0.0
    %647 = vmatpush1.xpose.msra.mxu0 0.0
    %648 = vmatprep.subr.mxu0 0.0
    %649 = vmatpush1.xpose.msra.mxu0 0.0
    %650 = vmatprep.subr.mxu0 0.0
    %651 = vmatpush1.xpose.msra.mxu0 0.0
    %652 = vmatprep.mubr.f32.mxu0 0.0
    %653 = vmatmul.mubr.f32.gmra.mrb[0].mxu0 %v584
    %v654 = vpop.f32.mrb[0].mxu0
    %v655 = vadd.f32 0.0, %v654
    %v656 = vpop.f32.mrb[0].mxu0
    %657 = vdwg.mxu0
    %v658 = vmul.f32 %v655, 0.35355338
    %v659 = vsel %vm314, %v658, -inf
    %660 = vmax.xlane.f32.xlu0 %v659
    %v661 = vpop.xlane.xlu0 %660
    %v662 = vsub.f32 %v658, %v661
    %v663 = vmul.f32 %v662, 1.442695
    %v664 = vpow.pop %v663
    %v665 = vsel %vm314, %v664, 0.0
    %666 = vadd.xlane.f32.xlu0 %v665
    %v667 = vpop.xlane.xlu0 %666
    %v668 = vrcp.pop %v667
    %v669 = vmul.f32 %v664, %v668
    %670 = vrot.lane.b32.xlu0 %v232, 48
    %v671 = vpop.permute.xlu0 %670
    %v673 = vsel %vm328, %v669, 0
    %v675 = vsel %vm332, %v671, 0
    %677 = vmatprep.subr.mxu0 0.0
    %678 = vmatpush1.msra.mxu0 %v675
    %679 = vmatprep.subr.mxu0 0.0
    %680 = vmatpush1.msra.mxu0 0.0
    %681 = vmatprep.subr.mxu0 0.0
    %682 = vmatpush1.msra.mxu0 0.0
    %683 = vmatprep.subr.mxu0 0.0
    %684 = vmatpush1.msra.mxu0 0.0
    %685 = vmatprep.subr.mxu0 0.0
    %686 = vmatpush1.msra.mxu0 0.0
    %687 = vmatprep.subr.mxu0 0.0
    %688 = vmatpush1.msra.mxu0 0.0
    %689 = vmatprep.subr.mxu0 0.0
    %690 = vmatpush1.msra.mxu0 0.0
    %691 = vmatprep.subr.mxu0 0.0
    %692 = vmatpush1.msra.mxu0 0.0
    %693 = vmatprep.subr.mxu0 0.0
    %694 = vmatpush1.msra.mxu0 0.0
    %695 = vmatprep.subr.mxu0 0.0
    %696 = vmatpush1.msra.mxu0 0.0
    %697 = vmatprep.subr.mxu0 0.0
    %698 = vmatpush1.msra.mxu0 0.0
    %699 = vmatprep.subr.mxu0 0.0
    %700 = vmatpush1.msra.mxu0 0.0
    %701 = vmatprep.subr.mxu0 0.0
    %702 = vmatpush1.msra.mxu0 0.0
    %703 = vmatprep.subr.mxu0 0.0
    %704 = vmatpush1.msra.mxu0 0.0
    %705 = vmatprep.subr.mxu0 0.0
    %706 = vmatpush1.msra.mxu0 0.0
    %707 = vmatprep.subr.mxu0 0.0
    %708 = vmatpush1.msra.mxu0 0.0
    %709 = vmatprep.subr.mxu0 0.0
    %710 = vmatpush1.msra.mxu0 0.0
    %711 = vmatprep.subr.mxu0 0.0
    %712 = vmatpush1.msra.mxu0 0.0
    %713 = vmatprep.subr.mxu0 0.0
    %714 = vmatpush1.msra.mxu0 0.0
    %715 = vmatprep.subr.mxu0 0.0
    %716 = vmatpush1.msra.mxu0 0.0
    %717 = vmatprep.subr.mxu0 0.0
    %718 = vmatpush1.msra.mxu0 0.0
    %719 = vmatprep.subr.mxu0 0.0
    %720 = vmatpush1.msra.mxu0 0.0
    %721 = vmatprep.subr.mxu0 0.0
    %722 = vmatpush1.msra.mxu0 0.0
    %723 = vmatprep.subr.mxu0 0.0
    %724 = vmatpush1.msra.mxu0 0.0
    %725 = vmatprep.subr.mxu0 0.0
    %726 = vmatpush1.msra.mxu0 0.0
    %727 = vmatprep.subr.mxu0 0.0
    %728 = vmatpush1.msra.mxu0 0.0
    %729 = vmatprep.subr.mxu0 0.0
    %730 = vmatpush1.msra.mxu0 0.0
    %731 = vmatprep.subr.mxu0 0.0
    %732 = vmatpush1.msra.mxu0 0.0
    %733 = vmatprep.subr.mxu0 0.0
    %734 = vmatpush1.msra.mxu0 0.0
    %735 = vmatprep.subr.mxu0 0.0
    %736 = vmatpush1.msra.mxu0 0.0
    %737 = vmatprep.subr.mxu0 0.0
    %738 = vmatpush1.msra.mxu0 0.0
    %739 = vmatprep.subr.mxu0 0.0
    %740 = vmatpush1.msra.mxu0 0.0
    %741 = vmatprep.mubr.f32.mxu0 0.0
    %742 = vmatmul.mubr.f32.gmra.mrb[0].mxu0 %v673
    %v743 = vpop.f32.mrb[0].mxu0
    %v744 = vadd.f32 0.0, %v743
    %v745 = vpop.f32.mrb[0].mxu0
    %746 = vdwg.mxu0
    %748 = vrot.lane.b32.xlu0 %v744, 16
    %v749 = vpop.permute.xlu0 %748
    %vm751 = vcmask 191616
    %752 = vst.msk [vmem:[#allocation2] sm:$0xf] %vm751, %v749
    %753 = vrot.lane.b32.xlu0 %v232, 104
    %v754 = vpop.permute.xlu0 %753
    %755 = vrot.lane.b32.xlu0 %v232, 72
    %v756 = vpop.permute.xlu0 %755
    %v757 = vsel %vm238, %v754, 0
    %v759 = vsel %vm238, %v756, 0
    %761 = vmatprep.subr.mxu0 0.0
    %762 = vmatpush1.xpose.msra.mxu0 %v759
    %763 = vmatprep.subr.mxu0 0.0
    %764 = vmatpush1.xpose.msra.mxu0 0.0
    %765 = vmatprep.subr.mxu0 0.0
    %766 = vmatpush1.xpose.msra.mxu0 0.0
    %767 = vmatprep.subr.mxu0 0.0
    %768 = vmatpush1.xpose.msra.mxu0 0.0
    %769 = vmatprep.subr.mxu0 0.0
    %770 = vmatpush1.xpose.msra.mxu0 0.0
    %771 = vmatprep.subr.mxu0 0.0
    %772 = vmatpush1.xpose.msra.mxu0 0.0
    %773 = vmatprep.subr.mxu0 0.0
    %774 = vmatpush1.xpose.msra.mxu0 0.0
    %775 = vmatprep.subr.mxu0 0.0
    %776 = vmatpush1.xpose.msra.mxu0 0.0
    %777 = vmatprep.subr.mxu0 0.0
    %778 = vmatpush1.xpose.msra.mxu0 0.0
    %779 = vmatprep.subr.mxu0 0.0
    %780 = vmatpush1.xpose.msra.mxu0 0.0
    %781 = vmatprep.subr.mxu0 0.0
    %782 = vmatpush1.xpose.msra.mxu0 0.0
    %783 = vmatprep.subr.mxu0 0.0
    %784 = vmatpush1.xpose.msra.mxu0 0.0
    %785 = vmatprep.subr.mxu0 0.0
    %786 = vmatpush1.xpose.msra.mxu0 0.0
    %787 = vmatprep.subr.mxu0 0.0
    %788 = vmatpush1.xpose.msra.mxu0 0.0
    %789 = vmatprep.subr.mxu0 0.0
    %790 = vmatpush1.xpose.msra.mxu0 0.0
    %791 = vmatprep.subr.mxu0 0.0
    %792 = vmatpush1.xpose.msra.mxu0 0.0
    %793 = vmatprep.subr.mxu0 0.0
    %794 = vmatpush1.xpose.msra.mxu0 0.0
    %795 = vmatprep.subr.mxu0 0.0
    %796 = vmatpush1.xpose.msra.mxu0 0.0
    %797 = vmatprep.subr.mxu0 0.0
    %798 = vmatpush1.xpose.msra.mxu0 0.0
    %799 = vmatprep.subr.mxu0 0.0
    %800 = vmatpush1.xpose.msra.mxu0 0.0
    %801 = vmatprep.subr.mxu0 0.0
    %802 = vmatpush1.xpose.msra.mxu0 0.0
    %803 = vmatprep.subr.mxu0 0.0
    %804 = vmatpush1.xpose.msra.mxu0 0.0
    %805 = vmatprep.subr.mxu0 0.0
    %806 = vmatpush1.xpose.msra.mxu0 0.0
    %807 = vmatprep.subr.mxu0 0.0
    %808 = vmatpush1.xpose.msra.mxu0 0.0
    %809 = vmatprep.subr.mxu0 0.0
    %810 = vmatpush1.xpose.msra.mxu0 0.0
    %811 = vmatprep.subr.mxu0 0.0
    %812 = vmatpush1.xpose.msra.mxu0 0.0
    %813 = vmatprep.subr.mxu0 0.0
    %814 = vmatpush1.xpose.msra.mxu0 0.0
    %815 = vmatprep.subr.mxu0 0.0
    %816 = vmatpush1.xpose.msra.mxu0 0.0
    %817 = vmatprep.subr.mxu0 0.0
    %818 = vmatpush1.xpose.msra.mxu0 0.0
    %819 = vmatprep.subr.mxu0 0.0
    %820 = vmatpush1.xpose.msra.mxu0 0.0
    %821 = vmatprep.subr.mxu0 0.0
    %822 = vmatpush1.xpose.msra.mxu0 0.0
    %823 = vmatprep.subr.mxu0 0.0
    %824 = vmatpush1.xpose.msra.mxu0 0.0
    %825 = vmatprep.mubr.f32.mxu0 0.0
    %826 = vmatmul.mubr.f32.gmra.mrb[0].mxu0 %v757
    %v827 = vpop.f32.mrb[0].mxu0
    %v828 = vadd.f32 0.0, %v827
    %v829 = vpop.f32.mrb[0].mxu0
    %830 = vdwg.mxu0
    %v831 = vmul.f32 %v828, 0.35355338
    %v832 = vsel %vm314, %v831, -inf
    %833 = vmax.xlane.f32.xlu0 %v832
    %v834 = vpop.xlane.xlu0 %833
    %v835 = vsub.f32 %v831, %v834
    %v836 = vmul.f32 %v835, 1.442695
    %v837 = vpow.pop %v836
    %v838 = vsel %vm314, %v837, 0.0
    %839 = vadd.xlane.f32.xlu0 %v838
    %v840 = vpop.xlane.xlu0 %839
    %v841 = vrcp.pop %v840
    %v842 = vmul.f32 %v837, %v841
    %843 = vrot.lane.b32.xlu0 %v232, 40
    %v844 = vpop.permute.xlu0 %843
    %v846 = vsel %vm328, %v842, 0
    %v848 = vsel %vm332, %v844, 0
    %850 = vmatprep.subr.mxu0 0.0
    %851 = vmatpush1.msra.mxu0 %v848
    %852 = vmatprep.subr.mxu0 0.0
    %853 = vmatpush1.msra.mxu0 0.0
    %854 = vmatprep.subr.mxu0 0.0
    %855 = vmatpush1.msra.mxu0 0.0
    %856 = vmatprep.subr.mxu0 0.0
    %857 = vmatpush1.msra.mxu0 0.0
    %858 = vmatprep.subr.mxu0 0.0
    %859 = vmatpush1.msra.mxu0 0.0
    %860 = vmatprep.subr.mxu0 0.0
    %861 = vmatpush1.msra.mxu0 0.0
    %862 = vmatprep.subr.mxu0 0.0
    %863 = vmatpush1.msra.mxu0 0.0
    %864 = vmatprep.subr.mxu0 0.0
    %865 = vmatpush1.msra.mxu0 0.0
    %866 = vmatprep.subr.mxu0 0.0
    %867 = vmatpush1.msra.mxu0 0.0
    %868 = vmatprep.subr.mxu0 0.0
    %869 = vmatpush1.msra.mxu0 0.0
    %870 = vmatprep.subr.mxu0 0.0
    %871 = vmatpush1.msra.mxu0 0.0
    %872 = vmatprep.subr.mxu0 0.0
    %873 = vmatpush1.msra.mxu0 0.0
    %874 = vmatprep.subr.mxu0 0.0
    %875 = vmatpush1.msra.mxu0 0.0
    %876 = vmatprep.subr.mxu0 0.0
    %877 = vmatpush1.msra.mxu0 0.0
    %878 = vmatprep.subr.mxu0 0.0
    %879 = vmatpush1.msra.mxu0 0.0
    %880 = vmatprep.subr.mxu0 0.0
    %881 = vmatpush1.msra.mxu0 0.0
    %882 = vmatprep.subr.mxu0 0.0
    %883 = vmatpush1.msra.mxu0 0.0
    %884 = vmatprep.subr.mxu0 0.0
    %885 = vmatpush1.msra.mxu0 0.0
    %886 = vmatprep.subr.mxu0 0.0
    %887 = vmatpush1.msra.mxu0 0.0
    %888 = vmatprep.subr.mxu0 0.0
    %889 = vmatpush1.msra.mxu0 0.0
    %890 = vmatprep.subr.mxu0 0.0
    %891 = vmatpush1.msra.mxu0 0.0
    %892 = vmatprep.subr.mxu0 0.0
    %893 = vmatpush1.msra.mxu0 0.0
    %894 = vmatprep.subr.mxu0 0.0
    %895 = vmatpush1.msra.mxu0 0.0
    %896 = vmatprep.subr.mxu0 0.0
    %897 = vmatpush1.msra.mxu0 0.0
    %898 = vmatprep.subr.mxu0 0.0
    %899 = vmatpush1.msra.mxu0 0.0
    %900 = vmatprep.subr.mxu0 0.0
    %901 = vmatpush1.msra.mxu0 0.0
    %902 = vmatprep.subr.mxu0 0.0
    %903 = vmatpush1.msra.mxu0 0.0
    %904 = vmatprep.subr.mxu0 0.0
    %905 = vmatpush1.msra.mxu0 0.0
    %906 = vmatprep.subr.mxu0 0.0
    %907 = vmatpush1.msra.mxu0 0.0
    %908 = vmatprep.subr.mxu0 0.0
    %909 = vmatpush1.msra.mxu0 0.0
    %910 = vmatprep.subr.mxu0 0.0
    %911 = vmatpush1.msra.mxu0 0.0
    %912 = vmatprep.subr.mxu0 0.0
    %913 = vmatpush1.msra.mxu0 0.0
    %914 = vmatprep.mubr.f32.mxu0 0.0
    %915 = vmatmul.mubr.f32.gmra.mrb[0].mxu0 %v846
    %v916 = vpop.f32.mrb[0].mxu0
    %v917 = vadd.f32 0.0, %v916
    %v918 = vpop.f32.mrb[0].mxu0
    %919 = vdwg.mxu0
    %921 = vrot.lane.b32.xlu0 %v917, 24
    %v922 = vpop.permute.xlu0 %921
    %vm924 = vcmask 257216
    %925 = vst.msk [vmem:[#allocation2] sm:$0xf] %vm924, %v922
    %v926 = vrot.slane %v232, 4
    %927 = vrot.lane.b32.xlu0 %v926, 96
    %v928 = vpop.permute.xlu0 %927
    %v929 = vsel %vm238, %v926, 0
    %v931 = vsel %vm238, %v928, 0
    %933 = vmatprep.subr.mxu0 0.0
    %934 = vmatpush1.xpose.msra.mxu0 %v931
    %935 = vmatprep.subr.mxu0 0.0
    %936 = vmatpush1.xpose.msra.mxu0 0.0
    %937 = vmatprep.subr.mxu0 0.0
    %938 = vmatpush1.xpose.msra.mxu0 0.0
    %939 = vmatprep.subr.mxu0 0.0
    %940 = vmatpush1.xpose.msra.mxu0 0.0
    %941 = vmatprep.subr.mxu0 0.0
    %942 = vmatpush1.xpose.msra.mxu0 0.0
    %943 = vmatprep.subr.mxu0 0.0
    %944 = vmatpush1.xpose.msra.mxu0 0.0
    %945 = vmatprep.subr.mxu0 0.0
    %946 = vmatpush1.xpose.msra.mxu0 0.0
    %947 = vmatprep.subr.mxu0 0.0
    %948 = vmatpush1.xpose.msra.mxu0 0.0
    %949 = vmatprep.subr.mxu0 0.0
    %950 = vmatpush1.xpose.msra.mxu0 0.0
    %951 = vmatprep.subr.mxu0 0.0
    %952 = vmatpush1.xpose.msra.mxu0 0.0
    %953 = vmatprep.subr.mxu0 0.0
    %954 = vmatpush1.xpose.msra.mxu0 0.0
    %955 = vmatprep.subr.mxu0 0.0
    %956 = vmatpush1.xpose.msra.mxu0 0.0
    %957 = vmatprep.subr.mxu0 0.0
    %958 = vmatpush1.xpose.msra.mxu0 0.0
    %959 = vmatprep.subr.mxu0 0.0
    %960 = vmatpush1.xpose.msra.mxu0 0.0
    %961 = vmatprep.subr.mxu0 0.0
    %962 = vmatpush1.xpose.msra.mxu0 0.0
    %963 = vmatprep.subr.mxu0 0.0
    %964 = vmatpush1.xpose.msra.mxu0 0.0
    %965 = vmatprep.subr.mxu0 0.0
    %966 = vmatpush1.xpose.msra.mxu0 0.0
    %967 = vmatprep.subr.mxu0 0.0
    %968 = vmatpush1.xpose.msra.mxu0 0.0
    %969 = vmatprep.subr.mxu0 0.0
    %970 = vmatpush1.xpose.msra.mxu0 0.0
    %971 = vmatprep.subr.mxu0 0.0
    %972 = vmatpush1.xpose.msra.mxu0 0.0
    %973 = vmatprep.subr.mxu0 0.0
    %974 = vmatpush1.xpose.msra.mxu0 0.0
    %975 = vmatprep.subr.mxu0 0.0
    %976 = vmatpush1.xpose.msra.mxu0 0.0
    %977 = vmatprep.subr.mxu0 0.0
    %978 = vmatpush1.xpose.msra.mxu0 0.0
    %979 = vmatprep.subr.mxu0 0.0
    %980 = vmatpush1.xpose.msra.mxu0 0.0
    %981 = vmatprep.subr.mxu0 0.0
    %982 = vmatpush1.xpose.msra.mxu0 0.0
    %983 = vmatprep.subr.mxu0 0.0
    %984 = vmatpush1.xpose.msra.mxu0 0.0
    %985 = vmatprep.subr.mxu0 0.0
    %986 = vmatpush1.xpose.msra.mxu0 0.0
    %987 = vmatprep.subr.mxu0 0.0
    %988 = vmatpush1.xpose.msra.mxu0 0.0
    %989 = vmatprep.subr.mxu0 0.0
    %990 = vmatpush1.xpose.msra.mxu0 0.0
    %991 = vmatprep.subr.mxu0 0.0
    %992 = vmatpush1.xpose.msra.mxu0 0.0
    %993 = vmatprep.subr.mxu0 0.0
    %994 = vmatpush1.xpose.msra.mxu0 0.0
    %995 = vmatprep.subr.mxu0 0.0
    %996 = vmatpush1.xpose.msra.mxu0 0.0
    %997 = vmatprep.mubr.f32.mxu0 0.0
    %998 = vmatmul.mubr.f32.gmra.mrb[0].mxu0 %v929
    %v999 = vpop.f32.mrb[0].mxu0
    %v1000 = vadd.f32 0.0, %v999
    %v1001 = vpop.f32.mrb[0].mxu0
    %1002 = vdwg.mxu0
    %v1003 = vmul.f32 %v1000, 0.35355338
    %v1004 = vsel %vm314, %v1003, -inf
    %1005 = vmax.xlane.f32.xlu0 %v1004
    %v1006 = vpop.xlane.xlu0 %1005
    %v1007 = vsub.f32 %v1003, %v1006
    %v1008 = vmul.f32 %v1007, 1.442695
    %v1009 = vpow.pop %v1008
    %v1010 = vsel %vm314, %v1009, 0.0
    %1011 = vadd.xlane.f32.xlu0 %v1010
    %v1012 = vpop.xlane.xlu0 %1011
    %v1013 = vrcp.pop %v1012
    %v1014 = vmul.f32 %v1009, %v1013
    %1015 = vrot.lane.b32.xlu0 %v926, 64
    %v1016 = vpop.permute.xlu0 %1015
    %v1018 = vsel %vm328, %v1014, 0
    %v1020 = vsel %vm332, %v1016, 0
    %1022 = vmatprep.subr.mxu0 0.0
    %1023 = vmatpush1.msra.mxu0 %v1020
    %1024 = vmatprep.subr.mxu0 0.0
    %1025 = vmatpush1.msra.mxu0 0.0
    %1026 = vmatprep.subr.mxu0 0.0
    %1027 = vmatpush1.msra.mxu0 0.0
    %1028 = vmatprep.subr.mxu0 0.0
    %1029 = vmatpush1.msra.mxu0 0.0
    %1030 = vmatprep.subr.mxu0 0.0
    %1031 = vmatpush1.msra.mxu0 0.0
    %1032 = vmatprep.subr.mxu0 0.0
    %1033 = vmatpush1.msra.mxu0 0.0
    %1034 = vmatprep.subr.mxu0 0.0
    %1035 = vmatpush1.msra.mxu0 0.0
    %1036 = vmatprep.subr.mxu0 0.0
    %1037 = vmatpush1.msra.mxu0 0.0
    %1038 = vmatprep.subr.mxu0 0.0
    %1039 = vmatpush1.msra.mxu0 0.0
    %1040 = vmatprep.subr.mxu0 0.0
    %1041 = vmatpush1.msra.mxu0 0.0
    %1042 = vmatprep.subr.mxu0 0.0
    %1043 = vmatpush1.msra.mxu0 0.0
    %1044 = vmatprep.subr.mxu0 0.0
    %1045 = vmatpush1.msra.mxu0 0.0
    %1046 = vmatprep.subr.mxu0 0.0
    %1047 = vmatpush1.msra.mxu0 0.0
    %1048 = vmatprep.subr.mxu0 0.0
    %1049 = vmatpush1.msra.mxu0 0.0
    %1050 = vmatprep.subr.mxu0 0.0
    %1051 = vmatpush1.msra.mxu0 0.0
    %1052 = vmatprep.subr.mxu0 0.0
    %1053 = vmatpush1.msra.mxu0 0.0
    %1054 = vmatprep.subr.mxu0 0.0
    %1055 = vmatpush1.msra.mxu0 0.0
    %1056 = vmatprep.subr.mxu0 0.0
    %1057 = vmatpush1.msra.mxu0 0.0
    %1058 = vmatprep.subr.mxu0 0.0
    %1059 = vmatpush1.msra.mxu0 0.0
    %1060 = vmatprep.subr.mxu0 0.0
    %1061 = vmatpush1.msra.mxu0 0.0
    %1062 = vmatprep.subr.mxu0 0.0
    %1063 = vmatpush1.msra.mxu0 0.0
    %1064 = vmatprep.subr.mxu0 0.0
    %1065 = vmatpush1.msra.mxu0 0.0
    %1066 = vmatprep.subr.mxu0 0.0
    %1067 = vmatpush1.msra.mxu0 0.0
    %1068 = vmatprep.subr.mxu0 0.0
    %1069 = vmatpush1.msra.mxu0 0.0
    %1070 = vmatprep.subr.mxu0 0.0
    %1071 = vmatpush1.msra.mxu0 0.0
    %1072 = vmatprep.subr.mxu0 0.0
    %1073 = vmatpush1.msra.mxu0 0.0
    %1074 = vmatprep.subr.mxu0 0.0
    %1075 = vmatpush1.msra.mxu0 0.0
    %1076 = vmatprep.subr.mxu0 0.0
    %1077 = vmatpush1.msra.mxu0 0.0
    %1078 = vmatprep.subr.mxu0 0.0
    %1079 = vmatpush1.msra.mxu0 0.0
    %1080 = vmatprep.subr.mxu0 0.0
    %1081 = vmatpush1.msra.mxu0 0.0
    %1082 = vmatprep.subr.mxu0 0.0
    %1083 = vmatpush1.msra.mxu0 0.0
    %1084 = vmatprep.subr.mxu0 0.0
    %1085 = vmatpush1.msra.mxu0 0.0
    %1086 = vmatprep.mubr.f32.mxu0 0.0
    %1087 = vmatmul.mubr.f32.gmra.mrb[0].mxu0 %v1018
    %v1088 = vpop.f32.mrb[0].mxu0
    %v1089 = vadd.f32 0.0, %v1088
    %v1090 = vpop.f32.mrb[0].mxu0
    %1091 = vdwg.mxu0
    %1092 = vst.msk [vmem:[#allocation2 + $0x4] sm:$0xf] %vm405, %v1089
    %1093 = vrot.lane.b32.xlu0 %v926, 120
    %v1094 = vpop.permute.xlu0 %1093
    %1095 = vrot.lane.b32.xlu0 %v926, 88
    %v1096 = vpop.permute.xlu0 %1095
    %v1097 = vsel %vm238, %v1094, 0
    %v1099 = vsel %vm238, %v1096, 0
    %1101 = vmatprep.subr.mxu0 0.0
    %1102 = vmatpush1.xpose.msra.mxu0 %v1099
    %1103 = vmatprep.subr.mxu0 0.0
    %1104 = vmatpush1.xpose.msra.mxu0 0.0
    %1105 = vmatprep.subr.mxu0 0.0
    %1106 = vmatpush1.xpose.msra.mxu0 0.0
    %1107 = vmatprep.subr.mxu0 0.0
    %1108 = vmatpush1.xpose.msra.mxu0 0.0
    %1109 = vmatprep.subr.mxu0 0.0
    %1110 = vmatpush1.xpose.msra.mxu0 0.0
    %1111 = vmatprep.subr.mxu0 0.0
    %1112 = vmatpush1.xpose.msra.mxu0 0.0
    %1113 = vmatprep.subr.mxu0 0.0
    %1114 = vmatpush1.xpose.msra.mxu0 0.0
    %1115 = vmatprep.subr.mxu0 0.0
    %1116 = vmatpush1.xpose.msra.mxu0 0.0
    %1117 = vmatprep.subr.mxu0 0.0
    %1118 = vmatpush1.xpose.msra.mxu0 0.0
    %1119 = vmatprep.subr.mxu0 0.0
    %1120 = vmatpush1.xpose.msra.mxu0 0.0
    %1121 = vmatprep.subr.mxu0 0.0
    %1122 = vmatpush1.xpose.msra.mxu0 0.0
    %1123 = vmatprep.subr.mxu0 0.0
    %1124 = vmatpush1.xpose.msra.mxu0 0.0
    %1125 = vmatprep.subr.mxu0 0.0
    %1126 = vmatpush1.xpose.msra.mxu0 0.0
    %1127 = vmatprep.subr.mxu0 0.0
    %1128 = vmatpush1.xpose.msra.mxu0 0.0
    %1129 = vmatprep.subr.mxu0 0.0
    %1130 = vmatpush1.xpose.msra.mxu0 0.0
    %1131 = vmatprep.subr.mxu0 0.0
    %1132 = vmatpush1.xpose.msra.mxu0 0.0
    %1133 = vmatprep.subr.mxu0 0.0
    %1134 = vmatpush1.xpose.msra.mxu0 0.0
    %1135 = vmatprep.subr.mxu0 0.0
    %1136 = vmatpush1.xpose.msra.mxu0 0.0
    %1137 = vmatprep.subr.mxu0 0.0
    %1138 = vmatpush1.xpose.msra.mxu0 0.0
    %1139 = vmatprep.subr.mxu0 0.0
    %1140 = vmatpush1.xpose.msra.mxu0 0.0
    %1141 = vmatprep.subr.mxu0 0.0
    %1142 = vmatpush1.xpose.msra.mxu0 0.0
    %1143 = vmatprep.subr.mxu0 0.0
    %1144 = vmatpush1.xpose.msra.mxu0 0.0
    %1145 = vmatprep.subr.mxu0 0.0
    %1146 = vmatpush1.xpose.msra.mxu0 0.0
    %1147 = vmatprep.subr.mxu0 0.0
    %1148 = vmatpush1.xpose.msra.mxu0 0.0
    %1149 = vmatprep.subr.mxu0 0.0
    %1150 = vmatpush1.xpose.msra.mxu0 0.0
    %1151 = vmatprep.subr.mxu0 0.0
    %1152 = vmatpush1.xpose.msra.mxu0 0.0
    %1153 = vmatprep.subr.mxu0 0.0
    %1154 = vmatpush1.xpose.msra.mxu0 0.0
    %1155 = vmatprep.subr.mxu0 0.0
    %1156 = vmatpush1.xpose.msra.mxu0 0.0
    %1157 = vmatprep.subr.mxu0 0.0
    %1158 = vmatpush1.xpose.msra.mxu0 0.0
    %1159 = vmatprep.subr.mxu0 0.0
    %1160 = vmatpush1.xpose.msra.mxu0 0.0
    %1161 = vmatprep.subr.mxu0 0.0
    %1162 = vmatpush1.xpose.msra.mxu0 0.0
    %1163 = vmatprep.subr.mxu0 0.0
    %1164 = vmatpush1.xpose.msra.mxu0 0.0
    %1165 = vmatprep.mubr.f32.mxu0 0.0
    %1166 = vmatmul.mubr.f32.gmra.mrb[0].mxu0 %v1097
    %v1167 = vpop.f32.mrb[0].mxu0
    %v1168 = vadd.f32 0.0, %v1167
    %v1169 = vpop.f32.mrb[0].mxu0
    %1170 = vdwg.mxu0
    %v1171 = vmul.f32 %v1168, 0.35355338
    %v1172 = vsel %vm314, %v1171, -inf
    %1173 = vmax.xlane.f32.xlu0 %v1172
    %v1174 = vpop.xlane.xlu0 %1173
    %v1175 = vsub.f32 %v1171, %v1174
    %v1176 = vmul.f32 %v1175, 1.442695
    %v1177 = vpow.pop %v1176
    %v1178 = vsel %vm314, %v1177, 0.0
    %1179 = vadd.xlane.f32.xlu0 %v1178
    %v1180 = vpop.xlane.xlu0 %1179
    %v1181 = vrcp.pop %v1180
    %v1182 = vmul.f32 %v1177, %v1181
    %1183 = vrot.lane.b32.xlu0 %v926, 56
    %v1184 = vpop.permute.xlu0 %1183
    %v1186 = vsel %vm328, %v1182, 0
    %v1188 = vsel %vm332, %v1184, 0
    %1190 = vmatprep.subr.mxu0 0.0
    %1191 = vmatpush1.msra.mxu0 %v1188
    %1192 = vmatprep.subr.mxu0 0.0
    %1193 = vmatpush1.msra.mxu0 0.0
    %1194 = vmatprep.subr.mxu0 0.0
    %1195 = vmatpush1.msra.mxu0 0.0
    %1196 = vmatprep.subr.mxu0 0.0
    %1197 = vmatpush1.msra.mxu0 0.0
    %1198 = vmatprep.subr.mxu0 0.0
    %1199 = vmatpush1.msra.mxu0 0.0
    %1200 = vmatprep.subr.mxu0 0.0
    %1201 = vmatpush1.msra.mxu0 0.0
    %1202 = vmatprep.subr.mxu0 0.0
    %1203 = vmatpush1.msra.mxu0 0.0
    %1204 = vmatprep.subr.mxu0 0.0
    %1205 = vmatpush1.msra.mxu0 0.0
    %1206 = vmatprep.subr.mxu0 0.0
    %1207 = vmatpush1.msra.mxu0 0.0
    %1208 = vmatprep.subr.mxu0 0.0
    %1209 = vmatpush1.msra.mxu0 0.0
    %1210 = vmatprep.subr.mxu0 0.0
    %1211 = vmatpush1.msra.mxu0 0.0
    %1212 = vmatprep.subr.mxu0 0.0
    %1213 = vmatpush1.msra.mxu0 0.0
    %1214 = vmatprep.subr.mxu0 0.0
    %1215 = vmatpush1.msra.mxu0 0.0
    %1216 = vmatprep.subr.mxu0 0.0
    %1217 = vmatpush1.msra.mxu0 0.0
    %1218 = vmatprep.subr.mxu0 0.0
    %1219 = vmatpush1.msra.mxu0 0.0
    %1220 = vmatprep.subr.mxu0 0.0
    %1221 = vmatpush1.msra.mxu0 0.0
    %1222 = vmatprep.subr.mxu0 0.0
    %1223 = vmatpush1.msra.mxu0 0.0
    %1224 = vmatprep.subr.mxu0 0.0
    %1225 = vmatpush1.msra.mxu0 0.0
    %1226 = vmatprep.subr.mxu0 0.0
    %1227 = vmatpush1.msra.mxu0 0.0
    %1228 = vmatprep.subr.mxu0 0.0
    %1229 = vmatpush1.msra.mxu0 0.0
    %1230 = vmatprep.subr.mxu0 0.0
    %1231 = vmatpush1.msra.mxu0 0.0
    %1232 = vmatprep.subr.mxu0 0.0
    %1233 = vmatpush1.msra.mxu0 0.0
    %1234 = vmatprep.subr.mxu0 0.0
    %1235 = vmatpush1.msra.mxu0 0.0
    %1236 = vmatprep.subr.mxu0 0.0
    %1237 = vmatpush1.msra.mxu0 0.0
    %1238 = vmatprep.subr.mxu0 0.0
    %1239 = vmatpush1.msra.mxu0 0.0
    %1240 = vmatprep.subr.mxu0 0.0
    %1241 = vmatpush1.msra.mxu0 0.0
    %1242 = vmatprep.subr.mxu0 0.0
    %1243 = vmatpush1.msra.mxu0 0.0
    %1244 = vmatprep.subr.mxu0 0.0
    %1245 = vmatpush1.msra.mxu0 0.0
    %1246 = vmatprep.subr.mxu0 0.0
    %1247 = vmatpush1.msra.mxu0 0.0
    %1248 = vmatprep.subr.mxu0 0.0
    %1249 = vmatpush1.msra.mxu0 0.0
    %1250 = vmatprep.subr.mxu0 0.0
    %1251 = vmatpush1.msra.mxu0 0.0
    %1252 = vmatprep.subr.mxu0 0.0
    %1253 = vmatpush1.msra.mxu0 0.0
    %1254 = vmatprep.mubr.f32.mxu0 0.0
    %1255 = vmatmul.mubr.f32.gmra.mrb[0].mxu0 %v1186
    %v1256 = vpop.f32.mrb[0].mxu0
    %v1257 = vadd.f32 0.0, %v1256
    %v1258 = vpop.f32.mrb[0].mxu0
    %1259 = vdwg.mxu0
    %1261 = vrot.lane.b32.xlu0 %v1257, 8
    %v1262 = vpop.permute.xlu0 %1261
    %1264 = vst.msk [vmem:[#allocation2 + $0x4] sm:$0xf] %vm578, %v1262
    %1265 = vrot.lane.b32.xlu0 %v926, 112
    %v1266 = vpop.permute.xlu0 %1265
    %1267 = vrot.lane.b32.xlu0 %v926, 80
    %v1268 = vpop.permute.xlu0 %1267
    %v1269 = vsel %vm238, %v1266, 0
    %v1271 = vsel %vm238, %v1268, 0
    %1273 = vmatprep.subr.mxu0 0.0
    %1274 = vmatpush1.xpose.msra.mxu0 %v1271
    %1275 = vmatprep.subr.mxu0 0.0
    %1276 = vmatpush1.xpose.msra.mxu0 0.0
    %1277 = vmatprep.subr.mxu0 0.0
    %1278 = vmatpush1.xpose.msra.mxu0 0.0
    %1279 = vmatprep.subr.mxu0 0.0
    %1280 = vmatpush1.xpose.msra.mxu0 0.0
    %1281 = vmatprep.subr.mxu0 0.0
    %1282 = vmatpush1.xpose.msra.mxu0 0.0
    %1283 = vmatprep.subr.mxu0 0.0
    %1284 = vmatpush1.xpose.msra.mxu0 0.0
    %1285 = vmatprep.subr.mxu0 0.0
    %1286 = vmatpush1.xpose.msra.mxu0 0.0
    %1287 = vmatprep.subr.mxu0 0.0
    %1288 = vmatpush1.xpose.msra.mxu0 0.0
    %1289 = vmatprep.subr.mxu0 0.0
    %1290 = vmatpush1.xpose.msra.mxu0 0.0
    %1291 = vmatprep.subr.mxu0 0.0
    %1292 = vmatpush1.xpose.msra.mxu0 0.0
    %1293 = vmatprep.subr.mxu0 0.0
    %1294 = vmatpush1.xpose.msra.mxu0 0.0
    %1295 = vmatprep.subr.mxu0 0.0
    %1296 = vmatpush1.xpose.msra.mxu0 0.0
    %1297 = vmatprep.subr.mxu0 0.0
    %1298 = vmatpush1.xpose.msra.mxu0 0.0
    %1299 = vmatprep.subr.mxu0 0.0
    %1300 = vmatpush1.xpose.msra.mxu0 0.0
    %1301 = vmatprep.subr.mxu0 0.0
    %1302 = vmatpush1.xpose.msra.mxu0 0.0
    %1303 = vmatprep.subr.mxu0 0.0
    %1304 = vmatpush1.xpose.msra.mxu0 0.0
    %1305 = vmatprep.subr.mxu0 0.0
    %1306 = vmatpush1.xpose.msra.mxu0 0.0
    %1307 = vmatprep.subr.mxu0 0.0
    %1308 = vmatpush1.xpose.msra.mxu0 0.0
    %1309 = vmatprep.subr.mxu0 0.0
    %1310 = vmatpush1.xpose.msra.mxu0 0.0
    %1311 = vmatprep.subr.mxu0 0.0
    %1312 = vmatpush1.xpose.msra.mxu0 0.0
    %1313 = vmatprep.subr.mxu0 0.0
    %1314 = vmatpush1.xpose.msra.mxu0 0.0
    %1315 = vmatprep.subr.mxu0 0.0
    %1316 = vmatpush1.xpose.msra.mxu0 0.0
    %1317 = vmatprep.subr.mxu0 0.0
    %1318 = vmatpush1.xpose.msra.mxu0 0.0
    %1319 = vmatprep.subr.mxu0 0.0
    %1320 = vmatpush1.xpose.msra.mxu0 0.0
    %1321 = vmatprep.subr.mxu0 0.0
    %1322 = vmatpush1.xpose.msra.mxu0 0.0
    %1323 = vmatprep.subr.mxu0 0.0
    %1324 = vmatpush1.xpose.msra.mxu0 0.0
    %1325 = vmatprep.subr.mxu0 0.0
    %1326 = vmatpush1.xpose.msra.mxu0 0.0
    %1327 = vmatprep.subr.mxu0 0.0
    %1328 = vmatpush1.xpose.msra.mxu0 0.0
    %1329 = vmatprep.subr.mxu0 0.0
    %1330 = vmatpush1.xpose.msra.mxu0 0.0
    %1331 = vmatprep.subr.mxu0 0.0
    %1332 = vmatpush1.xpose.msra.mxu0 0.0
    %1333 = vmatprep.subr.mxu0 0.0
    %1334 = vmatpush1.xpose.msra.mxu0 0.0
    %1335 = vmatprep.subr.mxu0 0.0
    %1336 = vmatpush1.xpose.msra.mxu0 0.0
    %1337 = vmatprep.mubr.f32.mxu0 0.0
    %1338 = vmatmul.mubr.f32.gmra.mrb[0].mxu0 %v1269
    %v1339 = vpop.f32.mrb[0].mxu0
    %v1340 = vadd.f32 0.0, %v1339
    %v1341 = vpop.f32.mrb[0].mxu0
    %1342 = vdwg.mxu0
    %v1343 = vmul.f32 %v1340, 0.35355338
    %v1344 = vsel %vm314, %v1343, -inf
    %1345 = vmax.xlane.f32.xlu0 %v1344
    %v1346 = vpop.xlane.xlu0 %1345
    %v1347 = vsub.f32 %v1343, %v1346
    %v1348 = vmul.f32 %v1347, 1.442695
    %v1349 = vpow.pop %v1348
    %v1350 = vsel %vm314, %v1349, 0.0
    %1351 = vadd.xlane.f32.xlu0 %v1350
    %v1352 = vpop.xlane.xlu0 %1351
    %v1353 = vrcp.pop %v1352
    %v1354 = vmul.f32 %v1349, %v1353
    %1355 = vrot.lane.b32.xlu0 %v926, 48
    %v1356 = vpop.permute.xlu0 %1355
    %v1358 = vsel %vm328, %v1354, 0
    %v1360 = vsel %vm332, %v1356, 0
    %1362 = vmatprep.subr.mxu0 0.0
    %1363 = vmatpush1.msra.mxu0 %v1360
    %1364 = vmatprep.subr.mxu0 0.0
    %1365 = vmatpush1.msra.mxu0 0.0
    %1366 = vmatprep.subr.mxu0 0.0
    %1367 = vmatpush1.msra.mxu0 0.0
    %1368 = vmatprep.subr.mxu0 0.0
    %1369 = vmatpush1.msra.mxu0 0.0
    %1370 = vmatprep.subr.mxu0 0.0
    %1371 = vmatpush1.msra.mxu0 0.0
    %1372 = vmatprep.subr.mxu0 0.0
    %1373 = vmatpush1.msra.mxu0 0.0
    %1374 = vmatprep.subr.mxu0 0.0
    %1375 = vmatpush1.msra.mxu0 0.0
    %1376 = vmatprep.subr.mxu0 0.0
    %1377 = vmatpush1.msra.mxu0 0.0
    %1378 = vmatprep.subr.mxu0 0.0
    %1379 = vmatpush1.msra.mxu0 0.0
    %1380 = vmatprep.subr.mxu0 0.0
    %1381 = vmatpush1.msra.mxu0 0.0
    %1382 = vmatprep.subr.mxu0 0.0
    %1383 = vmatpush1.msra.mxu0 0.0
    %1384 = vmatprep.subr.mxu0 0.0
    %1385 = vmatpush1.msra.mxu0 0.0
    %1386 = vmatprep.subr.mxu0 0.0
    %1387 = vmatpush1.msra.mxu0 0.0
    %1388 = vmatprep.subr.mxu0 0.0
    %1389 = vmatpush1.msra.mxu0 0.0
    %1390 = vmatprep.subr.mxu0 0.0
    %1391 = vmatpush1.msra.mxu0 0.0
    %1392 = vmatprep.subr.mxu0 0.0
    %1393 = vmatpush1.msra.mxu0 0.0
    %1394 = vmatprep.subr.mxu0 0.0
    %1395 = vmatpush1.msra.mxu0 0.0
    %1396 = vmatprep.subr.mxu0 0.0
    %1397 = vmatpush1.msra.mxu0 0.0
    %1398 = vmatprep.subr.mxu0 0.0
    %1399 = vmatpush1.msra.mxu0 0.0
    %1400 = vmatprep.subr.mxu0 0.0
    %1401 = vmatpush1.msra.mxu0 0.0
    %1402 = vmatprep.subr.mxu0 0.0
    %1403 = vmatpush1.msra.mxu0 0.0
    %1404 = vmatprep.subr.mxu0 0.0
    %1405 = vmatpush1.msra.mxu0 0.0
    %1406 = vmatprep.subr.mxu0 0.0
    %1407 = vmatpush1.msra.mxu0 0.0
    %1408 = vmatprep.subr.mxu0 0.0
    %1409 = vmatpush1.msra.mxu0 0.0
    %1410 = vmatprep.subr.mxu0 0.0
    %1411 = vmatpush1.msra.mxu0 0.0
    %1412 = vmatprep.subr.mxu0 0.0
    %1413 = vmatpush1.msra.mxu0 0.0
    %1414 = vmatprep.subr.mxu0 0.0
    %1415 = vmatpush1.msra.mxu0 0.0
    %1416 = vmatprep.subr.mxu0 0.0
    %1417 = vmatpush1.msra.mxu0 0.0
    %1418 = vmatprep.subr.mxu0 0.0
    %1419 = vmatpush1.msra.mxu0 0.0
    %1420 = vmatprep.subr.mxu0 0.0
    %1421 = vmatpush1.msra.mxu0 0.0
    %1422 = vmatprep.subr.mxu0 0.0
    %1423 = vmatpush1.msra.mxu0 0.0
    %1424 = vmatprep.subr.mxu0 0.0
    %1425 = vmatpush1.msra.mxu0 0.0
    %1426 = vmatprep.mubr.f32.mxu0 0.0
    %1427 = vmatmul.mubr.f32.gmra.mrb[0].mxu0 %v1358
    %v1428 = vpop.f32.mrb[0].mxu0
    %v1429 = vadd.f32 0.0, %v1428
    %v1430 = vpop.f32.mrb[0].mxu0
    %1431 = vdwg.mxu0
    %1433 = vrot.lane.b32.xlu0 %v1429, 16
    %v1434 = vpop.permute.xlu0 %1433
    %1436 = vst.msk [vmem:[#allocation2 + $0x4] sm:$0xf] %vm751, %v1434
    %1437 = vrot.lane.b32.xlu0 %v926, 104
    %v1438 = vpop.permute.xlu0 %1437
    %1439 = vrot.lane.b32.xlu0 %v926, 72
    %v1440 = vpop.permute.xlu0 %1439
    %v1441 = vsel %vm238, %v1438, 0
    %v1443 = vsel %vm238, %v1440, 0
    %1445 = vmatprep.subr.mxu0 0.0
    %1446 = vmatpush1.xpose.msra.mxu0 %v1443
    %1447 = vmatprep.subr.mxu0 0.0
    %1448 = vmatpush1.xpose.msra.mxu0 0.0
    %1449 = vmatprep.subr.mxu0 0.0
    %1450 = vmatpush1.xpose.msra.mxu0 0.0
    %1451 = vmatprep.subr.mxu0 0.0
    %1452 = vmatpush1.xpose.msra.mxu0 0.0
    %1453 = vmatprep.subr.mxu0 0.0
    %1454 = vmatpush1.xpose.msra.mxu0 0.0
    %1455 = vmatprep.subr.mxu0 0.0
    %1456 = vmatpush1.xpose.msra.mxu0 0.0
    %1457 = vmatprep.subr.mxu0 0.0
    %1458 = vmatpush1.xpose.msra.mxu0 0.0
    %1459 = vmatprep.subr.mxu0 0.0
    %1460 = vmatpush1.xpose.msra.mxu0 0.0
    %1461 = vmatprep.subr.mxu0 0.0
    %1462 = vmatpush1.xpose.msra.mxu0 0.0
    %1463 = vmatprep.subr.mxu0 0.0
    %1464 = vmatpush1.xpose.msra.mxu0 0.0
    %1465 = vmatprep.subr.mxu0 0.0
    %1466 = vmatpush1.xpose.msra.mxu0 0.0
    %1467 = vmatprep.subr.mxu0 0.0
    %1468 = vmatpush1.xpose.msra.mxu0 0.0
    %1469 = vmatprep.subr.mxu0 0.0
    %1470 = vmatpush1.xpose.msra.mxu0 0.0
    %1471 = vmatprep.subr.mxu0 0.0
    %1472 = vmatpush1.xpose.msra.mxu0 0.0
    %1473 = vmatprep.subr.mxu0 0.0
    %1474 = vmatpush1.xpose.msra.mxu0 0.0
    %1475 = vmatprep.subr.mxu0 0.0
    %1476 = vmatpush1.xpose.msra.mxu0 0.0
    %1477 = vmatprep.subr.mxu0 0.0
    %1478 = vmatpush1.xpose.msra.mxu0 0.0
    %1479 = vmatprep.subr.mxu0 0.0
    %1480 = vmatpush1.xpose.msra.mxu0 0.0
    %1481 = vmatprep.subr.mxu0 0.0
    %1482 = vmatpush1.xpose.msra.mxu0 0.0
    %1483 = vmatprep.subr.mxu0 0.0
    %1484 = vmatpush1.xpose.msra.mxu0 0.0
    %1485 = vmatprep.subr.mxu0 0.0
    %1486 = vmatpush1.xpose.msra.mxu0 0.0
    %1487 = vmatprep.subr.mxu0 0.0
    %1488 = vmatpush1.xpose.msra.mxu0 0.0
    %1489 = vmatprep.subr.mxu0 0.0
    %1490 = vmatpush1.xpose.msra.mxu0 0.0
    %1491 = vmatprep.subr.mxu0 0.0
    %1492 = vmatpush1.xpose.msra.mxu0 0.0
    %1493 = vmatprep.subr.mxu0 0.0
    %1494 = vmatpush1.xpose.msra.mxu0 0.0
    %1495 = vmatprep.subr.mxu0 0.0
    %1496 = vmatpush1.xpose.msra.mxu0 0.0
    %1497 = vmatprep.subr.mxu0 0.0
    %1498 = vmatpush1.xpose.msra.mxu0 0.0
    %1499 = vmatprep.subr.mxu0 0.0
    %1500 = vmatpush1.xpose.msra.mxu0 0.0
    %1501 = vmatprep.subr.mxu0 0.0
    %1502 = vmatpush1.xpose.msra.mxu0 0.0
    %1503 = vmatprep.subr.mxu0 0.0
    %1504 = vmatpush1.xpose.msra.mxu0 0.0
    %1505 = vmatprep.subr.mxu0 0.0
    %1506 = vmatpush1.xpose.msra.mxu0 0.0
    %1507 = vmatprep.subr.mxu0 0.0
    %1508 = vmatpush1.xpose.msra.mxu0 0.0
    %1509 = vmatprep.mubr.f32.mxu0 0.0
    %1510 = vmatmul.mubr.f32.gmra.mrb[0].mxu0 %v1441
    %v1511 = vpop.f32.mrb[0].mxu0
    %v1512 = vadd.f32 0.0, %v1511
    %v1513 = vpop.f32.mrb[0].mxu0
    %1514 = vdwg.mxu0
    %v1515 = vmul.f32 %v1512, 0.35355338
    %v1516 = vsel %vm314, %v1515, -inf
    %1517 = vmax.xlane.f32.xlu0 %v1516
    %v1518 = vpop.xlane.xlu0 %1517
    %v1519 = vsub.f32 %v1515, %v1518
    %v1520 = vmul.f32 %v1519, 1.442695
    %v1521 = vpow.pop %v1520
    %v1522 = vsel %vm314, %v1521, 0.0
    %1523 = vadd.xlane.f32.xlu0 %v1522
    %v1524 = vpop.xlane.xlu0 %1523
    %v1525 = vrcp.pop %v1524
    %v1526 = vmul.f32 %v1521, %v1525
    %1527 = vrot.lane.b32.xlu0 %v926, 40
    %v1528 = vpop.permute.xlu0 %1527
    %v1530 = vsel %vm328, %v1526, 0
    %v1532 = vsel %vm332, %v1528, 0
    %1534 = vmatprep.subr.mxu0 0.0
    %1535 = vmatpush1.msra.mxu0 %v1532
    %1536 = vmatprep.subr.mxu0 0.0
    %1537 = vmatpush1.msra.mxu0 0.0
    %1538 = vmatprep.subr.mxu0 0.0
    %1539 = vmatpush1.msra.mxu0 0.0
    %1540 = vmatprep.subr.mxu0 0.0
    %1541 = vmatpush1.msra.mxu0 0.0
    %1542 = vmatprep.subr.mxu0 0.0
    %1543 = vmatpush1.msra.mxu0 0.0
    %1544 = vmatprep.subr.mxu0 0.0
    %1545 = vmatpush1.msra.mxu0 0.0
    %1546 = vmatprep.subr.mxu0 0.0
    %1547 = vmatpush1.msra.mxu0 0.0
    %1548 = vmatprep.subr.mxu0 0.0
    %1549 = vmatpush1.msra.mxu0 0.0
    %1550 = vmatprep.subr.mxu0 0.0
    %1551 = vmatpush1.msra.mxu0 0.0
    %1552 = vmatprep.subr.mxu0 0.0
    %1553 = vmatpush1.msra.mxu0 0.0
    %1554 = vmatprep.subr.mxu0 0.0
    %1555 = vmatpush1.msra.mxu0 0.0
    %1556 = vmatprep.subr.mxu0 0.0
    %1557 = vmatpush1.msra.mxu0 0.0
    %1558 = vmatprep.subr.mxu0 0.0
    %1559 = vmatpush1.msra.mxu0 0.0
    %1560 = vmatprep.subr.mxu0 0.0
    %1561 = vmatpush1.msra.mxu0 0.0
    %1562 = vmatprep.subr.mxu0 0.0
    %1563 = vmatpush1.msra.mxu0 0.0
    %1564 = vmatprep.subr.mxu0 0.0
    %1565 = vmatpush1.msra.mxu0 0.0
    %1566 = vmatprep.subr.mxu0 0.0
    %1567 = vmatpush1.msra.mxu0 0.0
    %1568 = vmatprep.subr.mxu0 0.0
    %1569 = vmatpush1.msra.mxu0 0.0
    %1570 = vmatprep.subr.mxu0 0.0
    %1571 = vmatpush1.msra.mxu0 0.0
    %1572 = vmatprep.subr.mxu0 0.0
    %1573 = vmatpush1.msra.mxu0 0.0
    %1574 = vmatprep.subr.mxu0 0.0
    %1575 = vmatpush1.msra.mxu0 0.0
    %1576 = vmatprep.subr.mxu0 0.0
    %1577 = vmatpush1.msra.mxu0 0.0
    %1578 = vmatprep.subr.mxu0 0.0
    %1579 = vmatpush1.msra.mxu0 0.0
    %1580 = vmatprep.subr.mxu0 0.0
    %1581 = vmatpush1.msra.mxu0 0.0
    %1582 = vmatprep.subr.mxu0 0.0
    %1583 = vmatpush1.msra.mxu0 0.0
    %1584 = vmatprep.subr.mxu0 0.0
    %1585 = vmatpush1.msra.mxu0 0.0
    %1586 = vmatprep.subr.mxu0 0.0
    %1587 = vmatpush1.msra.mxu0 0.0
    %1588 = vmatprep.subr.mxu0 0.0
    %1589 = vmatpush1.msra.mxu0 0.0
    %1590 = vmatprep.subr.mxu0 0.0
    %1591 = vmatpush1.msra.mxu0 0.0
    %1592 = vmatprep.subr.mxu0 0.0
    %1593 = vmatpush1.msra.mxu0 0.0
    %1594 = vmatprep.subr.mxu0 0.0
    %1595 = vmatpush1.msra.mxu0 0.0
    %1596 = vmatprep.subr.mxu0 0.0
    %1597 = vmatpush1.msra.mxu0 0.0
    %1598 = vmatprep.mubr.f32.mxu0 0.0
    %1599 = vmatmul.mubr.f32.gmra.mrb[0].mxu0 %v1530
    %v1600 = vpop.f32.mrb[0].mxu0
    %v1601 = vadd.f32 0.0, %v1600
    %v1602 = vpop.f32.mrb[0].mxu0
    %1603 = vdwg.mxu0
    %1605 = vrot.lane.b32.xlu0 %v1601, 24
    %v1606 = vpop.permute.xlu0 %1605
    %1608 = vst.msk [vmem:[#allocation2 + $0x4] sm:$0xf] %vm924, %v1606
    %v1609 = vld [vmem:[#allocation2] sm:$0xff]
    %v1610 = vld [vmem:[%s5] sm:$0xff]
    %v1611 = vld [vmem:[%s5 + $0x8] sm:$0xff]
    %v1612 = vld [vmem:[%s5 + $0x10] sm:$0xff]
    %v1613 = vld [vmem:[%s5 + $0x18] sm:$0xff]
    %v1614 = vld [vmem:[%s6] sm:$0x1]
    %v1616 = vlaneseq
    %v1617 = vshrl.u32 %v1616, 7
    %v1618 = vsub.s32 0, %v1617
    %v1619 = vrot.slane %v1614, %v1618
    %v1622 = vsel %vm161, %v1609, 0
    %1624 = vmatprep.subr.mxu0 0.0
    %1625 = vmatpush1.msra.mxu0 %v1610
    %1626 = vmatprep.subr.mxu0 0.0
    %1627 = vmatpush1.msra.mxu0 %v1611
    %1628 = vmatprep.subr.mxu0 0.0
    %1629 = vmatpush1.msra.mxu0 %v1612
    %1630 = vmatprep.subr.mxu0 0.0
    %1631 = vmatpush1.msra.mxu0 %v1613
    %1632 = vmatprep.subr.mxu0 0.0
    %1633 = vmatpush1.msra.mxu0 0.0
    %1634 = vmatprep.subr.mxu0 0.0
    %1635 = vmatpush1.msra.mxu0 0.0
    %1636 = vmatprep.subr.mxu0 0.0
    %1637 = vmatpush1.msra.mxu0 0.0
    %1638 = vmatprep.subr.mxu0 0.0
    %1639 = vmatpush1.msra.mxu0 0.0
    %1640 = vmatprep.subr.mxu0 0.0
    %1641 = vmatpush1.msra.mxu0 0.0
    %1642 = vmatprep.subr.mxu0 0.0
    %1643 = vmatpush1.msra.mxu0 0.0
    %1644 = vmatprep.subr.mxu0 0.0
    %1645 = vmatpush1.msra.mxu0 0.0
    %1646 = vmatprep.subr.mxu0 0.0
    %1647 = vmatpush1.msra.mxu0 0.0
    %1648 = vmatprep.subr.mxu0 0.0
    %1649 = vmatpush1.msra.mxu0 0.0
    %1650 = vmatprep.subr.mxu0 0.0
    %1651 = vmatpush1.msra.mxu0 0.0
    %1652 = vmatprep.subr.mxu0 0.0
    %1653 = vmatpush1.msra.mxu0 0.0
    %1654 = vmatprep.subr.mxu0 0.0
    %1655 = vmatpush1.msra.mxu0 0.0
    %1656 = vmatprep.subr.mxu0 0.0
    %1657 = vmatpush1.msra.mxu0 0.0
    %1658 = vmatprep.subr.mxu0 0.0
    %1659 = vmatpush1.msra.mxu0 0.0
    %1660 = vmatprep.subr.mxu0 0.0
    %1661 = vmatpush1.msra.mxu0 0.0
    %1662 = vmatprep.subr.mxu0 0.0
    %1663 = vmatpush1.msra.mxu0 0.0
    %1664 = vmatprep.subr.mxu0 0.0
    %1665 = vmatpush1.msra.mxu0 0.0
    %1666 = vmatprep.subr.mxu0 0.0
    %1667 = vmatpush1.msra.mxu0 0.0
    %1668 = vmatprep.subr.mxu0 0.0
    %1669 = vmatpush1.msra.mxu0 0.0
    %1670 = vmatprep.subr.mxu0 0.0
    %1671 = vmatpush1.msra.mxu0 0.0
    %1672 = vmatprep.subr.mxu0 0.0
    %1673 = vmatpush1.msra.mxu0 0.0
    %1674 = vmatprep.subr.mxu0 0.0
    %1675 = vmatpush1.msra.mxu0 0.0
    %1676 = vmatprep.subr.mxu0 0.0
    %1677 = vmatpush1.msra.mxu0 0.0
    %1678 = vmatprep.subr.mxu0 0.0
    %1679 = vmatpush1.msra.mxu0 0.0
    %1680 = vmatprep.subr.mxu0 0.0
    %1681 = vmatpush1.msra.mxu0 0.0
    %1682 = vmatprep.subr.mxu0 0.0
    %1683 = vmatpush1.msra.mxu0 0.0
    %1684 = vmatprep.subr.mxu0 0.0
    %1685 = vmatpush1.msra.mxu0 0.0
    %1686 = vmatprep.subr.mxu0 0.0
    %1687 = vmatpush1.msra.mxu0 0.0
    %1688 = vmatprep.mubr.f32.mxu0 0.0
    %1689 = vmatmul.mubr.f32.gmra.mrb[0].mxu0 %v1622
    %v1690 = vpop.f32.mrb[0].mxu0
    %v1691 = vadd.f32 %v1619, %v1690
    %v1692 = vpop.f32.mrb[0].mxu0
    %1693 = vdwg.mxu0
    %v1694 = vadd.f32 %v147, %v1691
    %v1695 = vsel %vm161, %v1694, 0.0
    %1696 = vadd.xlane.f32.xlu0 %v1695
    %v1697 = vpop.xlane.xlu0 %1696
    %v1698 = vrcp.pop 32.0
    %v1699 = vmul.f32 %v1697, %v1698
    %v1700 = vsub.f32 %v1694, %v1699
    %v1701 = vmul.f32 %v1700, %v1700
    %v1702 = vsel %vm161, %v1701, 0.0
    %1703 = vadd.xlane.f32.xlu0 %v1702
    %v1704 = vpop.xlane.xlu0 %1703
    %v1705 = vmul.f32 %v1704, %v1698
    %v1706 = vadd.f32 %v1705, 1e-05
    %v1707 = vrsqrt.pop %v1706
    %v1708 = vmul.f32 %v1700, %v1707
    %v1709 = vld [vmem:[%s7] sm:$0x1]
    %v1711 = vlaneseq
    %v1712 = vshrl.u32 %v1711, 7
    %v1713 = vsub.s32 0, %v1712
    %v1714 = vrot.slane %v1709, %v1713
    %v1716 = vmul.f32 %v1708, %v1714
    %v1717 = vld [vmem:[%s8] sm:$0x1]
    %v1719 = vlaneseq
    %v1720 = vshrl.u32 %v1719, 7
    %v1721 = vsub.s32 0, %v1720
    %v1722 = vrot.slane %v1717, %v1721
    %v1724 = vadd.f32 %v1716, %v1722
    %s1725 = scalar_lea.vmem %s3, 32
    %v1726 = vld [vmem:[%s1725] sm:$0xff]
    %v1727 = vld [vmem:[%s1725 + $0x8] sm:$0xff]
    %v1728 = vld [vmem:[%s1725 + $0x10] sm:$0xff]
    %v1729 = vld [vmem:[%s1725 + $0x18] sm:$0xff]
    %s1730 = scalar_lea.vmem %s4, 1
    %v1731 = vld [vmem:[%s1730] sm:$0x1]
    %v1733 = vlaneseq
    %v1734 = vshrl.u32 %v1733, 7
    %v1735 = vsub.s32 0, %v1734
    %v1736 = vrot.slane %v1731, %v1735
    %v1739 = vsel %vm161, %v1724, 0
    %1741 = vmatprep.subr.mxu0 0.0
    %1742 = vmatpush1.msra.mxu0 %v1726
    %1743 = vmatprep.subr.mxu0 0.0
    %1744 = vmatpush1.msra.mxu0 %v1727
    %1745 = vmatprep.subr.mxu0 0.0
    %1746 = vmatpush1.msra.mxu0 %v1728
    %1747 = vmatprep.subr.mxu0 0.0
    %1748 = vmatpush1.msra.mxu0 %v1729
    %1749 = vmatprep.subr.mxu0 0.0
    %1750 = vmatpush1.msra.mxu0 0.0
    %1751 = vmatprep.subr.mxu0 0.0
    %1752 = vmatpush1.msra.mxu0 0.0
    %1753 = vmatprep.subr.mxu0 0.0
    %1754 = vmatpush1.msra.mxu0 0.0
    %1755 = vmatprep.subr.mxu0 0.0
    %1756 = vmatpush1.msra.mxu0 0.0
    %1757 = vmatprep.subr.mxu0 0.0
    %1758 = vmatpush1.msra.mxu0 0.0
    %1759 = vmatprep.subr.mxu0 0.0
    %1760 = vmatpush1.msra.mxu0 0.0
    %1761 = vmatprep.subr.mxu0 0.0
    %1762 = vmatpush1.msra.mxu0 0.0
    %1763 = vmatprep.subr.mxu0 0.0
    %1764 = vmatpush1.msra.mxu0 0.0
    %1765 = vmatprep.subr.mxu0 0.0
    %1766 = vmatpush1.msra.mxu0 0.0
    %1767 = vmatprep.subr.mxu0 0.0
    %1768 = vmatpush1.msra.mxu0 0.0
    %1769 = vmatprep.subr.mxu0 0.0
    %1770 = vmatpush1.msra.mxu0 0.0
    %1771 = vmatprep.subr.mxu0 0.0
    %1772 = vmatpush1.msra.mxu0 0.0
    %1773 = vmatprep.subr.mxu0 0.0
    %1774 = vmatpush1.msra.mxu0 0.0
    %1775 = vmatprep.subr.mxu0 0.0
    %1776 = vmatpush1.msra.mxu0 0.0
    %1777 = vmatprep.subr.mxu0 0.0
    %1778 = vmatpush1.msra.mxu0 0.0
    %1779 = vmatprep.subr.mxu0 0.0
    %1780 = vmatpush1.msra.mxu0 0.0
    %1781 = vmatprep.subr.mxu0 0.0
    %1782 = vmatpush1.msra.mxu0 0.0
    %1783 = vmatprep.subr.mxu0 0.0
    %1784 = vmatpush1.msra.mxu0 0.0
    %1785 = vmatprep.subr.mxu0 0.0
    %1786 = vmatpush1.msra.mxu0 0.0
    %1787 = vmatprep.subr.mxu0 0.0
    %1788 = vmatpush1.msra.mxu0 0.0
    %1789 = vmatprep.subr.mxu0 0.0
    %1790 = vmatpush1.msra.mxu0 0.0
    %1791 = vmatprep.subr.mxu0 0.0
    %1792 = vmatpush1.msra.mxu0 0.0
    %1793 = vmatprep.subr.mxu0 0.0
    %1794 = vmatpush1.msra.mxu0 0.0
    %1795 = vmatprep.subr.mxu0 0.0
    %1796 = vmatpush1.msra.mxu0 0.0
    %1797 = vmatprep.subr.mxu0 0.0
    %1798 = vmatpush1.msra.mxu0 0.0
    %1799 = vmatprep.subr.mxu0 0.0
    %1800 = vmatpush1.msra.mxu0 0.0
    %1801 = vmatprep.subr.mxu0 0.0
    %1802 = vmatpush1.msra.mxu0 0.0
    %1803 = vmatprep.subr.mxu0 0.0
    %1804 = vmatpush1.msra.mxu0 0.0
    %1805 = vmatprep.mubr.f32.mxu0 0.0
    %1806 = vmatmul.mubr.f32.gmra.mrb[0].mxu0 %v1739
    %v1807 = vpop.f32.mrb[0].mxu0
    %v1808 = vadd.f32 %v1736, %v1807
    %v1809 = vpop.f32.mrb[0].mxu0
    %1810 = vdwg.mxu0
    %1812 = vrot.lane.b32.xlu0 %v1808, 96
    %v1813 = vpop.permute.xlu0 %1812
    %v1814 = vsel %vm238, %v1808, 0
    %v1816 = vsel %vm238, %v1813, 0
    %1818 = vmatprep.subr.mxu0 0.0
    %1819 = vmatpush1.xpose.msra.mxu0 %v1816
    %1820 = vmatprep.subr.mxu0 0.0
    %1821 = vmatpush1.xpose.msra.mxu0 0.0
    %1822 = vmatprep.subr.mxu0 0.0
    %1823 = vmatpush1.xpose.msra.mxu0 0.0
    %1824 = vmatprep.subr.mxu0 0.0
    %1825 = vmatpush1.xpose.msra.mxu0 0.0
    %1826 = vmatprep.subr.mxu0 0.0
    %1827 = vmatpush1.xpose.msra.mxu0 0.0
    %1828 = vmatprep.subr.mxu0 0.0
    %1829 = vmatpush1.xpose.msra.mxu0 0.0
    %1830 = vmatprep.subr.mxu0 0.0
    %1831 = vmatpush1.xpose.msra.mxu0 0.0
    %1832 = vmatprep.subr.mxu0 0.0
    %1833 = vmatpush1.xpose.msra.mxu0 0.0
    %1834 = vmatprep.subr.mxu0 0.0
    %1835 = vmatpush1.xpose.msra.mxu0 0.0
    %1836 = vmatprep.subr.mxu0 0.0
    %1837 = vmatpush1.xpose.msra.mxu0 0.0
    %1838 = vmatprep.subr.mxu0 0.0
    %1839 = vmatpush1.xpose.msra.mxu0 0.0
    %1840 = vmatprep.subr.mxu0 0.0
    %1841 = vmatpush1.xpose.msra.mxu0 0.0
    %1842 = vmatprep.subr.mxu0 0.0
    %1843 = vmatpush1.xpose.msra.mxu0 0.0
    %1844 = vmatprep.subr.mxu0 0.0
    %1845 = vmatpush1.xpose.msra.mxu0 0.0
    %1846 = vmatprep.subr.mxu0 0.0
    %1847 = vmatpush1.xpose.msra.mxu0 0.0
    %1848 = vmatprep.subr.mxu0 0.0
    %1849 = vmatpush1.xpose.msra.mxu0 0.0
    %1850 = vmatprep.subr.mxu0 0.0
    %1851 = vmatpush1.xpose.msra.mxu0 0.0
    %1852 = vmatprep.subr.mxu0 0.0
    %1853 = vmatpush1.xpose.msra.mxu0 0.0
    %1854 = vmatprep.subr.mxu0 0.0
    %1855 = vmatpush1.xpose.msra.mxu0 0.0
    %1856 = vmatprep.subr.mxu0 0.0
    %1857 = vmatpush1.xpose.msra.mxu0 0.0
    %1858 = vmatprep.subr.mxu0 0.0
    %1859 = vmatpush1.xpose.msra.mxu0 0.0
    %1860 = vmatprep.subr.mxu0 0.0
    %1861 = vmatpush1.xpose.msra.mxu0 0.0
    %1862 = vmatprep.subr.mxu0 0.0
    %1863 = vmatpush1.xpose.msra.mxu0 0.0
    %1864 = vmatprep.subr.mxu0 0.0
    %1865 = vmatpush1.xpose.msra.mxu0 0.0
    %1866 = vmatprep.subr.mxu0 0.0
    %1867 = vmatpush1.xpose.msra.mxu0 0.0
    %1868 = vmatprep.subr.mxu0 0.0
    %1869 = vmatpush1.xpose.msra.mxu0 0.0
    %1870 = vmatprep.subr.mxu0 0.0
    %1871 = vmatpush1.xpose.msra.mxu0 0.0
    %1872 = vmatprep.subr.mxu0 0.0
    %1873 = vmatpush1.xpose.msra.mxu0 0.0
    %1874 = vmatprep.subr.mxu0 0.0
    %1875 = vmatpush1.xpose.msra.mxu0 0.0
    %1876 = vmatprep.subr.mxu0 0.0
    %1877 = vmatpush1.xpose.msra.mxu0 0.0
    %1878 = vmatprep.subr.mxu0 0.0
    %1879 = vmatpush1.xpose.msra.mxu0 0.0
    %1880 = vmatprep.subr.mxu0 0.0
    %1881 = vmatpush1.xpose.msra.mxu0 0.0
    %1882 = vmatprep.mubr.f32.mxu0 0.0
    %1883 = vmatmul.mubr.f32.gmra.mrb[0].mxu0 %v1814
    %v1884 = vpop.f32.mrb[0].mxu0
    %v1885 = vadd.f32 0.0, %v1884
    %v1886 = vpop.f32.mrb[0].mxu0
    %1887 = vdwg.mxu0
    %v1888 = vmul.f32 %v1885, 0.35355338
    %v1889 = vsel %vm314, %v1888, -inf
    %1890 = vmax.xlane.f32.xlu0 %v1889
    %v1891 = vpop.xlane.xlu0 %1890
    %v1892 = vsub.f32 %v1888, %v1891
    %v1893 = vmul.f32 %v1892, 1.442695
    %v1894 = vpow.pop %v1893
    %v1895 = vsel %vm314, %v1894, 0.0
    %1896 = vadd.xlane.f32.xlu0 %v1895
    %v1897 = vpop.xlane.xlu0 %1896
    %v1898 = vrcp.pop %v1897
    %v1899 = vmul.f32 %v1894, %v1898
    %1900 = vrot.lane.b32.xlu0 %v1808, 64
    %v1901 = vpop.permute.xlu0 %1900
    %v1903 = vsel %vm328, %v1899, 0
    %v1905 = vsel %vm332, %v1901, 0
    %1907 = vmatprep.subr.mxu0 0.0
    %1908 = vmatpush1.msra.mxu0 %v1905
    %1909 = vmatprep.subr.mxu0 0.0
    %1910 = vmatpush1.msra.mxu0 0.0
    %1911 = vmatprep.subr.mxu0 0.0
    %1912 = vmatpush1.msra.mxu0 0.0
    %1913 = vmatprep.subr.mxu0 0.0
    %1914 = vmatpush1.msra.mxu0 0.0
    %1915 = vmatprep.subr.mxu0 0.0
    %1916 = vmatpush1.msra.mxu0 0.0
    %1917 = vmatprep.subr.mxu0 0.0
    %1918 = vmatpush1.msra.mxu0 0.0
    %1919 = vmatprep.subr.mxu0 0.0
    %1920 = vmatpush1.msra.mxu0 0.0
    %1921 = vmatprep.subr.mxu0 0.0
    %1922 = vmatpush1.msra.mxu0 0.0
    %1923 = vmatprep.subr.mxu0 0.0
    %1924 = vmatpush1.msra.mxu0 0.0
    %1925 = vmatprep.subr.mxu0 0.0
    %1926 = vmatpush1.msra.mxu0 0.0
    %1927 = vmatprep.subr.mxu0 0.0
    %1928 = vmatpush1.msra.mxu0 0.0
    %1929 = vmatprep.subr.mxu0 0.0
    %1930 = vmatpush1.msra.mxu0 0.0
    %1931 = vmatprep.subr.mxu0 0.0
    %1932 = vmatpush1.msra.mxu0 0.0
    %1933 = vmatprep.subr.mxu0 0.0
    %1934 = vmatpush1.msra.mxu0 0.0
    %1935 = vmatprep.subr.mxu0 0.0
    %1936 = vmatpush1.msra.mxu0 0.0
    %1937 = vmatprep.subr.mxu0 0.0
    %1938 = vmatpush1.msra.mxu0 0.0
    %1939 = vmatprep.subr.mxu0 0.0
    %1940 = vmatpush1.msra.mxu0 0.0
    %1941 = vmatprep.subr.mxu0 0.0
    %1942 = vmatpush1.msra.mxu0 0.0
    %1943 = vmatprep.subr.mxu0 0.0
    %1944 = vmatpush1.msra.mxu0 0.0
    %1945 = vmatprep.subr.mxu0 0.0
    %1946 = vmatpush1.msra.mxu0 0.0
    %1947 = vmatprep.subr.mxu0 0.0
    %1948 = vmatpush1.msra.mxu0 0.0
    %1949 = vmatprep.subr.mxu0 0.0
    %1950 = vmatpush1.msra.mxu0 0.0
    %1951 = vmatprep.subr.mxu0 0.0
    %1952 = vmatpush1.msra.mxu0 0.0
    %1953 = vmatprep.subr.mxu0 0.0
    %1954 = vmatpush1.msra.mxu0 0.0
    %1955 = vmatprep.subr.mxu0 0.0
    %1956 = vmatpush1.msra.mxu0 0.0
    %1957 = vmatprep.subr.mxu0 0.0
    %1958 = vmatpush1.msra.mxu0 0.0
    %1959 = vmatprep.subr.mxu0 0.0
    %1960 = vmatpush1.msra.mxu0 0.0
    %1961 = vmatprep.subr.mxu0 0.0
    %1962 = vmatpush1.msra.mxu0 0.0
    %1963 = vmatprep.subr.mxu0 0.0
    %1964 = vmatpush1.msra.mxu0 0.0
    %1965 = vmatprep.subr.mxu0 0.0
    %1966 = vmatpush1.msra.mxu0 0.0
    %1967 = vmatprep.subr.mxu0 0.0
    %1968 = vmatpush1.msra.mxu0 0.0
    %1969 = vmatprep.subr.mxu0 0.0
    %1970 = vmatpush1.msra.mxu0 0.0
    %1971 = vmatprep.mubr.f32.mxu0 0.0
    %1972 = vmatmul.mubr.f32.gmra.mrb[0].mxu0 %v1903
    %v1973 = vpop.f32.mrb[0].mxu0
    %v1974 = vadd.f32 0.0, %v1973
    %v1975 = vpop.f32.mrb[0].mxu0
    %1976 = vdwg.mxu0
    %1977 = vst.msk [vmem:[#allocation2] sm:$0xf] %vm405, %v1974
    %1978 = vrot.lane.b32.xlu0 %v1808, 120
    %v1979 = vpop.permute.xlu0 %1978
    %1980 = vrot.lane.b32.xlu0 %v1808, 88
    %v1981 = vpop.permute.xlu0 %1980
    %v1982 = vsel %vm238, %v1979, 0
    %v1984 = vsel %vm238, %v1981, 0
    %1986 = vmatprep.subr.mxu0 0.0
    %1987 = vmatpush1.xpose.msra.mxu0 %v1984
    %1988 = vmatprep.subr.mxu0 0.0
    %1989 = vmatpush1.xpose.msra.mxu0 0.0
    %1990 = vmatprep.subr.mxu0 0.0
    %1991 = vmatpush1.xpose.msra.mxu0 0.0
    %1992 = vmatprep.subr.mxu0 0.0
    %1993 = vmatpush1.xpose.msra.mxu0 0.0
    %1994 = vmatprep.subr.mxu0 0.0
    %1995 = vmatpush1.xpose.msra.mxu0 0.0
    %1996 = vmatprep.subr.mxu0 0.0
    %1997 = vmatpush1.xpose.msra.mxu0 0.0
    %1998 = vmatprep.subr.mxu0 0.0
    %1999 = vmatpush1.xpose.msra.mxu0 0.0
    %2000 = vmatprep.subr.mxu0 0.0
    %2001 = vmatpush1.xpose.msra.mxu0 0.0
    %2002 = vmatprep.subr.mxu0 0.0
    %2003 = vmatpush1.xpose.msra.mxu0 0.0
    %2004 = vmatprep.subr.mxu0 0.0
    %2005 = vmatpush1.xpose.msra.mxu0 0.0
    %2006 = vmatprep.subr.mxu0 0.0
    %2007 = vmatpush1.xpose.msra.mxu0 0.0
    %2008 = vmatprep.subr.mxu0 0.0
    %2009 = vmatpush1.xpose.msra.mxu0 0.0
    %2010 = vmatprep.subr.mxu0 0.0
    %2011 = vmatpush1.xpose.msra.mxu0 0.0
    %2012 = vmatprep.subr.mxu0 0.0
    %2013 = vmatpush1.xpose.msra.mxu0 0.0
    %2014 = vmatprep.subr.mxu0 0.0
    %2015 = vmatpush1.xpose.msra.mxu0 0.0
    %2016 = vmatprep.subr.mxu0 0.0
    %2017 = vmatpush1.xpose.msra.mxu0 0.0
    %2018 = vmatprep.subr.mxu0 0.0
    %2019 = vmatpush1.xpose.msra.mxu0 0.0
    %2020 = vmatprep.subr.mxu0 0.0
    %2021 = vmatpush1.xpose.msra.mxu0 0.0
    %2022 = vmatprep.subr.mxu0 0.0
    %2023 = vmatpush1.xpose.msra.mxu0 0.0
    %2024 = vmatprep.subr.mxu0 0.0
    %2025 = vmatpush1.xpose.msra.mxu0 0.0
    %2026 = vmatprep.subr.mxu0 0.0
    %2027 = vmatpush1.xpose.msra.mxu0 0.0
    %2028 = vmatprep.subr.mxu0 0.0
    %2029 = vmatpush1.xpose.msra.mxu0 0.0
    %2030 = vmatprep.subr.mxu0 0.0
    %2031 = vmatpush1.xpose.msra.mxu0 0.0
    %2032 = vmatprep.subr.mxu0 0.0
    %2033 = vmatpush1.xpose.msra.mxu0 0.0
    %2034 = vmatprep.subr.mxu0 0.0
    %2035 = vmatpush1.xpose.msra.mxu0 0.0
    %2036 = vmatprep.subr.mxu0 0.0
    %2037 = vmatpush1.xpose.msra.mxu0 0.0
    %2038 = vmatprep.subr.mxu0 0.0
    %2039 = vmatpush1.xpose.msra.mxu0 0.0
    %2040 = vmatprep.subr.mxu0 0.0
    %2041 = vmatpush1.xpose.msra.mxu0 0.0
    %2042 = vmatprep.subr.mxu0 0.0
    %2043 = vmatpush1.xpose.msra.mxu0 0.0
    %2044 = vmatprep.subr.mxu0 0.0
    %2045 = vmatpush1.xpose.msra.mxu0 0.0
    %2046 = vmatprep.subr.mxu0 0.0
    %2047 = vmatpush1.xpose.msra.mxu0 0.0
    %2048 = vmatprep.subr.mxu0 0.0
    %2049 = vmatpush1.xpose.msra.mxu0 0.0
    %2050 = vmatprep.mubr.f32.mxu0 0.0
    %2051 = vmatmul.mubr.f32.gmra.mrb[0].mxu0 %v1982
    %v2052 = vpop.f32.mrb[0].mxu0
    %v2053 = vadd.f32 0.0, %v2052
    %v2054 = vpop.f32.mrb[0].mxu0
    %2055 = vdwg.mxu0
    %v2056 = vmul.f32 %v2053, 0.35355338
    %v2057 = vsel %vm314, %v2056, -inf
    %2058 = vmax.xlane.f32.xlu0 %v2057
    %v2059 = vpop.xlane.xlu0 %2058
    %v2060 = vsub.f32 %v2056, %v2059
    %v2061 = vmul.f32 %v2060, 1.442695
    %v2062 = vpow.pop %v2061
    %v2063 = vsel %vm314, %v2062, 0.0
    %2064 = vadd.xlane.f32.xlu0 %v2063
    %v2065 = vpop.xlane.xlu0 %2064
    %v2066 = vrcp.pop %v2065
    %v2067 = vmul.f32 %v2062, %v2066
    %2068 = vrot.lane.b32.xlu0 %v1808, 56
    %v2069 = vpop.permute.xlu0 %2068
    %v2071 = vsel %vm328, %v2067, 0
    %v2073 = vsel %vm332, %v2069, 0
    %2075 = vmatprep.subr.mxu0 0.0
    %2076 = vmatpush1.msra.mxu0 %v2073
    %2077 = vmatprep.subr.mxu0 0.0
    %2078 = vmatpush1.msra.mxu0 0.0
    %2079 = vmatprep.subr.mxu0 0.0
    %2080 = vmatpush1.msra.mxu0 0.0
    %2081 = vmatprep.subr.mxu0 0.0
    %2082 = vmatpush1.msra.mxu0 0.0
    %2083 = vmatprep.subr.mxu0 0.0
    %2084 = vmatpush1.msra.mxu0 0.0
    %2085 = vmatprep.subr.mxu0 0.0
    %2086 = vmatpush1.msra.mxu0 0.0
    %2087 = vmatprep.subr.mxu0 0.0
    %2088 = vmatpush1.msra.mxu0 0.0
    %2089 = vmatprep.subr.mxu0 0.0
    %2090 = vmatpush1.msra.mxu0 0.0
    %2091 = vmatprep.subr.mxu0 0.0
    %2092 = vmatpush1.msra.mxu0 0.0
    %2093 = vmatprep.subr.mxu0 0.0
    %2094 = vmatpush1.msra.mxu0 0.0
    %2095 = vmatprep.subr.mxu0 0.0
    %2096 = vmatpush1.msra.mxu0 0.0
    %2097 = vmatprep.subr.mxu0 0.0
    %2098 = vmatpush1.msra.mxu0 0.0
    %2099 = vmatprep.subr.mxu0 0.0
    %2100 = vmatpush1.msra.mxu0 0.0
    %2101 = vmatprep.subr.mxu0 0.0
    %2102 = vmatpush1.msra.mxu0 0.0
    %2103 = vmatprep.subr.mxu0 0.0
    %2104 = vmatpush1.msra.mxu0 0.0
    %2105 = vmatprep.subr.mxu0 0.0
    %2106 = vmatpush1.msra.mxu0 0.0
    %2107 = vmatprep.subr.mxu0 0.0
    %2108 = vmatpush1.msra.mxu0 0.0
    %2109 = vmatprep.subr.mxu0 0.0
    %2110 = vmatpush1.msra.mxu0 0.0
    %2111 = vmatprep.subr.mxu0 0.0
    %2112 = vmatpush1.msra.mxu0 0.0
    %2113 = vmatprep.subr.mxu0 0.0
    %2114 = vmatpush1.msra.mxu0 0.0
    %2115 = vmatprep.subr.mxu0 0.0
    %2116 = vmatpush1.msra.mxu0 0.0
    %2117 = vmatprep.subr.mxu0 0.0
    %2118 = vmatpush1.msra.mxu0 0.0
    %2119 = vmatprep.subr.mxu0 0.0
    %2120 = vmatpush1.msra.mxu0 0.0
    %2121 = vmatprep.subr.mxu0 0.0
    %2122 = vmatpush1.msra.mxu0 0.0
    %2123 = vmatprep.subr.mxu0 0.0
    %2124 = vmatpush1.msra.mxu0 0.0
    %2125 = vmatprep.subr.mxu0 0.0
    %2126 = vmatpush1.msra.mxu0 0.0
    %2127 = vmatprep.subr.mxu0 0.0
    %2128 = vmatpush1.msra.mxu0 0.0
    %2129 = vmatprep.subr.mxu0 0.0
    %2130 = vmatpush1.msra.mxu0 0.0
    %2131 = vmatprep.subr.mxu0 0.0
    %2132 = vmatpush1.msra.mxu0 0.0
    %2133 = vmatprep.subr.mxu0 0.0
    %2134 = vmatpush1.msra.mxu0 0.0
    %2135 = vmatprep.subr.mxu0 0.0
    %2136 = vmatpush1.msra.mxu0 0.0
    %2137 = vmatprep.subr.mxu0 0.0
    %2138 = vmatpush1.msra.mxu0 0.0
    %2139 = vmatprep.mubr.f32.mxu0 0.0
    %2140 = vmatmul.mubr.f32.gmra.mrb[0].mxu0 %v2071
    %v2141 = vpop.f32.mrb[0].mxu0
    %v2142 = vadd.f32 0.0, %v2141
    %v2143 = vpop.f32.mrb[0].mxu0
    %2144 = vdwg.mxu0
    %2146 = vrot.lane.b32.xlu0 %v2142, 8
    %v2147 = vpop.permute.xlu0 %2146
    %2149 = vst.msk [vmem:[#allocation2] sm:$0xf] %vm578, %v2147
    %2150 = vrot.lane.b32.xlu0 %v1808, 112
    %v2151 = vpop.permute.xlu0 %2150
    %2152 = vrot.lane.b32.xlu0 %v1808, 80
    %v2153 = vpop.permute.xlu0 %2152
    %v2154 = vsel %vm238, %v2151, 0
    %v2156 = vsel %vm238, %v2153, 0
    %2158 = vmatprep.subr.mxu0 0.0
    %2159 = vmatpush1.xpose.msra.mxu0 %v2156
    %2160 = vmatprep.subr.mxu0 0.0
    %2161 = vmatpush1.xpose.msra.mxu0 0.0
    %2162 = vmatprep.subr.mxu0 0.0
    %2163 = vmatpush1.xpose.msra.mxu0 0.0
    %2164 = vmatprep.subr.mxu0 0.0
    %2165 = vmatpush1.xpose.msra.mxu0 0.0
    %2166 = vmatprep.subr.mxu0 0.0
    %2167 = vmatpush1.xpose.msra.mxu0 0.0
    %2168 = vmatprep.subr.mxu0 0.0
    %2169 = vmatpush1.xpose.msra.mxu0 0.0
    %2170 = vmatprep.subr.mxu0 0.0
    %2171 = vmatpush1.xpose.msra.mxu0 0.0
    %2172 = vmatprep.subr.mxu0 0.0
    %2173 = vmatpush1.xpose.msra.mxu0 0.0
    %2174 = vmatprep.subr.mxu0 0.0
    %2175 = vmatpush1.xpose.msra.mxu0 0.0
    %2176 = vmatprep.subr.mxu0 0.0
    %2177 = vmatpush1.xpose.msra.mxu0 0.0
    %2178 = vmatprep.subr.mxu0 0.0
    %2179 = vmatpush1.xpose.msra.mxu0 0.0
    %2180 = vmatprep.subr.mxu0 0.0
    %2181 = vmatpush1.xpose.msra.mxu0 0.0
    %2182 = vmatprep.subr.mxu0 0.0
    %2183 = vmatpush1.xpose.msra.mxu0 0.0
    %2184 = vmatprep.subr.mxu0 0.0
    %2185 = vmatpush1.xpose.msra.mxu0 0.0
    %2186 = vmatprep.subr.mxu0 0.0
    %2187 = vmatpush1.xpose.msra.mxu0 0.0
    %2188 = vmatprep.subr.mxu0 0.0
    %2189 = vmatpush1.xpose.msra.mxu0 0.0
    %2190 = vmatprep.subr.mxu0 0.0
    %2191 = vmatpush1.xpose.msra.mxu0 0.0
    %2192 = vmatprep.subr.mxu0 0.0
    %2193 = vmatpush1.xpose.msra.mxu0 0.0
    %2194 = vmatprep.subr.mxu0 0.0
    %2195 = vmatpush1.xpose.msra.mxu0 0.0
    %2196 = vmatprep.subr.mxu0 0.0
    %2197 = vmatpush1.xpose.msra.mxu0 0.0
    %2198 = vmatprep.subr.mxu0 0.0
    %2199 = vmatpush1.xpose.msra.mxu0 0.0
    %2200 = vmatprep.subr.mxu0 0.0
    %2201 = vmatpush1.xpose.msra.mxu0 0.0
    %2202 = vmatprep.subr.mxu0 0.0
    %2203 = vmatpush1.xpose.msra.mxu0 0.0
    %2204 = vmatprep.subr.mxu0 0.0
    %2205 = vmatpush1.xpose.msra.mxu0 0.0
    %2206 = vmatprep.subr.mxu0 0.0
    %2207 = vmatpush1.xpose.msra.mxu0 0.0
    %2208 = vmatprep.subr.mxu0 0.0
    %2209 = vmatpush1.xpose.msra.mxu0 0.0
    %2210 = vmatprep.subr.mxu0 0.0
    %2211 = vmatpush1.xpose.msra.mxu0 0.0
    %2212 = vmatprep.subr.mxu0 0.0
    %2213 = vmatpush1.xpose.msra.mxu0 0.0
    %2214 = vmatprep.subr.mxu0 0.0
    %2215 = vmatpush1.xpose.msra.mxu0 0.0
    %2216 = vmatprep.subr.mxu0 0.0
    %2217 = vmatpush1.xpose.msra.mxu0 0.0
    %2218 = vmatprep.subr.mxu0 0.0
    %2219 = vmatpush1.xpose.msra.mxu0 0.0
    %2220 = vmatprep.subr.mxu0 0.0
    %2221 = vmatpush1.xpose.msra.mxu0 0.0
    %2222 = vmatprep.mubr.f32.mxu0 0.0
    %2223 = vmatmul.mubr.f32.gmra.mrb[0].mxu0 %v2154
    %v2224 = vpop.f32.mrb[0].mxu0
    %v2225 = vadd.f32 0.0, %v2224
    %v2226 = vpop.f32.mrb[0].mxu0
    %2227 = vdwg.mxu0
    %v2228 = vmul.f32 %v2225, 0.35355338
    %v2229 = vsel %vm314, %v2228, -inf
    %2230 = vmax.xlane.f32.xlu0 %v2229
    %v2231 = vpop.xlane.xlu0 %2230
    %v2232 = vsub.f32 %v2228, %v2231
    %v2233 = vmul.f32 %v2232, 1.442695
    %v2234 = vpow.pop %v2233
    %v2235 = vsel %vm314, %v2234, 0.0
    %2236 = vadd.xlane.f32.xlu0 %v2235
    %v2237 = vpop.xlane.xlu0 %2236
    %v2238 = vrcp.pop %v2237
    %v2239 = vmul.f32 %v2234, %v2238
    %2240 = vrot.lane.b32.xlu0 %v1808, 48
    %v2241 = vpop.permute.xlu0 %2240
    %v2243 = vsel %vm328, %v2239, 0
    %v2245 = vsel %vm332, %v2241, 0
    %2247 = vmatprep.subr.mxu0 0.0
    %2248 = vmatpush1.msra.mxu0 %v2245
    %2249 = vmatprep.subr.mxu0 0.0
    %2250 = vmatpush1.msra.mxu0 0.0
    %2251 = vmatprep.subr.mxu0 0.0
    %2252 = vmatpush1.msra.mxu0 0.0
    %2253 = vmatprep.subr.mxu0 0.0
    %2254 = vmatpush1.msra.mxu0 0.0
    %2255 = vmatprep.subr.mxu0 0.0
    %2256 = vmatpush1.msra.mxu0 0.0
    %2257 = vmatprep.subr.mxu0 0.0
    %2258 = vmatpush1.msra.mxu0 0.0
    %2259 = vmatprep.subr.mxu0 0.0
    %2260 = vmatpush1.msra.mxu0 0.0
    %2261 = vmatprep.subr.mxu0 0.0
    %2262 = vmatpush1.msra.mxu0 0.0
    %2263 = vmatprep.subr.mxu0 0.0
    %2264 = vmatpush1.msra.mxu0 0.0
    %2265 = vmatprep.subr.mxu0 0.0
    %2266 = vmatpush1.msra.mxu0 0.0
    %2267 = vmatprep.subr.mxu0 0.0
    %2268 = vmatpush1.msra.mxu0 0.0
    %2269 = vmatprep.subr.mxu0 0.0
    %2270 = vmatpush1.msra.mxu0 0.0
    %2271 = vmatprep.subr.mxu0 0.0
    %2272 = vmatpush1.msra.mxu0 0.0
    %2273 = vmatprep.subr.mxu0 0.0
    %2274 = vmatpush1.msra.mxu0 0.0
    %2275 = vmatprep.subr.mxu0 0.0
    %2276 = vmatpush1.msra.mxu0 0.0
    %2277 = vmatprep.subr.mxu0 0.0
    %2278 = vmatpush1.msra.mxu0 0.0
    %2279 = vmatprep.subr.mxu0 0.0
    %2280 = vmatpush1.msra.mxu0 0.0
    %2281 = vmatprep.subr.mxu0 0.0
    %2282 = vmatpush1.msra.mxu0 0.0
    %2283 = vmatprep.subr.mxu0 0.0
    %2284 = vmatpush1.msra.mxu0 0.0
    %2285 = vmatprep.subr.mxu0 0.0
    %2286 = vmatpush1.msra.mxu0 0.0
    %2287 = vmatprep.subr.mxu0 0.0
    %2288 = vmatpush1.msra.mxu0 0.0
    %2289 = vmatprep.subr.mxu0 0.0
    %2290 = vmatpush1.msra.mxu0 0.0
    %2291 = vmatprep.subr.mxu0 0.0
    %2292 = vmatpush1.msra.mxu0 0.0
    %2293 = vmatprep.subr.mxu0 0.0
    %2294 = vmatpush1.msra.mxu0 0.0
    %2295 = vmatprep.subr.mxu0 0.0
    %2296 = vmatpush1.msra.mxu0 0.0
    %2297 = vmatprep.subr.mxu0 0.0
    %2298 = vmatpush1.msra.mxu0 0.0
    %2299 = vmatprep.subr.mxu0 0.0
    %2300 = vmatpush1.msra.mxu0 0.0
    %2301 = vmatprep.subr.mxu0 0.0
    %2302 = vmatpush1.msra.mxu0 0.0
    %2303 = vmatprep.subr.mxu0 0.0
    %2304 = vmatpush1.msra.mxu0 0.0
    %2305 = vmatprep.subr.mxu0 0.0
    %2306 = vmatpush1.msra.mxu0 0.0
    %2307 = vmatprep.subr.mxu0 0.0
    %2308 = vmatpush1.msra.mxu0 0.0
    %2309 = vmatprep.subr.mxu0 0.0
    %2310 = vmatpush1.msra.mxu0 0.0
    %2311 = vmatprep.mubr.f32.mxu0 0.0
    %2312 = vmatmul.mubr.f32.gmra.mrb[0].mxu0 %v2243
    %v2313 = vpop.f32.mrb[0].mxu0
    %v2314 = vadd.f32 0.0, %v2313
    %v2315 = vpop.f32.mrb[0].mxu0
    %2316 = vdwg.mxu0
    %2318 = vrot.lane.b32.xlu0 %v2314, 16
    %v2319 = vpop.permute.xlu0 %2318
    %2321 = vst.msk [vmem:[#allocation2] sm:$0xf] %vm751, %v2319
    %2322 = vrot.lane.b32.xlu0 %v1808, 104
    %v2323 = vpop.permute.xlu0 %2322
    %2324 = vrot.lane.b32.xlu0 %v1808, 72
    %v2325 = vpop.permute.xlu0 %2324
    %v2326 = vsel %vm238, %v2323, 0
    %v2328 = vsel %vm238, %v2325, 0
    %2330 = vmatprep.subr.mxu0 0.0
    %2331 = vmatpush1.xpose.msra.mxu0 %v2328
    %2332 = vmatprep.subr.mxu0 0.0
    %2333 = vmatpush1.xpose.msra.mxu0 0.0
    %2334 = vmatprep.subr.mxu0 0.0
    %2335 = vmatpush1.xpose.msra.mxu0 0.0
    %2336 = vmatprep.subr.mxu0 0.0
    %2337 = vmatpush1.xpose.msra.mxu0 0.0
    %2338 = vmatprep.subr.mxu0 0.0
    %2339 = vmatpush1.xpose.msra.mxu0 0.0
    %2340 = vmatprep.subr.mxu0 0.0
    %2341 = vmatpush1.xpose.msra.mxu0 0.0
    %2342 = vmatprep.subr.mxu0 0.0
    %2343 = vmatpush1.xpose.msra.mxu0 0.0
    %2344 = vmatprep.subr.mxu0 0.0
    %2345 = vmatpush1.xpose.msra.mxu0 0.0
    %2346 = vmatprep.subr.mxu0 0.0
    %2347 = vmatpush1.xpose.msra.mxu0 0.0
    %2348 = vmatprep.subr.mxu0 0.0
    %2349 = vmatpush1.xpose.msra.mxu0 0.0
    %2350 = vmatprep.subr.mxu0 0.0
    %2351 = vmatpush1.xpose.msra.mxu0 0.0
    %2352 = vmatprep.subr.mxu0 0.0
    %2353 = vmatpush1.xpose.msra.mxu0 0.0
    %2354 = vmatprep.subr.mxu0 0.0
    %2355 = vmatpush1.xpose.msra.mxu0 0.0
    %2356 = vmatprep.subr.mxu0 0.0
    %2357 = vmatpush1.xpose.msra.mxu0 0.0
    %2358 = vmatprep.subr.mxu0 0.0
    %2359 = vmatpush1.xpose.msra.mxu0 0.0
    %2360 = vmatprep.subr.mxu0 0.0
    %2361 = vmatpush1.xpose.msra.mxu0 0.0
    %2362 = vmatprep.subr.mxu0 0.0
    %2363 = vmatpush1.xpose.msra.mxu0 0.0
    %2364 = vmatprep.subr.mxu0 0.0
    %2365 = vmatpush1.xpose.msra.mxu0 0.0
    %2366 = vmatprep.subr.mxu0 0.0
    %2367 = vmatpush1.xpose.msra.mxu0 0.0
    %2368 = vmatprep.subr.mxu0 0.0
    %2369 = vmatpush1.xpose.msra.mxu0 0.0
    %2370 = vmatprep.subr.mxu0 0.0
    %2371 = vmatpush1.xpose.msra.mxu0 0.0
    %2372 = vmatprep.subr.mxu0 0.0
    %2373 = vmatpush1.xpose.msra.mxu0 0.0
    %2374 = vmatprep.subr.mxu0 0.0
    %2375 = vmatpush1.xpose.msra.mxu0 0.0
    %2376 = vmatprep.subr.mxu0 0.0
    %2377 = vmatpush1.xpose.msra.mxu0 0.0
    %2378 = vmatprep.subr.mxu0 0.0
    %2379 = vmatpush1.xpose.msra.mxu0 0.0
    %2380 = vmatprep.subr.mxu0 0.0
    %2381 = vmatpush1.xpose.msra.mxu0 0.0
    %2382 = vmatprep.subr.mxu0 0.0
    %2383 = vmatpush1.xpose.msra.mxu0 0.0
    %2384 = vmatprep.subr.mxu0 0.0
    %2385 = vmatpush1.xpose.msra.mxu0 0.0
    %2386 = vmatprep.subr.mxu0 0.0
    %2387 = vmatpush1.xpose.msra.mxu0 0.0
    %2388 = vmatprep.subr.mxu0 0.0
    %2389 = vmatpush1.xpose.msra.mxu0 0.0
    %2390 = vmatprep.subr.mxu0 0.0
    %2391 = vmatpush1.xpose.msra.mxu0 0.0
    %2392 = vmatprep.subr.mxu0 0.0
    %2393 = vmatpush1.xpose.msra.mxu0 0.0
    %2394 = vmatprep.mubr.f32.mxu0 0.0
    %2395 = vmatmul.mubr.f32.gmra.mrb[0].mxu0 %v2326
    %v2396 = vpop.f32.mrb[0].mxu0
    %v2397 = vadd.f32 0.0, %v2396
    %v2398 = vpop.f32.mrb[0].mxu0
    %2399 = vdwg.mxu0
    %v2400 = vmul.f32 %v2397, 0.35355338
    %v2401 = vsel %vm314, %v2400, -inf
    %2402 = vmax.xlane.f32.xlu0 %v2401
    %v2403 = vpop.xlane.xlu0 %2402
    %v2404 = vsub.f32 %v2400, %v2403
    %v2405 = vmul.f32 %v2404, 1.442695
    %v2406 = vpow.pop %v2405
    %v2407 = vsel %vm314, %v2406, 0.0
    %2408 = vadd.xlane.f32.xlu0 %v2407
    %v2409 = vpop.xlane.xlu0 %2408
    %v2410 = vrcp.pop %v2409
    %v2411 = vmul.f32 %v2406, %v2410
    %2412 = vrot.lane.b32.xlu0 %v1808, 40
    %v2413 = vpop.permute.xlu0 %2412
    %v2415 = vsel %vm328, %v2411, 0
    %v2417 = vsel %vm332, %v2413, 0
    %2419 = vmatprep.subr.mxu0 0.0
    %2420 = vmatpush1.msra.mxu0 %v2417
    %2421 = vmatprep.subr.mxu0 0.0
    %2422 = vmatpush1.msra.mxu0 0.0
    %2423 = vmatprep.subr.mxu0 0.0
    %2424 = vmatpush1.msra.mxu0 0.0
    %2425 = vmatprep.subr.mxu0 0.0
    %2426 = vmatpush1.msra.mxu0 0.0
    %2427 = vmatprep.subr.mxu0 0.0
    %2428 = vmatpush1.msra.mxu0 0.0
    %2429 = vmatprep.subr.mxu0 0.0
    %2430 = vmatpush1.msra.mxu0 0.0
    %2431 = vmatprep.subr.mxu0 0.0
    %2432 = vmatpush1.msra.mxu0 0.0
    %2433 = vmatprep.subr.mxu0 0.0
    %2434 = vmatpush1.msra.mxu0 0.0
    %2435 = vmatprep.subr.mxu0 0.0
    %2436 = vmatpush1.msra.mxu0 0.0
    %2437 = vmatprep.subr.mxu0 0.0
    %2438 = vmatpush1.msra.mxu0 0.0
    %2439 = vmatprep.subr.mxu0 0.0
    %2440 = vmatpush1.msra.mxu0 0.0
    %2441 = vmatprep.subr.mxu0 0.0
    %2442 = vmatpush1.msra.mxu0 0.0
    %2443 = vmatprep.subr.mxu0 0.0
    %2444 = vmatpush1.msra.mxu0 0.0
    %2445 = vmatprep.subr.mxu0 0.0
    %2446 = vmatpush1.msra.mxu0 0.0
    %2447 = vmatprep.subr.mxu0 0.0
    %2448 = vmatpush1.msra.mxu0 0.0
    %2449 = vmatprep.subr.mxu0 0.0
    %2450 = vmatpush1.msra.mxu0 0.0
    %2451 = vmatprep.subr.mxu0 0.0
    %2452 = vmatpush1.msra.mxu0 0.0
    %2453 = vmatprep.subr.mxu0 0.0
    %2454 = vmatpush1.msra.mxu0 0.0
    %2455 = vmatprep.subr.mxu0 0.0
    %2456 = vmatpush1.msra.mxu0 0.0
    %2457 = vmatprep.subr.mxu0 0.0
    %2458 = vmatpush1.msra.mxu0 0.0
    %2459 = vmatprep.subr.mxu0 0.0
    %2460 = vmatpush1.msra.mxu0 0.0
    %2461 = vmatprep.subr.mxu0 0.0
    %2462 = vmatpush1.msra.mxu0 0.0
    %2463 = vmatprep.subr.mxu0 0.0
    %2464 = vmatpush1.msra.mxu0 0.0
    %2465 = vmatprep.subr.mxu0 0.0
    %2466 = vmatpush1.msra.mxu0 0.0
    %2467 = vmatprep.subr.mxu0 0.0
    %2468 = vmatpush1.msra.mxu0 0.0
    %2469 = vmatprep.subr.mxu0 0.0
    %2470 = vmatpush1.msra.mxu0 0.0
    %2471 = vmatprep.subr.mxu0 0.0
    %2472 = vmatpush1.msra.mxu0 0.0
    %2473 = vmatprep.subr.mxu0 0.0
    %2474 = vmatpush1.msra.mxu0 0.0
    %2475 = vmatprep.subr.mxu0 0.0
    %2476 = vmatpush1.msra.mxu0 0.0
    %2477 = vmatprep.subr.mxu0 0.0
    %2478 = vmatpush1.msra.mxu0 0.0
    %2479 = vmatprep.subr.mxu0 0.0
    %2480 = vmatpush1.msra.mxu0 0.0
    %2481 = vmatprep.subr.mxu0 0.0
    %2482 = vmatpush1.msra.mxu0 0.0
    %2483 = vmatprep.mubr.f32.mxu0 0.0
    %2484 = vmatmul.mubr.f32.gmra.mrb[0].mxu0 %v2415
    %v2485 = vpop.f32.mrb[0].mxu0
    %v2486 = vadd.f32 0.0, %v2485
    %v2487 = vpop.f32.mrb[0].mxu0
    %2488 = vdwg.mxu0
    %2490 = vrot.lane.b32.xlu0 %v2486, 24
    %v2491 = vpop.permute.xlu0 %2490
    %2493 = vst.msk [vmem:[#allocation2] sm:$0xf] %vm924, %v2491
    %v2494 = vrot.slane %v1808, 4
    %2495 = vrot.lane.b32.xlu0 %v2494, 96
    %v2496 = vpop.permute.xlu0 %2495
    %v2497 = vsel %vm238, %v2494, 0
    %v2499 = vsel %vm238, %v2496, 0
    %2501 = vmatprep.subr.mxu0 0.0
    %2502 = vmatpush1.xpose.msra.mxu0 %v2499
    %2503 = vmatprep.subr.mxu0 0.0
    %2504 = vmatpush1.xpose.msra.mxu0 0.0
    %2505 = vmatprep.subr.mxu0 0.0
    %2506 = vmatpush1.xpose.msra.mxu0 0.0
    %2507 = vmatprep.subr.mxu0 0.0
    %2508 = vmatpush1.xpose.msra.mxu0 0.0
    %2509 = vmatprep.subr.mxu0 0.0
    %2510 = vmatpush1.xpose.msra.mxu0 0.0
    %2511 = vmatprep.subr.mxu0 0.0
    %2512 = vmatpush1.xpose.msra.mxu0 0.0
    %2513 = vmatprep.subr.mxu0 0.0
    %2514 = vmatpush1.xpose.msra.mxu0 0.0
    %2515 = vmatprep.subr.mxu0 0.0
    %2516 = vmatpush1.xpose.msra.mxu0 0.0
    %2517 = vmatprep.subr.mxu0 0.0
    %2518 = vmatpush1.xpose.msra.mxu0 0.0
    %2519 = vmatprep.subr.mxu0 0.0
    %2520 = vmatpush1.xpose.msra.mxu0 0.0
    %2521 = vmatprep.subr.mxu0 0.0
    %2522 = vmatpush1.xpose.msra.mxu0 0.0
    %2523 = vmatprep.subr.mxu0 0.0
    %2524 = vmatpush1.xpose.msra.mxu0 0.0
    %2525 = vmatprep.subr.mxu0 0.0
    %2526 = vmatpush1.xpose.msra.mxu0 0.0
    %2527 = vmatprep.subr.mxu0 0.0
    %2528 = vmatpush1.xpose.msra.mxu0 0.0
    %2529 = vmatprep.subr.mxu0 0.0
    %2530 = vmatpush1.xpose.msra.mxu0 0.0
    %2531 = vmatprep.subr.mxu0 0.0
    %2532 = vmatpush1.xpose.msra.mxu0 0.0
    %2533 = vmatprep.subr.mxu0 0.0
    %2534 = vmatpush1.xpose.msra.mxu0 0.0
    %2535 = vmatprep.subr.mxu0 0.0
    %2536 = vmatpush1.xpose.msra.mxu0 0.0
    %2537 = vmatprep.subr.mxu0 0.0
    %2538 = vmatpush1.xpose.msra.mxu0 0.0
    %2539 = vmatprep.subr.mxu0 0.0
    %2540 = vmatpush1.xpose.msra.mxu0 0.0
    %2541 = vmatprep.subr.mxu0 0.0
    %2542 = vmatpush1.xpose.msra.mxu0 0.0
    %2543 = vmatprep.subr.mxu0 0.0
    %2544 = vmatpush1.xpose.msra.mxu0 0.0
    %2545 = vmatprep.subr.mxu0 0.0
    %2546 = vmatpush1.xpose.msra.mxu0 0.0
    %2547 = vmatprep.subr.mxu0 0.0
    %2548 = vmatpush1.xpose.msra.mxu0 0.0
    %2549 = vmatprep.subr.mxu0 0.0
    %2550 = vmatpush1.xpose.msra.mxu0 0.0
    %2551 = vmatprep.subr.mxu0 0.0
    %2552 = vmatpush1.xpose.msra.mxu0 0.0
    %2553 = vmatprep.subr.mxu0 0.0
    %2554 = vmatpush1.xpose.msra.mxu0 0.0
    %2555 = vmatprep.subr.mxu0 0.0
    %2556 = vmatpush1.xpose.msra.mxu0 0.0
    %2557 = vmatprep.subr.mxu0 0.0
    %2558 = vmatpush1.xpose.msra.mxu0 0.0
    %2559 = vmatprep.subr.mxu0 0.0
    %2560 = vmatpush1.xpose.msra.mxu0 0.0
    %2561 = vmatprep.subr.mxu0 0.0
    %2562 = vmatpush1.xpose.msra.mxu0 0.0
    %2563 = vmatprep.subr.mxu0 0.0
    %2564 = vmatpush1.xpose.msra.mxu0 0.0
    %2565 = vmatprep.mubr.f32.mxu0 0.0
    %2566 = vmatmul.mubr.f32.gmra.mrb[0].mxu0 %v2497
    %v2567 = vpop.f32.mrb[0].mxu0
    %v2568 = vadd.f32 0.0, %v2567
    %v2569 = vpop.f32.mrb[0].mxu0
    %2570 = vdwg.mxu0
    %v2571 = vmul.f32 %v2568, 0.35355338
    %v2572 = vsel %vm314, %v2571, -inf
    %2573 = vmax.xlane.f32.xlu0 %v2572
    %v2574 = vpop.xlane.xlu0 %2573
    %v2575 = vsub.f32 %v2571, %v2574
    %v2576 = vmul.f32 %v2575, 1.442695
    %v2577 = vpow.pop %v2576
    %v2578 = vsel %vm314, %v2577, 0.0
    %2579 = vadd.xlane.f32.xlu0 %v2578
    %v2580 = vpop.xlane.xlu0 %2579
    %v2581 = vrcp.pop %v2580
    %v2582 = vmul.f32 %v2577, %v2581
    %2583 = vrot.lane.b32.xlu0 %v2494, 64
    %v2584 = vpop.permute.xlu0 %2583
    %v2586 = vsel %vm328, %v2582, 0
    %v2588 = vsel %vm332, %v2584, 0
    %2590 = vmatprep.subr.mxu0 0.0
    %2591 = vmatpush1.msra.mxu0 %v2588
    %2592 = vmatprep.subr.mxu0 0.0
    %2593 = vmatpush1.msra.mxu0 0.0
    %2594 = vmatprep.subr.mxu0 0.0
    %2595 = vmatpush1.msra.mxu0 0.0
    %2596 = vmatprep.subr.mxu0 0.0
    %2597 = vmatpush1.msra.mxu0 0.0
    %2598 = vmatprep.subr.mxu0 0.0
    %2599 = vmatpush1.msra.mxu0 0.0
    %2600 = vmatprep.subr.mxu0 0.0
    %2601 = vmatpush1.msra.mxu0 0.0
    %2602 = vmatprep.subr.mxu0 0.0
    %2603 = vmatpush1.msra.mxu0 0.0
    %2604 = vmatprep.subr.mxu0 0.0
    %2605 = vmatpush1.msra.mxu0 0.0
    %2606 = vmatprep.subr.mxu0 0.0
    %2607 = vmatpush1.msra.mxu0 0.0
    %2608 = vmatprep.subr.mxu0 0.0
    %2609 = vmatpush1.msra.mxu0 0.0
    %2610 = vmatprep.subr.mxu0 0.0
    %2611 = vmatpush1.msra.mxu0 0.0
    %2612 = vmatprep.subr.mxu0 0.0
    %2613 = vmatpush1.msra.mxu0 0.0
    %2614 = vmatprep.subr.mxu0 0.0
    %2615 = vmatpush1.msra.mxu0 0.0
    %2616 = vmatprep.subr.mxu0 0.0
    %2617 = vmatpush1.msra.mxu0 0.0
    %2618 = vmatprep.subr.mxu0 0.0
    %2619 = vmatpush1.msra.mxu0 0.0
    %2620 = vmatprep.subr.mxu0 0.0
    %2621 = vmatpush1.msra.mxu0 0.0
    %2622 = vmatprep.subr.mxu0 0.0
    %2623 = vmatpush1.msra.mxu0 0.0
    %2624 = vmatprep.subr.mxu0 0.0
    %2625 = vmatpush1.msra.mxu0 0.0
    %2626 = vmatprep.subr.mxu0 0.0
    %2627 = vmatpush1.msra.mxu0 0.0
    %2628 = vmatprep.subr.mxu0 0.0
    %2629 = vmatpush1.msra.mxu0 0.0
    %2630 = vmatprep.subr.mxu0 0.0
    %2631 = vmatpush1.msra.mxu0 0.0
    %2632 = vmatprep.subr.mxu0 0.0
    %2633 = vmatpush1.msra.mxu0 0.0
    %2634 = vmatprep.subr.mxu0 0.0
    %2635 = vmatpush1.msra.mxu0 0.0
    %2636 = vmatprep.subr.mxu0 0.0
    %2637 = vmatpush1.msra.mxu0 0.0
    %2638 = vmatprep.subr.mxu0 0.0
    %2639 = vmatpush1.msra.mxu0 0.0
    %2640 = vmatprep.subr.mxu0 0.0
    %2641 = vmatpush1.msra.mxu0 0.0
    %2642 = vmatprep.subr.mxu0 0.0
    %2643 = vmatpush1.msra.mxu0 0.0
    %2644 = vmatprep.subr.mxu0 0.0
    %2645 = vmatpush1.msra.mxu0 0.0
    %2646 = vmatprep.subr.mxu0 0.0
    %2647 = vmatpush1.msra.mxu0 0.0
    %2648 = vmatprep.subr.mxu0 0.0
    %2649 = vmatpush1.msra.mxu0 0.0
    %2650 = vmatprep.subr.mxu0 0.0
    %2651 = vmatpush1.msra.mxu0 0.0
    %2652 = vmatprep.subr.mxu0 0.0
    %2653 = vmatpush1.msra.mxu0 0.0
    %2654 = vmatprep.mubr.f32.mxu0 0.0
    %2655 = vmatmul.mubr.f32.gmra.mrb[0].mxu0 %v2586
    %v2656 = vpop.f32.mrb[0].mxu0
    %v2657 = vadd.f32 0.0, %v2656
    %v2658 = vpop.f32.mrb[0].mxu0
    %2659 = vdwg.mxu0
    %2660 = vst.msk [vmem:[#allocation2 + $0x4] sm:$0xf] %vm405, %v2657
    %2661 = vrot.lane.b32.xlu0 %v2494, 120
    %v2662 = vpop.permute.xlu0 %2661
    %2663 = vrot.lane.b32.xlu0 %v2494, 88
    %v2664 = vpop.permute.xlu0 %2663
    %v2665 = vsel %vm238, %v2662, 0
    %v2667 = vsel %vm238, %v2664, 0
    %2669 = vmatprep.subr.mxu0 0.0
    %2670 = vmatpush1.xpose.msra.mxu0 %v2667
    %2671 = vmatprep.subr.mxu0 0.0
    %2672 = vmatpush1.xpose.msra.mxu0 0.0
    %2673 = vmatprep.subr.mxu0 0.0
    %2674 = vmatpush1.xpose.msra.mxu0 0.0
    %2675 = vmatprep.subr.mxu0 0.0
    %2676 = vmatpush1.xpose.msra.mxu0 0.0
    %2677 = vmatprep.subr.mxu0 0.0
    %2678 = vmatpush1.xpose.msra.mxu0 0.0
    %2679 = vmatprep.subr.mxu0 0.0
    %2680 = vmatpush1.xpose.msra.mxu0 0.0
    %2681 = vmatprep.subr.mxu0 0.0
    %2682 = vmatpush1.xpose.msra.mxu0 0.0
    %2683 = vmatprep.subr.mxu0 0.0
    %2684 = vmatpush1.xpose.msra.mxu0 0.0
    %2685 = vmatprep.subr.mxu0 0.0
    %2686 = vmatpush1.xpose.msra.mxu0 0.0
    %2687 = vmatprep.subr.mxu0 0.0
    %2688 = vmatpush1.xpose.msra.mxu0 0.0
    %2689 = vmatprep.subr.mxu0 0.0
    %2690 = vmatpush1.xpose.msra.mxu0 0.0
    %2691 = vmatprep.subr.mxu0 0.0
    %2692 = vmatpush1.xpose.msra.mxu0 0.0
    %2693 = vmatprep.subr.mxu0 0.0
    %2694 = vmatpush1.xpose.msra.mxu0 0.0
    %2695 = vmatprep.subr.mxu0 0.0
    %2696 = vmatpush1.xpose.msra.mxu0 0.0
    %2697 = vmatprep.subr.mxu0 0.0
    %2698 = vmatpush1.xpose.msra.mxu0 0.0
    %2699 = vmatprep.subr.mxu0 0.0
    %2700 = vmatpush1.xpose.msra.mxu0 0.0
    %2701 = vmatprep.subr.mxu0 0.0
    %2702 = vmatpush1.xpose.msra.mxu0 0.0
    %2703 = vmatprep.subr.mxu0 0.0
    %2704 = vmatpush1.xpose.msra.mxu0 0.0
    %2705 = vmatprep.subr.mxu0 0.0
    %2706 = vmatpush1.xpose.msra.mxu0 0.0
    %2707 = vmatprep.subr.mxu0 0.0
    %2708 = vmatpush1.xpose.msra.mxu0 0.0
    %2709 = vmatprep.subr.mxu0 0.0
    %2710 = vmatpush1.xpose.msra.mxu0 0.0
    %2711 = vmatprep.subr.mxu0 0.0
    %2712 = vmatpush1.xpose.msra.mxu0 0.0
    %2713 = vmatprep.subr.mxu0 0.0
    %2714 = vmatpush1.xpose.msra.mxu0 0.0
    %2715 = vmatprep.subr.mxu0 0.0
    %2716 = vmatpush1.xpose.msra.mxu0 0.0
    %2717 = vmatprep.subr.mxu0 0.0
    %2718 = vmatpush1.xpose.msra.mxu0 0.0
    %2719 = vmatprep.subr.mxu0 0.0
    %2720 = vmatpush1.xpose.msra.mxu0 0.0
    %2721 = vmatprep.subr.mxu0 0.0
    %2722 = vmatpush1.xpose.msra.mxu0 0.0
    %2723 = vmatprep.subr.mxu0 0.0
    %2724 = vmatpush1.xpose.msra.mxu0 0.0
    %2725 = vmatprep.subr.mxu0 0.0
    %2726 = vmatpush1.xpose.msra.mxu0 0.0
    %2727 = vmatprep.subr.mxu0 0.0
    %2728 = vmatpush1.xpose.msra.mxu0 0.0
    %2729 = vmatprep.subr.mxu0 0.0
    %2730 = vmatpush1.xpose.msra.mxu0 0.0
    %2731 = vmatprep.subr.mxu0 0.0
    %2732 = vmatpush1.xpose.msra.mxu0 0.0
    %2733 = vmatprep.mubr.f32.mxu0 0.0
    %2734 = vmatmul.mubr.f32.gmra.mrb[0].mxu0 %v2665
    %v2735 = vpop.f32.mrb[0].mxu0
    %v2736 = vadd.f32 0.0, %v2735
    %v2737 = vpop.f32.mrb[0].mxu0
    %2738 = vdwg.mxu0
    %v2739 = vmul.f32 %v2736, 0.35355338
    %v2740 = vsel %vm314, %v2739, -inf
    %2741 = vmax.xlane.f32.xlu0 %v2740
    %v2742 = vpop.xlane.xlu0 %2741
    %v2743 = vsub.f32 %v2739, %v2742
    %v2744 = vmul.f32 %v2743, 1.442695
    %v2745 = vpow.pop %v2744
    %v2746 = vsel %vm314, %v2745, 0.0
    %2747 = vadd.xlane.f32.xlu0 %v2746
    %v2748 = vpop.xlane.xlu0 %2747
    %v2749 = vrcp.pop %v2748
    %v2750 = vmul.f32 %v2745, %v2749
    %2751 = vrot.lane.b32.xlu0 %v2494, 56
    %v2752 = vpop.permute.xlu0 %2751
    %v2754 = vsel %vm328, %v2750, 0
    %v2756 = vsel %vm332, %v2752, 0
    %2758 = vmatprep.subr.mxu0 0.0
    %2759 = vmatpush1.msra.mxu0 %v2756
    %2760 = vmatprep.subr.mxu0 0.0
    %2761 = vmatpush1.msra.mxu0 0.0
    %2762 = vmatprep.subr.mxu0 0.0
    %2763 = vmatpush1.msra.mxu0 0.0
    %2764 = vmatprep.subr.mxu0 0.0
    %2765 = vmatpush1.msra.mxu0 0.0
    %2766 = vmatprep.subr.mxu0 0.0
    %2767 = vmatpush1.msra.mxu0 0.0
    %2768 = vmatprep.subr.mxu0 0.0
    %2769 = vmatpush1.msra.mxu0 0.0
    %2770 = vmatprep.subr.mxu0 0.0
    %2771 = vmatpush1.msra.mxu0 0.0
    %2772 = vmatprep.subr.mxu0 0.0
    %2773 = vmatpush1.msra.mxu0 0.0
    %2774 = vmatprep.subr.mxu0 0.0
    %2775 = vmatpush1.msra.mxu0 0.0
    %2776 = vmatprep.subr.mxu0 0.0
    %2777 = vmatpush1.msra.mxu0 0.0
    %2778 = vmatprep.subr.mxu0 0.0
    %2779 = vmatpush1.msra.mxu0 0.0
    %2780 = vmatprep.subr.mxu0 0.0
    %2781 = vmatpush1.msra.mxu0 0.0
    %2782 = vmatprep.subr.mxu0 0.0
    %2783 = vmatpush1.msra.mxu0 0.0
    %2784 = vmatprep.subr.mxu0 0.0
    %2785 = vmatpush1.msra.mxu0 0.0
    %2786 = vmatprep.subr.mxu0 0.0
    %2787 = vmatpush1.msra.mxu0 0.0
    %2788 = vmatprep.subr.mxu0 0.0
    %2789 = vmatpush1.msra.mxu0 0.0
    %2790 = vmatprep.subr.mxu0 0.0
    %2791 = vmatpush1.msra.mxu0 0.0
    %2792 = vmatprep.subr.mxu0 0.0
    %2793 = vmatpush1.msra.mxu0 0.0
    %2794 = vmatprep.subr.mxu0 0.0
    %2795 = vmatpush1.msra.mxu0 0.0
    %2796 = vmatprep.subr.mxu0 0.0
    %2797 = vmatpush1.msra.mxu0 0.0
    %2798 = vmatprep.subr.mxu0 0.0
    %2799 = vmatpush1.msra.mxu0 0.0
    %2800 = vmatprep.subr.mxu0 0.0
    %2801 = vmatpush1.msra.mxu0 0.0
    %2802 = vmatprep.subr.mxu0 0.0
    %2803 = vmatpush1.msra.mxu0 0.0
    %2804 = vmatprep.subr.mxu0 0.0
    %2805 = vmatpush1.msra.mxu0 0.0
    %2806 = vmatprep.subr.mxu0 0.0
    %2807 = vmatpush1.msra.mxu0 0.0
    %2808 = vmatprep.subr.mxu0 0.0
    %2809 = vmatpush1.msra.mxu0 0.0
    %2810 = vmatprep.subr.mxu0 0.0
    %2811 = vmatpush1.msra.mxu0 0.0
    %2812 = vmatprep.subr.mxu0 0.0
    %2813 = vmatpush1.msra.mxu0 0.0
    %2814 = vmatprep.subr.mxu0 0.0
    %2815 = vmatpush1.msra.mxu0 0.0
    %2816 = vmatprep.subr.mxu0 0.0
    %2817 = vmatpush1.msra.mxu0 0.0
    %2818 = vmatprep.subr.mxu0 0.0
    %2819 = vmatpush1.msra.mxu0 0.0
    %2820 = vmatprep.subr.mxu0 0.0
    %2821 = vmatpush1.msra.mxu0 0.0
    %2822 = vmatprep.mubr.f32.mxu0 0.0
    %2823 = vmatmul.mubr.f32.gmra.mrb[0].mxu0 %v2754
    %v2824 = vpop.f32.mrb[0].mxu0
    %v2825 = vadd.f32 0.0, %v2824
    %v2826 = vpop.f32.mrb[0].mxu0
    %2827 = vdwg.mxu0
    %2829 = vrot.lane.b32.xlu0 %v2825, 8
    %v2830 = vpop.permute.xlu0 %2829
    %2832 = vst.msk [vmem:[#allocation2 + $0x4] sm:$0xf] %vm578, %v2830
    %2833 = vrot.lane.b32.xlu0 %v2494, 112
    %v2834 = vpop.permute.xlu0 %2833
    %2835 = vrot.lane.b32.xlu0 %v2494, 80
    %v2836 = vpop.permute.xlu0 %2835
    %v2837 = vsel %vm238, %v2834, 0
    %v2839 = vsel %vm238, %v2836, 0
    %2841 = vmatprep.subr.mxu0 0.0
    %2842 = vmatpush1.xpose.msra.mxu0 %v2839
    %2843 = vmatprep.subr.mxu0 0.0
    %2844 = vmatpush1.xpose.msra.mxu0 0.0
    %2845 = vmatprep.subr.mxu0 0.0
    %2846 = vmatpush1.xpose.msra.mxu0 0.0
    %2847 = vmatprep.subr.mxu0 0.0
    %2848 = vmatpush1.xpose.msra.mxu0 0.0
    %2849 = vmatprep.subr.mxu0 0.0
    %2850 = vmatpush1.xpose.msra.mxu0 0.0
    %2851 = vmatprep.subr.mxu0 0.0
    %2852 = vmatpush1.xpose.msra.mxu0 0.0
    %2853 = vmatprep.subr.mxu0 0.0
    %2854 = vmatpush1.xpose.msra.mxu0 0.0
    %2855 = vmatprep.subr.mxu0 0.0
    %2856 = vmatpush1.xpose.msra.mxu0 0.0
    %2857 = vmatprep.subr.mxu0 0.0
    %2858 = vmatpush1.xpose.msra.mxu0 0.0
    %2859 = vmatprep.subr.mxu0 0.0
    %2860 = vmatpush1.xpose.msra.mxu0 0.0
    %2861 = vmatprep.subr.mxu0 0.0
    %2862 = vmatpush1.xpose.msra.mxu0 0.0
    %2863 = vmatprep.subr.mxu0 0.0
    %2864 = vmatpush1.xpose.msra.mxu0 0.0
    %2865 = vmatprep.subr.mxu0 0.0
    %2866 = vmatpush1.xpose.msra.mxu0 0.0
    %2867 = vmatprep.subr.mxu0 0.0
    %2868 = vmatpush1.xpose.msra.mxu0 0.0
    %2869 = vmatprep.subr.mxu0 0.0
    %2870 = vmatpush1.xpose.msra.mxu0 0.0
    %2871 = vmatprep.subr.mxu0 0.0
    %2872 = vmatpush1.xpose.msra.mxu0 0.0
    %2873 = vmatprep.subr.mxu0 0.0
    %2874 = vmatpush1.xpose.msra.mxu0 0.0
    %2875 = vmatprep.subr.mxu0 0.0
    %2876 = vmatpush1.xpose.msra.mxu0 0.0
    %2877 = vmatprep.subr.mxu0 0.0
    %2878 = vmatpush1.xpose.msra.mxu0 0.0
    %2879 = vmatprep.subr.mxu0 0.0
    %2880 = vmatpush1.xpose.msra.mxu0 0.0
    %2881 = vmatprep.subr.mxu0 0.0
    %2882 = vmatpush1.xpose.msra.mxu0 0.0
    %2883 = vmatprep.subr.mxu0 0.0
    %2884 = vmatpush1.xpose.msra.mxu0 0.0
    %2885 = vmatprep.subr.mxu0 0.0
    %2886 = vmatpush1.xpose.msra.mxu0 0.0
    %2887 = vmatprep.subr.mxu0 0.0
    %2888 = vmatpush1.xpose.msra.mxu0 0.0
    %2889 = vmatprep.subr.mxu0 0.0
    %2890 = vmatpush1.xpose.msra.mxu0 0.0
    %2891 = vmatprep.subr.mxu0 0.0
    %2892 = vmatpush1.xpose.msra.mxu0 0.0
    %2893 = vmatprep.subr.mxu0 0.0
    %2894 = vmatpush1.xpose.msra.mxu0 0.0
    %2895 = vmatprep.subr.mxu0 0.0
    %2896 = vmatpush1.xpose.msra.mxu0 0.0
    %2897 = vmatprep.subr.mxu0 0.0
    %2898 = vmatpush1.xpose.msra.mxu0 0.0
    %2899 = vmatprep.subr.mxu0 0.0
    %2900 = vmatpush1.xpose.msra.mxu0 0.0
    %2901 = vmatprep.subr.mxu0 0.0
    %2902 = vmatpush1.xpose.msra.mxu0 0.0
    %2903 = vmatprep.subr.mxu0 0.0
    %2904 = vmatpush1.xpose.msra.mxu0 0.0
    %2905 = vmatprep.mubr.f32.mxu0 0.0
    %2906 = vmatmul.mubr.f32.gmra.mrb[0].mxu0 %v2837
    %v2907 = vpop.f32.mrb[0].mxu0
    %v2908 = vadd.f32 0.0, %v2907
    %v2909 = vpop.f32.mrb[0].mxu0
    %2910 = vdwg.mxu0
    %v2911 = vmul.f32 %v2908, 0.35355338
    %v2912 = vsel %vm314, %v2911, -inf
    %2913 = vmax.xlane.f32.xlu0 %v2912
    %v2914 = vpop.xlane.xlu0 %2913
    %v2915 = vsub.f32 %v2911, %v2914
    %v2916 = vmul.f32 %v2915, 1.442695
    %v2917 = vpow.pop %v2916
    %v2918 = vsel %vm314, %v2917, 0.0
    %2919 = vadd.xlane.f32.xlu0 %v2918
    %v2920 = vpop.xlane.xlu0 %2919
    %v2921 = vrcp.pop %v2920
    %v2922 = vmul.f32 %v2917, %v2921
    %2923 = vrot.lane.b32.xlu0 %v2494, 48
    %v2924 = vpop.permute.xlu0 %2923
    %v2926 = vsel %vm328, %v2922, 0
    %v2928 = vsel %vm332, %v2924, 0
    %2930 = vmatprep.subr.mxu0 0.0
    %2931 = vmatpush1.msra.mxu0 %v2928
    %2932 = vmatprep.subr.mxu0 0.0
    %2933 = vmatpush1.msra.mxu0 0.0
    %2934 = vmatprep.subr.mxu0 0.0
    %2935 = vmatpush1.msra.mxu0 0.0
    %2936 = vmatprep.subr.mxu0 0.0
    %2937 = vmatpush1.msra.mxu0 0.0
    %2938 = vmatprep.subr.mxu0 0.0
    %2939 = vmatpush1.msra.mxu0 0.0
    %2940 = vmatprep.subr.mxu0 0.0
    %2941 = vmatpush1.msra.mxu0 0.0
    %2942 = vmatprep.subr.mxu0 0.0
    %2943 = vmatpush1.msra.mxu0 0.0
    %2944 = vmatprep.subr.mxu0 0.0
    %2945 = vmatpush1.msra.mxu0 0.0
    %2946 = vmatprep.subr.mxu0 0.0
    %2947 = vmatpush1.msra.mxu0 0.0
    %2948 = vmatprep.subr.mxu0 0.0
    %2949 = vmatpush1.msra.mxu0 0.0
    %2950 = vmatprep.subr.mxu0 0.0
    %2951 = vmatpush1.msra.mxu0 0.0
    %2952 = vmatprep.subr.mxu0 0.0
    %2953 = vmatpush1.msra.mxu0 0.0
    %2954 = vmatprep.subr.mxu0 0.0
    %2955 = vmatpush1.msra.mxu0 0.0
    %2956 = vmatprep.subr.mxu0 0.0
    %2957 = vmatpush1.msra.mxu0 0.0
    %2958 = vmatprep.subr.mxu0 0.0
    %2959 = vmatpush1.msra.mxu0 0.0
    %2960 = vmatprep.subr.mxu0 0.0
    %2961 = vmatpush1.msra.mxu0 0.0
    %2962 = vmatprep.subr.mxu0 0.0
    %2963 = vmatpush1.msra.mxu0 0.0
    %2964 = vmatprep.subr.mxu0 0.0
    %2965 = vmatpush1.msra.mxu0 0.0
    %2966 = vmatprep.subr.mxu0 0.0
    %2967 = vmatpush1.msra.mxu0 0.0
    %2968 = vmatprep.subr.mxu0 0.0
    %2969 = vmatpush1.msra.mxu0 0.0
    %2970 = vmatprep.subr.mxu0 0.0
    %2971 = vmatpush1.msra.mxu0 0.0
    %2972 = vmatprep.subr.mxu0 0.0
    %2973 = vmatpush1.msra.mxu0 0.0
    %2974 = vmatprep.subr.mxu0 0.0
    %2975 = vmatpush1.msra.mxu0 0.0
    %2976 = vmatprep.subr.mxu0 0.0
    %2977 = vmatpush1.msra.mxu0 0.0
    %2978 = vmatprep.subr.mxu0 0.0
    %2979 = vmatpush1.msra.mxu0 0.0
    %2980 = vmatprep.subr.mxu0 0.0
    %2981 = vmatpush1.msra.mxu0 0.0
    %2982 = vmatprep.subr.mxu0 0.0
    %2983 = vmatpush1.msra.mxu0 0.0
    %2984 = vmatprep.subr.mxu0 0.0
    %2985 = vmatpush1.msra.mxu0 0.0
    %2986 = vmatprep.subr.mxu0 0.0
    %2987 = vmatpush1.msra.mxu0 0.0
    %2988 = vmatprep.subr.mxu0 0.0
    %2989 = vmatpush1.msra.mxu0 0.0
    %2990 = vmatprep.subr.mxu0 0.0
    %2991 = vmatpush1.msra.mxu0 0.0
    %2992 = vmatprep.subr.mxu0 0.0
    %2993 = vmatpush1.msra.mxu0 0.0
    %2994 = vmatprep.mubr.f32.mxu0 0.0
    %2995 = vmatmul.mubr.f32.gmra.mrb[0].mxu0 %v2926
    %v2996 = vpop.f32.mrb[0].mxu0
    %v2997 = vadd.f32 0.0, %v2996
    %v2998 = vpop.f32.mrb[0].mxu0
    %2999 = vdwg.mxu0
    %3001 = vrot.lane.b32.xlu0 %v2997, 16
    %v3002 = vpop.permute.xlu0 %3001
    %3004 = vst.msk [vmem:[#allocation2 + $0x4] sm:$0xf] %vm751, %v3002
    %3005 = vrot.lane.b32.xlu0 %v2494, 104
    %v3006 = vpop.permute.xlu0 %3005
    %3007 = vrot.lane.b32.xlu0 %v2494, 72
    %v3008 = vpop.permute.xlu0 %3007
    %v3009 = vsel %vm238, %v3006, 0
    %v3011 = vsel %vm238, %v3008, 0
    %3013 = vmatprep.subr.mxu0 0.0
    %3014 = vmatpush1.xpose.msra.mxu0 %v3011
    %3015 = vmatprep.subr.mxu0 0.0
    %3016 = vmatpush1.xpose.msra.mxu0 0.0
    %3017 = vmatprep.subr.mxu0 0.0
    %3018 = vmatpush1.xpose.msra.mxu0 0.0
    %3019 = vmatprep.subr.mxu0 0.0
    %3020 = vmatpush1.xpose.msra.mxu0 0.0
    %3021 = vmatprep.subr.mxu0 0.0
    %3022 = vmatpush1.xpose.msra.mxu0 0.0
    %3023 = vmatprep.subr.mxu0 0.0
    %3024 = vmatpush1.xpose.msra.mxu0 0.0
    %3025 = vmatprep.subr.mxu0 0.0
    %3026 = vmatpush1.xpose.msra.mxu0 0.0
    %3027 = vmatprep.subr.mxu0 0.0
    %3028 = vmatpush1.xpose.msra.mxu0 0.0
    %3029 = vmatprep.subr.mxu0 0.0
    %3030 = vmatpush1.xpose.msra.mxu0 0.0
    %3031 = vmatprep.subr.mxu0 0.0
    %3032 = vmatpush1.xpose.msra.mxu0 0.0
    %3033 = vmatprep.subr.mxu0 0.0
    %3034 = vmatpush1.xpose.msra.mxu0 0.0
    %3035 = vmatprep.subr.mxu0 0.0
    %3036 = vmatpush1.xpose.msra.mxu0 0.0
    %3037 = vmatprep.subr.mxu0 0.0
    %3038 = vmatpush1.xpose.msra.mxu0 0.0
    %3039 = vmatprep.subr.mxu0 0.0
    %3040 = vmatpush1.xpose.msra.mxu0 0.0
    %3041 = vmatprep.subr.mxu0 0.0
    %3042 = vmatpush1.xpose.msra.mxu0 0.0
    %3043 = vmatprep.subr.mxu0 0.0
    %3044 = vmatpush1.xpose.msra.mxu0 0.0
    %3045 = vmatprep.subr.mxu0 0.0
    %3046 = vmatpush1.xpose.msra.mxu0 0.0
    %3047 = vmatprep.subr.mxu0 0.0
    %3048 = vmatpush1.xpose.msra.mxu0 0.0
    %3049 = vmatprep.subr.mxu0 0.0
    %3050 = vmatpush1.xpose.msra.mxu0 0.0
    %3051 = vmatprep.subr.mxu0 0.0
    %3052 = vmatpush1.xpose.msra.mxu0 0.0
    %3053 = vmatprep.subr.mxu0 0.0
    %3054 = vmatpush1.xpose.msra.mxu0 0.0
    %3055 = vmatprep.subr.mxu0 0.0
    %3056 = vmatpush1.xpose.msra.mxu0 0.0
    %3057 = vmatprep.subr.mxu0 0.0
    %3058 = vmatpush1.xpose.msra.mxu0 0.0
    %3059 = vmatprep.subr.mxu0 0.0
    %3060 = vmatpush1.xpose.msra.mxu0 0.0
    %3061 = vmatprep.subr.mxu0 0.0
    %3062 = vmatpush1.xpose.msra.mxu0 0.0
    %3063 = vmatprep.subr.mxu0 0.0
    %3064 = vmatpush1.xpose.msra.mxu0 0.0
    %3065 = vmatprep.subr.mxu0 0.0
    %3066 = vmatpush1.xpose.msra.mxu0 0.0
    %3067 = vmatprep.subr.mxu0 0.0
    %3068 = vmatpush1.xpose.msra.mxu0 0.0
    %3069 = vmatprep.subr.mxu0 0.0
    %3070 = vmatpush1.xpose.msra.mxu0 0.0
    %3071 = vmatprep.subr.mxu0 0.0
    %3072 = vmatpush1.xpose.msra.mxu0 0.0
    %3073 = vmatprep.subr.mxu0 0.0
    %3074 = vmatpush1.xpose.msra.mxu0 0.0
    %3075 = vmatprep.subr.mxu0 0.0
    %3076 = vmatpush1.xpose.msra.mxu0 0.0
    %3077 = vmatprep.mubr.f32.mxu0 0.0
    %3078 = vmatmul.mubr.f32.gmra.mrb[0].mxu0 %v3009
    %v3079 = vpop.f32.mrb[0].mxu0
    %v3080 = vadd.f32 0.0, %v3079
    %v3081 = vpop.f32.mrb[0].mxu0
    %3082 = vdwg.mxu0
    %v3083 = vmul.f32 %v3080, 0.35355338
    %v3084 = vsel %vm314, %v3083, -inf
    %3085 = vmax.xlane.f32.xlu0 %v3084
    %v3086 = vpop.xlane.xlu0 %3085
    %v3087 = vsub.f32 %v3083, %v3086
    %v3088 = vmul.f32 %v3087, 1.442695
    %v3089 = vpow.pop %v3088
    %v3090 = vsel %vm314, %v3089, 0.0
    %3091 = vadd.xlane.f32.xlu0 %v3090
    %v3092 = vpop.xlane.xlu0 %3091
    %v3093 = vrcp.pop %v3092
    %v3094 = vmul.f32 %v3089, %v3093
    %3095 = vrot.lane.b32.xlu0 %v2494, 40
    %v3096 = vpop.permute.xlu0 %3095
    %v3098 = vsel %vm328, %v3094, 0
    %v3100 = vsel %vm332, %v3096, 0
    %3102 = vmatprep.subr.mxu0 0.0
    %3103 = vmatpush1.msra.mxu0 %v3100
    %3104 = vmatprep.subr.mxu0 0.0
    %3105 = vmatpush1.msra.mxu0 0.0
    %3106 = vmatprep.subr.mxu0 0.0
    %3107 = vmatpush1.msra.mxu0 0.0
    %3108 = vmatprep.subr.mxu0 0.0
    %3109 = vmatpush1.msra.mxu0 0.0
    %3110 = vmatprep.subr.mxu0 0.0
    %3111 = vmatpush1.msra.mxu0 0.0
    %3112 = vmatprep.subr.mxu0 0.0
    %3113 = vmatpush1.msra.mxu0 0.0
    %3114 = vmatprep.subr.mxu0 0.0
    %3115 = vmatpush1.msra.mxu0 0.0
    %3116 = vmatprep.subr.mxu0 0.0
    %3117 = vmatpush1.msra.mxu0 0.0
    %3118 = vmatprep.subr.mxu0 0.0
    %3119 = vmatpush1.msra.mxu0 0.0
    %3120 = vmatprep.subr.mxu0 0.0
    %3121 = vmatpush1.msra.mxu0 0.0
    %3122 = vmatprep.subr.mxu0 0.0
    %3123 = vmatpush1.msra.mxu0 0.0
    %3124 = vmatprep.subr.mxu0 0.0
    %3125 = vmatpush1.msra.mxu0 0.0
    %3126 = vmatprep.subr.mxu0 0.0
    %3127 = vmatpush1.msra.mxu0 0.0
    %3128 = vmatprep.subr.mxu0 0.0
    %3129 = vmatpush1.msra.mxu0 0.0
    %3130 = vmatprep.subr.mxu0 0.0
    %3131 = vmatpush1.msra.mxu0 0.0
    %3132 = vmatprep.subr.mxu0 0.0
    %3133 = vmatpush1.msra.mxu0 0.0
    %3134 = vmatprep.subr.mxu0 0.0
    %3135 = vmatpush1.msra.mxu0 0.0
    %3136 = vmatprep.subr.mxu0 0.0
    %3137 = vmatpush1.msra.mxu0 0.0
    %3138 = vmatprep.subr.mxu0 0.0
    %3139 = vmatpush1.msra.mxu0 0.0
    %3140 = vmatprep.subr.mxu0 0.0
    %3141 = vmatpush1.msra.mxu0 0.0
    %3142 = vmatprep.subr.mxu0 0.0
    %3143 = vmatpush1.msra.mxu0 0.0
    %3144 = vmatprep.subr.mxu0 0.0
    %3145 = vmatpush1.msra.mxu0 0.0
    %3146 = vmatprep.subr.mxu0 0.0
    %3147 = vmatpush1.msra.mxu0 0.0
    %3148 = vmatprep.subr.mxu0 0.0
    %3149 = vmatpush1.msra.mxu0 0.0
    %3150 = vmatprep.subr.mxu0 0.0
    %3151 = vmatpush1.msra.mxu0 0.0
    %3152 = vmatprep.subr.mxu0 0.0
    %3153 = vmatpush1.msra.mxu0 0.0
    %3154 = vmatprep.subr.mxu0 0.0
    %3155 = vmatpush1.msra.mxu0 0.0
    %3156 = vmatprep.subr.mxu0 0.0
    %3157 = vmatpush1.msra.mxu0 0.0
    %3158 = vmatprep.subr.mxu0 0.0
    %3159 = vmatpush1.msra.mxu0 0.0
    %3160 = vmatprep.subr.mxu0 0.0
    %3161 = vmatpush1.msra.mxu0 0.0
    %3162 = vmatprep.subr.mxu0 0.0
    %3163 = vmatpush1.msra.mxu0 0.0
    %3164 = vmatprep.subr.mxu0 0.0
    %3165 = vmatpush1.msra.mxu0 0.0
    %3166 = vmatprep.mubr.f32.mxu0 0.0
    %3167 = vmatmul.mubr.f32.gmra.mrb[0].mxu0 %v3098
    %v3168 = vpop.f32.mrb[0].mxu0
    %v3169 = vadd.f32 0.0, %v3168
    %v3170 = vpop.f32.mrb[0].mxu0
    %3171 = vdwg.mxu0
    %3173 = vrot.lane.b32.xlu0 %v3169, 24
    %v3174 = vpop.permute.xlu0 %3173
    %3176 = vst.msk [vmem:[#allocation2 + $0x4] sm:$0xf] %vm924, %v3174
    %v3177 = vld [vmem:[#allocation2] sm:$0xff]
    %s3178 = scalar_lea.vmem %s5, 32
    %v3179 = vld [vmem:[%s3178] sm:$0xff]
    %v3180 = vld [vmem:[%s3178 + $0x8] sm:$0xff]
    %v3181 = vld [vmem:[%s3178 + $0x10] sm:$0xff]
    %v3182 = vld [vmem:[%s3178 + $0x18] sm:$0xff]
    %s3183 = scalar_lea.vmem %s6, 1
    %v3184 = vld [vmem:[%s3183] sm:$0x1]
    %v3186 = vlaneseq
    %v3187 = vshrl.u32 %v3186, 7
    %v3188 = vsub.s32 0, %v3187
    %v3189 = vrot.slane %v3184, %v3188
    %v3192 = vsel %vm161, %v3177, 0
    %3194 = vmatprep.subr.mxu0 0.0
    %3195 = vmatpush1.msra.mxu0 %v3179
    %3196 = vmatprep.subr.mxu0 0.0
    %3197 = vmatpush1.msra.mxu0 %v3180
    %3198 = vmatprep.subr.mxu0 0.0
    %3199 = vmatpush1.msra.mxu0 %v3181
    %3200 = vmatprep.subr.mxu0 0.0
    %3201 = vmatpush1.msra.mxu0 %v3182
    %3202 = vmatprep.subr.mxu0 0.0
    %3203 = vmatpush1.msra.mxu0 0.0
    %3204 = vmatprep.subr.mxu0 0.0
    %3205 = vmatpush1.msra.mxu0 0.0
    %3206 = vmatprep.subr.mxu0 0.0
    %3207 = vmatpush1.msra.mxu0 0.0
    %3208 = vmatprep.subr.mxu0 0.0
    %3209 = vmatpush1.msra.mxu0 0.0
    %3210 = vmatprep.subr.mxu0 0.0
    %3211 = vmatpush1.msra.mxu0 0.0
    %3212 = vmatprep.subr.mxu0 0.0
    %3213 = vmatpush1.msra.mxu0 0.0
    %3214 = vmatprep.subr.mxu0 0.0
    %3215 = vmatpush1.msra.mxu0 0.0
    %3216 = vmatprep.subr.mxu0 0.0
    %3217 = vmatpush1.msra.mxu0 0.0
    %3218 = vmatprep.subr.mxu0 0.0
    %3219 = vmatpush1.msra.mxu0 0.0
    %3220 = vmatprep.subr.mxu0 0.0
    %3221 = vmatpush1.msra.mxu0 0.0
    %3222 = vmatprep.subr.mxu0 0.0
    %3223 = vmatpush1.msra.mxu0 0.0
    %3224 = vmatprep.subr.mxu0 0.0
    %3225 = vmatpush1.msra.mxu0 0.0
    %3226 = vmatprep.subr.mxu0 0.0
    %3227 = vmatpush1.msra.mxu0 0.0
    %3228 = vmatprep.subr.mxu0 0.0
    %3229 = vmatpush1.msra.mxu0 0.0
    %3230 = vmatprep.subr.mxu0 0.0
    %3231 = vmatpush1.msra.mxu0 0.0
    %3232 = vmatprep.subr.mxu0 0.0
    %3233 = vmatpush1.msra.mxu0 0.0
    %3234 = vmatprep.subr.mxu0 0.0
    %3235 = vmatpush1.msra.mxu0 0.0
    %3236 = vmatprep.subr.mxu0 0.0
    %3237 = vmatpush1.msra.mxu0 0.0
    %3238 = vmatprep.subr.mxu0 0.0
    %3239 = vmatpush1.msra.mxu0 0.0
    %3240 = vmatprep.subr.mxu0 0.0
    %3241 = vmatpush1.msra.mxu0 0.0
    %3242 = vmatprep.subr.mxu0 0.0
    %3243 = vmatpush1.msra.mxu0 0.0
    %3244 = vmatprep.subr.mxu0 0.0
    %3245 = vmatpush1.msra.mxu0 0.0
    %3246 = vmatprep.subr.mxu0 0.0
    %3247 = vmatpush1.msra.mxu0 0.0
    %3248 = vmatprep.subr.mxu0 0.0
    %3249 = vmatpush1.msra.mxu0 0.0
    %3250 = vmatprep.subr.mxu0 0.0
    %3251 = vmatpush1.msra.mxu0 0.0
    %3252 = vmatprep.subr.mxu0 0.0
    %3253 = vmatpush1.msra.mxu0 0.0
    %3254 = vmatprep.subr.mxu0 0.0
    %3255 = vmatpush1.msra.mxu0 0.0
    %3256 = vmatprep.subr.mxu0 0.0
    %3257 = vmatpush1.msra.mxu0 0.0
    %3258 = vmatprep.mubr.f32.mxu0 0.0
    %3259 = vmatmul.mubr.f32.gmra.mrb[0].mxu0 %v3192
    %v3260 = vpop.f32.mrb[0].mxu0
    %v3261 = vadd.f32 %v3189, %v3260
    %v3262 = vpop.f32.mrb[0].mxu0
    %3263 = vdwg.mxu0
    %v3264 = vadd.f32 %v1724, %v3261
    %v3265 = vsel %vm161, %v3264, 0.0
    %3266 = vadd.xlane.f32.xlu0 %v3265
    %v3267 = vpop.xlane.xlu0 %3266
    %v3268 = vmul.f32 %v3267, %v1698
    %v3269 = vsub.f32 %v3264, %v3268
    %v3270 = vmul.f32 %v3269, %v3269
    %v3271 = vsel %vm161, %v3270, 0.0
    %3272 = vadd.xlane.f32.xlu0 %v3271
    %v3273 = vpop.xlane.xlu0 %3272
    %v3274 = vmul.f32 %v3273, %v1698
    %v3275 = vadd.f32 %v3274, 1e-05
    %v3276 = vrsqrt.pop %v3275
    %v3277 = vmul.f32 %v3269, %v3276
    %s3278 = scalar_lea.vmem %s7, 1
    %v3279 = vld [vmem:[%s3278] sm:$0x1]
    %v3281 = vlaneseq
    %v3282 = vshrl.u32 %v3281, 7
    %v3283 = vsub.s32 0, %v3282
    %v3284 = vrot.slane %v3279, %v3283
    %v3286 = vmul.f32 %v3277, %v3284
    %s3287 = scalar_lea.vmem %s8, 1
    %v3288 = vld [vmem:[%s3287] sm:$0x1]
    %v3290 = vlaneseq
    %v3291 = vshrl.u32 %v3290, 7
    %v3292 = vsub.s32 0, %v3291
    %v3293 = vrot.slane %v3288, %v3292
    %v3295 = vadd.f32 %v3286, %v3293
    %v3296 = vld [vmem:[%s9] sm:$0xff]
    %v3297 = vld [vmem:[%s9 + $0x8] sm:$0xff]
    %v3298 = vld [vmem:[%s9 + $0x10] sm:$0xff]
    %v3299 = vld [vmem:[%s9 + $0x18] sm:$0xff]
    %v3300 = vld [vmem:[%s9 + $0x20] sm:$0xff]
    %v3301 = vld [vmem:[%s9 + $0x28] sm:$0xff]
    %v3302 = vld [vmem:[%s9 + $0x30] sm:$0xff]
    %v3303 = vld [vmem:[%s9 + $0x38] sm:$0xff]
    %v3304 = vld [vmem:[%s10] sm:$0x3]
    %v3306 = vlaneseq
    %v3307 = vshrl.u32 %v3306, 7
    %v3308 = vsub.s32 0, %v3307
    %v3309 = vrot.slane %v3304, %v3308
    %v3310 = vlaneseq
    %v3311 = vshrl.u32 %v3310, 7
    %v3312 = vsub.s32 1, %v3311
    %v3313 = vrot.slane %v3304, %v3312
    %v3317 = vsel %vm161, %v3295, 0
    %3319 = vmatprep.subr.mxu0 %v3297
    %3320 = vmatpush1.msra.mxu0 %v3296
    %3321 = vmatprep.subr.mxu0 %v3299
    %3322 = vmatpush1.msra.mxu0 %v3298
    %3323 = vmatprep.subr.mxu0 %v3301
    %3324 = vmatpush1.msra.mxu0 %v3300
    %3325 = vmatprep.subr.mxu0 %v3303
    %3326 = vmatpush1.msra.mxu0 %v3302
    %3327 = vmatprep.subr.mxu0 0.0
    %3328 = vmatpush1.msra.mxu0 0.0
    %3329 = vmatprep.subr.mxu0 0.0
    %3330 = vmatpush1.msra.mxu0 0.0
    %3331 = vmatprep.subr.mxu0 0.0
    %3332 = vmatpush1.msra.mxu0 0.0
    %3333 = vmatprep.subr.mxu0 0.0
    %3334 = vmatpush1.msra.mxu0 0.0
    %3335 = vmatprep.subr.mxu0 0.0
    %3336 = vmatpush1.msra.mxu0 0.0
    %3337 = vmatprep.subr.mxu0 0.0
    %3338 = vmatpush1.msra.mxu0 0.0
    %3339 = vmatprep.subr.mxu0 0.0
    %3340 = vmatpush1.msra.mxu0 0.0
    %3341 = vmatprep.subr.mxu0 0.0
    %3342 = vmatpush1.msra.mxu0 0.0
    %3343 = vmatprep.subr.mxu0 0.0
    %3344 = vmatpush1.msra.mxu0 0.0
    %3345 = vmatprep.subr.mxu0 0.0
    %3346 = vmatpush1.msra.mxu0 0.0
    %3347 = vmatprep.subr.mxu0 0.0
    %3348 = vmatpush1.msra.mxu0 0.0
    %3349 = vmatprep.subr.mxu0 0.0
    %3350 = vmatpush1.msra.mxu0 0.0
    %3351 = vmatprep.subr.mxu0 0.0
    %3352 = vmatpush1.msra.mxu0 0.0
    %3353 = vmatprep.subr.mxu0 0.0
    %3354 = vmatpush1.msra.mxu0 0.0
    %3355 = vmatprep.subr.mxu0 0.0
    %3356 = vmatpush1.msra.mxu0 0.0
    %3357 = vmatprep.subr.mxu0 0.0
    %3358 = vmatpush1.msra.mxu0 0.0
    %3359 = vmatprep.subr.mxu0 0.0
    %3360 = vmatpush1.msra.mxu0 0.0
    %3361 = vmatprep.subr.mxu0 0.0
    %3362 = vmatpush1.msra.mxu0 0.0
    %3363 = vmatprep.subr.mxu0 0.0
    %3364 = vmatpush1.msra.mxu0 0.0
    %3365 = vmatprep.subr.mxu0 0.0
    %3366 = vmatpush1.msra.mxu0 0.0
    %3367 = vmatprep.subr.mxu0 0.0
    %3368 = vmatpush1.msra.mxu0 0.0
    %3369 = vmatprep.subr.mxu0 0.0
    %3370 = vmatpush1.msra.mxu0 0.0
    %3371 = vmatprep.subr.mxu0 0.0
    %3372 = vmatpush1.msra.mxu0 0.0
    %3373 = vmatprep.subr.mxu0 0.0
    %3374 = vmatpush1.msra.mxu0 0.0
    %3375 = vmatprep.subr.mxu0 0.0
    %3376 = vmatpush1.msra.mxu0 0.0
    %3377 = vmatprep.subr.mxu0 0.0
    %3378 = vmatpush1.msra.mxu0 0.0
    %3379 = vmatprep.subr.mxu0 0.0
    %3380 = vmatpush1.msra.mxu0 0.0
    %3381 = vmatprep.subr.mxu0 0.0
    %3382 = vmatpush1.msra.mxu0 0.0
    %3383 = vmatprep.mubr.f32.mxu0 0.0
    %3384 = vmatmul.mubr.f32.gmra.mrb[0].mxu0 %v3317
    %v3385 = vpop.f32.mrb[0].mxu0
    %v3386 = vadd.f32 %v3309, %v3385
    %v3387 = vpop.f32.mrb[0].mxu0
    %v3388 = vadd.f32 %v3313, %v3387
    %3389 = vdwg.mxu0
    %v3390 = vmul.f32 %v3386, 0.5
    %v3391 = vmul.f32 %v3388, 0.5
    %v3392 = vmul.f32 %v3386, 0.70710677
    %v3393 = vmul.f32 %v3388, 0.70710677
    %vm3394 = vcmp.ge.f32.partialorder %v3392, 0.0
    %vm3395 = vcmp.ge.f32.partialorder %v3393, 0.0
    %v3396 = vsel %vm3394, 1.0, -1.0
    %v3397 = vsel %vm3395, 1.0, -1.0
    %v3398 = vand.u32 2147483647, %v3392
    %v3399 = vand.u32 2147483647, %v3393
    %v3400 = vmul.f32 %v3398, 0.3275911
    %v3401 = vmul.f32 %v3399, 0.3275911
    %v3402 = vadd.f32 %v3400, 1.0
    %v3403 = vadd.f32 %v3401, 1.0
    %v3404 = vrcp.pop %v3402
    %v3405 = vmul.f32 1.0, %v3404
    %v3406 = vrcp.pop %v3403
    %v3407 = vmul.f32 1.0, %v3406
    %v3408 = vmul.f32 %v3405, 1.0614054
    %v3409 = vmul.f32 %v3407, 1.0614054
    %v3410 = vadd.f32 %v3408, -1.4531521
    %v3411 = vadd.f32 %v3409, -1.4531521
    %v3412 = vmul.f32 %v3410, %v3405
    %v3413 = vmul.f32 %v3411, %v3407
    %v3414 = vadd.f32 %v3412, 1.4214138
    %v3415 = vadd.f32 %v3413, 1.4214138
    %v3416 = vmul.f32 %v3414, %v3405
    %v3417 = vmul.f32 %v3415, %v3407
    %v3418 = vadd.f32 %v3416, -0.28449672
    %v3419 = vadd.f32 %v3417, -0.28449672
    %v3420 = vmul.f32 %v3418, %v3405
    %v3421 = vmul.f32 %v3419, %v3407
    %v3422 = vadd.f32 %v3420, 0.2548296
    %v3423 = vadd.f32 %v3421, 0.2548296
    %v3424 = vmul.f32 %v3422, %v3405
    %v3425 = vmul.f32 %v3423, %v3407
    %v3426 = vsub.f32 0.0, %v3398
    %v3427 = vsub.f32 0.0, %v3399
    %v3428 = vmul.f32 %v3426, %v3398
    %v3429 = vmul.f32 %v3427, %v3399
    %v3430 = vmul.f32 %v3428, 1.442695
    %v3431 = vpow.pop %v3430
    %v3432 = vmul.f32 %v3429, 1.442695
    %v3433 = vpow.pop %v3432
    %v3434 = vmul.f32 %v3424, %v3431
    %v3435 = vmul.f32 %v3425, %v3433
    %v3436 = vsub.f32 1.0, %v3434
    %v3437 = vsub.f32 1.0, %v3435
    %v3438 = vmul.f32 %v3396, %v3436
    %v3439 = vmul.f32 %v3397, %v3437
    %v3440 = vadd.f32 %v3438, 1.0
    %v3441 = vadd.f32 %v3439, 1.0
    %v3442 = vmul.f32 %v3390, %v3440
    %v3443 = vmul.f32 %v3391, %v3441
    %v3444 = vadd.f32 %v3442, %v39
    %v3445 = vadd.f32 %v3443, %v40
    %3446 = vst [vmem:[#allocation3] sm:$0xff] %v3444
    %3447 = vst [vmem:[#allocation3 + $0x8] sm:$0xff] %v3445
    // Predicated region
    $region46: #{tpu_custom_call.1} parent=1 // pred_check
      _
    $region47: #{tpu_custom_call.1} parent=1 // pred_check_branch
      %3449 = sbr.rel (0) target = $region49
    $region48: #{tpu_custom_call.1} parent=1 // pred_region
      %s3451 = ssub.s32 256, 256
      %3452 = vsyncadd [#allocation4], %s3451
      %s3454 = sshll.u32 [#allocation3], 4
      %s3455 = int_to_ptr.vmem [resolvable:$true] %s3454
      %3457 = dma.vmem_to_hbm [thread:$0]  %s3455, 256, %s11, [#allocation4]
    $region49: #{tpu_custom_call.1} parent=1 // pred_fallthru
      _
    // Predicated region
    $region50: #{tpu_custom_call.1} parent=1 // pred_check
      _
    $region51: #{tpu_custom_call.1} parent=1 // pred_check_branch
      %3459 = sbr.rel (0) target = $region53
    $region52: #{tpu_custom_call.1} parent=1 // pred_region
      %3460 = dma.done [#allocation4], 256
    $region53: #{tpu_custom_call.1} parent=1 // pred_fallthru
      _
    %3461 = vsyncpa [#allocation4], 1

</llo_original>
